<compile_context>
chip_gen: v7x
topology: tpu7x:2x2x1
jax: 0.10.0
libtpu: 0.0.40
codegen_flags: <defaults>
</compile_context>

<pallas_src>
import functools

import jax
import jax.numpy as jnp
from jax.experimental import pallas as pl
from jax.experimental.pallas import tpu as pltpu


BN_EPS = 1e-5


# ----------------------------------------------------------------------------
# Fused BYOL projection/prediction head kernel.
# ----------------------------------------------------------------------------
def _byol_head_kernel(x_ref, w1_ref, gamma_ref, beta_ref, w2_ref, b2_ref, out_ref):
    # Linear (no bias) on the MXU.
    h = jnp.dot(x_ref[...], w1_ref[...], preferred_element_type=jnp.float32)
    # BatchNorm1d, training mode: batch statistics, biased variance.
    mean = jnp.mean(h, axis=0, keepdims=True)
    var = jnp.mean((h - mean) ** 2, axis=0, keepdims=True)
    h = (h - mean) * jax.lax.rsqrt(var + BN_EPS)
    h = h * gamma_ref[...] + beta_ref[...]
    # ReLU.
    h = jnp.maximum(h, 0.0)
    # Linear (+ bias) on the MXU.
    out = jnp.dot(h, w2_ref[...], preferred_element_type=jnp.float32) + b2_ref[...]
    out_ref[...] = out.astype(out_ref.dtype)


def byol_head(x, p):
    """One BYOLProjectionHead pass: (B, D_in) -> (B, D_out)."""
    b, d_in = x.shape
    h = p["w1"].shape[1]
    d_out = p["w2"].shape[1]
    return pl.pallas_call(
        _byol_head_kernel,
        out_shape=jax.ShapeDtypeStruct((b, d_out), x.dtype),
        grid=(1,),
        in_specs=[
            pl.BlockSpec((b, d_in), lambda i: (0, 0)),
            pl.BlockSpec((d_in, h), lambda i: (0, 0)),
            pl.BlockSpec((1, h), lambda i: (0, 0)),
            pl.BlockSpec((1, h), lambda i: (0, 0)),
            pl.BlockSpec((h, d_out), lambda i: (0, 0)),
            pl.BlockSpec((1, d_out), lambda i: (0, 0)),
        ],
        out_specs=pl.BlockSpec((b, d_out), lambda i: (0, 0)),
        compiler_params=pltpu.CompilerParams(dimension_semantics=("arbitrary",)),
    )(x, p["w1"], p["gamma"], p["beta"], p["w2"], p["b2"])


# ----------------------------------------------------------------------------
# Momentum (EMA) update kernel.
# ----------------------------------------------------------------------------
def _make_ema_kernel(m):
    def _ema_kernel(prev_ref, new_ref, out_ref):
        out_ref[...] = prev_ref[...] * m + new_ref[...] * (1.0 - m)
    return _ema_kernel


def ema_update_array(prev, new, m):
    """prev*m + new*(1-m) through a Pallas elementwise kernel (lane-dense 2D view)."""
    shape2d = (1, prev.size) if prev.ndim < 2 else (-1, prev.shape[-1])
    p2 = prev.reshape(shape2d)
    n2 = new.reshape(p2.shape)
    out = pl.pallas_call(
        _make_ema_kernel(m),
        out_shape=jax.ShapeDtypeStruct(p2.shape, p2.dtype),
        grid=(1,),
        in_specs=[pl.BlockSpec(p2.shape, lambda i: (0, 0)),
                  pl.BlockSpec(p2.shape, lambda i: (0, 0))],
        out_specs=pl.BlockSpec(p2.shape, lambda i: (0, 0)),
        compiler_params=pltpu.CompilerParams(dimension_semantics=("arbitrary",)),
    )(p2, n2)
    return out.reshape(prev.shape)


def ema_update_tree(prev_tree, new_tree, m):
    return jax.tree_util.tree_map(
        lambda a, b: ema_update_array(a, b, m), prev_tree, new_tree)


# ----------------------------------------------------------------------------
# BYOL forward (symmetric), composed from the kernels above.
# ----------------------------------------------------------------------------
def _backbone(x):
    # TODO(synk): BYOL takes an arbitrary external backbone nn.Module; modeled
    # here as identity + flatten(start_dim=1).
    return x.reshape(x.shape[0], -1)


def byol_forward(params, momentum_params, x0, x1, *, m=0.9):
    """Returns ((z0, p0), (z1, p1)), new_momentum_params — matching BYOL.forward."""
    # ---- _forward(x0, x1) ----
    momentum_params = ema_update_tree(momentum_params, {"proj": params["proj"]}, m)
    f0 = _backbone(x0)
    f1 = _backbone(x1)
    z0_online = byol_head(f0, params["proj"])
    p0 = byol_head(z0_online, params["pred"])
    z1 = byol_head(f1, momentum_params["proj"])          # momentum encoder, no grad
    # ---- _forward(x1, x0) ----
    momentum_params = ema_update_tree(momentum_params, {"proj": params["proj"]}, m)
    z1_online = byol_head(f1, params["proj"])
    p1 = byol_head(z1_online, params["pred"])
    z0 = byol_head(f0, momentum_params["proj"])           # momentum encoder, no grad
    return ((z0, p0), (z1, p1)), momentum_params


# ----------------------------------------------------------------------------
# Parameter init + pure-JAX reference for verification.
# ----------------------------------------------------------------------------
def init_head_params(key, d_in, h, d_out, dtype=jnp.float32):
    k1, k2, k3 = jax.random.split(key, 3)
    return {
        "w1": jax.random.normal(k1, (d_in, h), dtype) * (d_in ** -0.5),
        "gamma": jnp.ones((1, h), dtype),
        "beta": jnp.zeros((1, h), dtype),
        "w2": jax.random.normal(k2, (h, d_out), dtype) * (h ** -0.5),
        "b2": jax.random.normal(k3, (1, d_out), dtype) * (h ** -0.5),
    }


def _head_ref(x, p):
    hp = jax.lax.Precision.HIGHEST
    h = jnp.dot(x, p["w1"], precision=hp)
    mean = jnp.mean(h, axis=0, keepdims=True)
    var = jnp.mean((h - mean) ** 2, axis=0, keepdims=True)
    h = (h - mean) / jnp.sqrt(var + BN_EPS) * p["gamma"] + p["beta"]
    h = jnp.maximum(h, 0.0)
    return jnp.dot(h, p["w2"], precision=hp) + p["b2"]


def _byol_ref(params, momentum_params, x0, x1, m=0.9):
    ema = lambda prev, new: jax.tree_util.tree_map(
        lambda a, b: a * m + b * (1.0 - m), prev, new)
    momentum_params = ema(momentum_params, {"proj": params["proj"]})
    f0 = _backbone(x0)
    f1 = _backbone(x1)
    p0 = _head_ref(_head_ref(f0, params["proj"]), params["pred"])
    z1 = _head_ref(f1, momentum_params["proj"])
    momentum_params = ema(momentum_params, {"proj": params["proj"]})
    p1 = _head_ref(_head_ref(f1, params["proj"]), params["pred"])
    z0 = _head_ref(f0, momentum_params["proj"])
    return ((z0, p0), (z1, p1))


if __name__ == "__main__":
    key = jax.random.PRNGKey(0)
    k_x0, k_x1, k_proj, k_pred = jax.random.split(key, 4)

    # Small shapes: input bsz x channels x W x H; backbone flattens to num_ftrs.
    B, C, W_sp, H_sp = 8, 4, 16, 16
    num_ftrs = C * W_sp * H_sp        # 1024
    hidden_dim = 256
    out_dim = 128
    m = 0.9

    x0 = jax.random.normal(k_x0, (B, C, W_sp, H_sp), jnp.float32)
    x1 = jax.random.normal(k_x1, (B, C, W_sp, H_sp), jnp.float32)

    params = {
        "proj": init_head_params(k_proj, num_ftrs, hidden_dim, out_dim),
        "pred": init_head_params(k_pred, out_dim, hidden_dim, out_dim),
    }
    # Momentum projection head is initialized as a copy of the online head
    # (equivalent of the deepcopy in _init_momentum_encoder).
    momentum_params = {"proj": jax.tree_util.tree_map(lambda a: a, params["proj"])}

    fwd = jax.jit(functools.partial(byol_forward, m=m))
    (out0, out1), _new_momentum = fwd(params, momentum_params, x0, x1)
    (z0, p0), (z1, p1) = out0, out1
    jax.block_until_ready((z0, p0, z1, p1))

    # Pure-JAX reference check.
    (z0_r, p0_r), (z1_r, p1_r) = _byol_ref(params, momentum_params, x0, x1, m=m)
    for got, ref in ((z0, z0_r), (p0, p0_r), (z1, z1_r), (p1, p1_r)):
        assert got.shape == (B, out_dim)
        assert got.dtype == jnp.float32
        assert bool(jnp.allclose(got, ref, rtol=1e-3, atol=1e-3))

    print("KERNEL_OK")
</pallas_src>

<mosaic_0001>
module attributes {stable_mosaic.version = 11 : i64} {
  func.func @_ema_kernel(%arg0: i32, %arg1: memref<1x128xf32, #tpu.memory_space<vmem>>, %arg2: memref<1x128xf32, #tpu.memory_space<vmem>>, %arg3: memref<1x128xf32, #tpu.memory_space<vmem>>) attributes {dimension_semantics = [#tpu.dimension_semantics<arbitrary>], iteration_bounds = array<i64: 1>, scalar_prefetch = 0 : i64, scratch_operands = 0 : i64, tpu.core_type = #tpu.core_type<tc>, window_params = [{pipeline_mode = #tpu.pipeline_mode<synchronous>, transform_indices = @transform_0, window_bounds = array<i64: 1, 128>}, {pipeline_mode = #tpu.pipeline_mode<synchronous>, transform_indices = @transform_1, window_bounds = array<i64: 1, 128>}, {pipeline_mode = #tpu.pipeline_mode<synchronous>, transform_indices = @transform_2, window_bounds = array<i64: 1, 128>}]} {
    %c0 = arith.constant 0 : index
    %c0_0 = arith.constant 0 : index
    %0 = vector.load %arg1[%c0, %c0_0] : memref<1x128xf32, #tpu.memory_space<vmem>>, vector<1x128xf32>
    %cst = arith.constant 0.899999976 : f32
    %1 = vector.broadcast %cst : f32 to vector<1x128xf32>
    %2 = arith.mulf %0, %1 : vector<1x128xf32>
    %c0_1 = arith.constant 0 : index
    %c0_2 = arith.constant 0 : index
    %3 = vector.load %arg2[%c0_1, %c0_2] : memref<1x128xf32, #tpu.memory_space<vmem>>, vector<1x128xf32>
    %cst_3 = arith.constant 1.000000e-01 : f32
    %4 = vector.broadcast %cst_3 : f32 to vector<1x128xf32>
    %5 = arith.mulf %3, %4 : vector<1x128xf32>
    %6 = arith.addf %2, %5 : vector<1x128xf32>
    %c0_4 = arith.constant 0 : index
    %c0_5 = arith.constant 0 : index
    %7 = vector.load %arg3[%c0_4, %c0_5] : memref<1x128xf32, #tpu.memory_space<vmem>>, vector<1x128xf32>
    tpu.vector_store %arg3[%c0_4, %c0_5], %6 {strides = array<i32>} : memref<1x128xf32, #tpu.memory_space<vmem>>, vector<1x128xf32>,
    return
  }
  func.func @transform_0(%arg0: i32) -> (i32, i32) {
    %c0_i32 = arith.constant 0 : i32
    %c0_i32_0 = arith.constant 0 : i32
    %c0_i32_1 = arith.constant 0 : i32
    return %c0_i32, %c0_i32_0 : i32, i32
  }
  func.func @transform_1(%arg0: i32) -> (i32, i32) {
    %c0_i32 = arith.constant 0 : i32
    %c0_i32_0 = arith.constant 0 : i32
    %c0_i32_1 = arith.constant 0 : i32
    return %c0_i32, %c0_i32_0 : i32, i32
  }
  func.func @transform_2(%arg0: i32) -> (i32, i32) {
    %c0_i32 = arith.constant 0 : i32
    %c0_i32_0 = arith.constant 0 : i32
    %c0_i32_1 = arith.constant 0 : i32
    return %c0_i32, %c0_i32_0 : i32, i32
  }
}

module attributes {stable_mosaic.version = 11 : i64} {
  func.func @_ema_kernel(%arg0: i32, %arg1: memref<1x256xf32, #tpu.memory_space<vmem>>, %arg2: memref<1x256xf32, #tpu.memory_space<vmem>>, %arg3: memref<1x256xf32, #tpu.memory_space<vmem>>) attributes {dimension_semantics = [#tpu.dimension_semantics<arbitrary>], iteration_bounds = array<i64: 1>, scalar_prefetch = 0 : i64, scratch_operands = 0 : i64, tpu.core_type = #tpu.core_type<tc>, window_params = [{pipeline_mode = #tpu.pipeline_mode<synchronous>, transform_indices = @transform_0, window_bounds = array<i64: 1, 256>}, {pipeline_mode = #tpu.pipeline_mode<synchronous>, transform_indices = @transform_1, window_bounds = array<i64: 1, 256>}, {pipeline_mode = #tpu.pipeline_mode<synchronous>, transform_indices = @transform_2, window_bounds = array<i64: 1, 256>}]} {
    %c0 = arith.constant 0 : index
    %c0_0 = arith.constant 0 : index
    %0 = vector.load %arg1[%c0, %c0_0] : memref<1x256xf32, #tpu.memory_space<vmem>>, vector<1x256xf32>
    %cst = arith.constant 0.899999976 : f32
    %1 = vector.broadcast %cst : f32 to vector<1x256xf32>
    %2 = arith.mulf %0, %1 : vector<1x256xf32>
    %c0_1 = arith.constant 0 : index
    %c0_2 = arith.constant 0 : index
    %3 = vector.load %arg2[%c0_1, %c0_2] : memref<1x256xf32, #tpu.memory_space<vmem>>, vector<1x256xf32>
    %cst_3 = arith.constant 1.000000e-01 : f32
    %4 = vector.broadcast %cst_3 : f32 to vector<1x256xf32>
    %5 = arith.mulf %3, %4 : vector<1x256xf32>
    %6 = arith.addf %2, %5 : vector<1x256xf32>
    %c0_4 = arith.constant 0 : index
    %c0_5 = arith.constant 0 : index
    %7 = vector.load %arg3[%c0_4, %c0_5] : memref<1x256xf32, #tpu.memory_space<vmem>>, vector<1x256xf32>
    tpu.vector_store %arg3[%c0_4, %c0_5], %6 {strides = array<i32>} : memref<1x256xf32, #tpu.memory_space<vmem>>, vector<1x256xf32>,
    return
  }
  func.func @transform_0(%arg0: i32) -> (i32, i32) {
    %c0_i32 = arith.constant 0 : i32
    %c0_i32_0 = arith.constant 0 : i32
    %c0_i32_1 = arith.constant 0 : i32
    return %c0_i32, %c0_i32_0 : i32, i32
  }
  func.func @transform_1(%arg0: i32) -> (i32, i32) {
    %c0_i32 = arith.constant 0 : i32
    %c0_i32_0 = arith.constant 0 : i32
    %c0_i32_1 = arith.constant 0 : i32
    return %c0_i32, %c0_i32_0 : i32, i32
  }
  func.func @transform_2(%arg0: i32) -> (i32, i32) {
    %c0_i32 = arith.constant 0 : i32
    %c0_i32_0 = arith.constant 0 : i32
    %c0_i32_1 = arith.constant 0 : i32
    return %c0_i32, %c0_i32_0 : i32, i32
  }
}

module attributes {stable_mosaic.version = 11 : i64} {
  func.func @_ema_kernel(%arg0: i32, %arg1: memref<1x128xf32, #tpu.memory_space<vmem>>, %arg2: memref<1x128xf32, #tpu.memory_space<vmem>>, %arg3: memref<1x128xf32, #tpu.memory_space<vmem>>) attributes {dimension_semantics = [#tpu.dimension_semantics<arbitrary>], iteration_bounds = array<i64: 1>, scalar_prefetch = 0 : i64, scratch_operands = 0 : i64, tpu.core_type = #tpu.core_type<tc>, window_params = [{pipeline_mode = #tpu.pipeline_mode<synchronous>, transform_indices = @transform_0, window_bounds = array<i64: 1, 128>}, {pipeline_mode = #tpu.pipeline_mode<synchronous>, transform_indices = @transform_1, window_bounds = array<i64: 1, 128>}, {pipeline_mode = #tpu.pipeline_mode<synchronous>, transform_indices = @transform_2, window_bounds = array<i64: 1, 128>}]} {
    %c0 = arith.constant 0 : index
    %c0_0 = arith.constant 0 : index
    %0 = vector.load %arg1[%c0, %c0_0] : memref<1x128xf32, #tpu.memory_space<vmem>>, vector<1x128xf32>
    %cst = arith.constant 0.899999976 : f32
    %1 = vector.broadcast %cst : f32 to vector<1x128xf32>
    %2 = arith.mulf %0, %1 : vector<1x128xf32>
    %c0_1 = arith.constant 0 : index
    %c0_2 = arith.constant 0 : index
    %3 = vector.load %arg2[%c0_1, %c0_2] : memref<1x128xf32, #tpu.memory_space<vmem>>, vector<1x128xf32>
    %cst_3 = arith.constant 1.000000e-01 : f32
    %4 = vector.broadcast %cst_3 : f32 to vector<1x128xf32>
    %5 = arith.mulf %3, %4 : vector<1x128xf32>
    %6 = arith.addf %2, %5 : vector<1x128xf32>
    %c0_4 = arith.constant 0 : index
    %c0_5 = arith.constant 0 : index
    %7 = vector.load %arg3[%c0_4, %c0_5] : memref<1x128xf32, #tpu.memory_space<vmem>>, vector<1x128xf32>
    tpu.vector_store %arg3[%c0_4, %c0_5], %6 {strides = array<i32>} : memref<1x128xf32, #tpu.memory_space<vmem>>, vector<1x128xf32>,
    return
  }
  func.func @transform_0(%arg0: i32) -> (i32, i32) {
    %c0_i32 = arith.constant 0 : i32
    %c0_i32_0 = arith.constant 0 : i32
    %c0_i32_1 = arith.constant 0 : i32
    return %c0_i32, %c0_i32_0 : i32, i32
  }
  func.func @transform_1(%arg0: i32) -> (i32, i32) {
    %c0_i32 = arith.constant 0 : i32
    %c0_i32_0 = arith.constant 0 : i32
    %c0_i32_1 = arith.constant 0 : i32
    return %c0_i32, %c0_i32_0 : i32, i32
  }
  func.func @transform_2(%arg0: i32) -> (i32, i32) {
    %c0_i32 = arith.constant 0 : i32
    %c0_i32_0 = arith.constant 0 : i32
    %c0_i32_1 = arith.constant 0 : i32
    return %c0_i32, %c0_i32_0 : i32, i32
  }
}

module attributes {stable_mosaic.version = 11 : i64} {
  func.func @_ema_kernel(%arg0: i32, %arg1: memref<1x256xf32, #tpu.memory_space<vmem>>, %arg2: memref<1x256xf32, #tpu.memory_space<vmem>>, %arg3: memref<1x256xf32, #tpu.memory_space<vmem>>) attributes {dimension_semantics = [#tpu.dimension_semantics<arbitrary>], iteration_bounds = array<i64: 1>, scalar_prefetch = 0 : i64, scratch_operands = 0 : i64, tpu.core_type = #tpu.core_type<tc>, window_params = [{pipeline_mode = #tpu.pipeline_mode<synchronous>, transform_indices = @transform_0, window_bounds = array<i64: 1, 256>}, {pipeline_mode = #tpu.pipeline_mode<synchronous>, transform_indices = @transform_1, window_bounds = array<i64: 1, 256>}, {pipeline_mode = #tpu.pipeline_mode<synchronous>, transform_indices = @transform_2, window_bounds = array<i64: 1, 256>}]} {
    %c0 = arith.constant 0 : index
    %c0_0 = arith.constant 0 : index
    %0 = vector.load %arg1[%c0, %c0_0] : memref<1x256xf32, #tpu.memory_space<vmem>>, vector<1x256xf32>
    %cst = arith.constant 0.899999976 : f32
    %1 = vector.broadcast %cst : f32 to vector<1x256xf32>
    %2 = arith.mulf %0, %1 : vector<1x256xf32>
    %c0_1 = arith.constant 0 : index
    %c0_2 = arith.constant 0 : index
    %3 = vector.load %arg2[%c0_1, %c0_2] : memref<1x256xf32, #tpu.memory_space<vmem>>, vector<1x256xf32>
    %cst_3 = arith.constant 1.000000e-01 : f32
    %4 = vector.broadcast %cst_3 : f32 to vector<1x256xf32>
    %5 = arith.mulf %3, %4 : vector<1x256xf32>
    %6 = arith.addf %2, %5 : vector<1x256xf32>
    %c0_4 = arith.constant 0 : index
    %c0_5 = arith.constant 0 : index
    %7 = vector.load %arg3[%c0_4, %c0_5] : memref<1x256xf32, #tpu.memory_space<vmem>>, vector<1x256xf32>
    tpu.vector_store %arg3[%c0_4, %c0_5], %6 {strides = array<i32>} : memref<1x256xf32, #tpu.memory_space<vmem>>, vector<1x256xf32>,
    return
  }
  func.func @transform_0(%arg0: i32) -> (i32, i32) {
    %c0_i32 = arith.constant 0 : i32
    %c0_i32_0 = arith.constant 0 : i32
    %c0_i32_1 = arith.constant 0 : i32
    return %c0_i32, %c0_i32_0 : i32, i32
  }
  func.func @transform_1(%arg0: i32) -> (i32, i32) {
    %c0_i32 = arith.constant 0 : i32
    %c0_i32_0 = arith.constant 0 : i32
    %c0_i32_1 = arith.constant 0 : i32
    return %c0_i32, %c0_i32_0 : i32, i32
  }
  func.func @transform_2(%arg0: i32) -> (i32, i32) {
    %c0_i32 = arith.constant 0 : i32
    %c0_i32_0 = arith.constant 0 : i32
    %c0_i32_1 = arith.constant 0 : i32
    return %c0_i32, %c0_i32_0 : i32, i32
  }
}

module attributes {stable_mosaic.version = 11 : i64} {
  func.func @_byol_head_kernel(%arg0: i32, %arg1: memref<8x1024xf32, #tpu.memory_space<vmem>>, %arg2: memref<1024x256xf32, #tpu.memory_space<vmem>>, %arg3: memref<1x256xf32, #tpu.memory_space<vmem>>, %arg4: memref<1x256xf32, #tpu.memory_space<vmem>>, %arg5: memref<256x128xf32, #tpu.memory_space<vmem>>, %arg6: memref<1x128xf32, #tpu.memory_space<vmem>>, %arg7: memref<8x128xf32, #tpu.memory_space<vmem>>) attributes {dimension_semantics = [#tpu.dimension_semantics<arbitrary>], iteration_bounds = array<i64: 1>, scalar_prefetch = 0 : i64, scratch_operands = 0 : i64, tpu.core_type = #tpu.core_type<tc>, window_params = [{pipeline_mode = #tpu.pipeline_mode<synchronous>, transform_indices = @transform_0, window_bounds = array<i64: 8, 1024>}, {pipeline_mode = #tpu.pipeline_mode<synchronous>, transform_indices = @transform_1, window_bounds = array<i64: 1024, 256>}, {pipeline_mode = #tpu.pipeline_mode<synchronous>, transform_indices = @transform_2, window_bounds = array<i64: 1, 256>}, {pipeline_mode = #tpu.pipeline_mode<synchronous>, transform_indices = @transform_3, window_bounds = array<i64: 1, 256>}, {pipeline_mode = #tpu.pipeline_mode<synchronous>, transform_indices = @transform_4, window_bounds = array<i64: 256, 128>}, {pipeline_mode = #tpu.pipeline_mode<synchronous>, transform_indices = @transform_5, window_bounds = array<i64: 1, 128>}, {pipeline_mode = #tpu.pipeline_mode<synchronous>, transform_indices = @transform_6, window_bounds = array<i64: 8, 128>}]} {
    %c0 = arith.constant 0 : index
    %c0_0 = arith.constant 0 : index
    %0 = vector.load %arg1[%c0, %c0_0] : memref<8x1024xf32, #tpu.memory_space<vmem>>, vector<8x1024xf32>
    %c0_1 = arith.constant 0 : index
    %c0_2 = arith.constant 0 : index
    %1 = vector.load %arg2[%c0_1, %c0_2] : memref<1024x256xf32, #tpu.memory_space<vmem>>, vector<1024x256xf32>
    %cst = arith.constant dense<0.000000e+00> : vector<8x256xf32>
    %2 = tpu.matmul %0, %1, %cst {dimension_numbers = #tpu.dot_dimension_numbers<[1], [0], [0], [1], [0, 0, 1, 1], [], []>} : vector<8x1024xf32>, vector<1024x256xf32>, vector<8x256xf32> -> vector<8x256xf32>
    %cst_3 = arith.constant dense<0.000000e+00> : vector<256xf32>
    %3 = vector.multi_reduction <add>, %2, %cst_3 [0] : vector<8x256xf32> to vector<256xf32>
    %4 = vector.shape_cast %3 : vector<256xf32> to vector<1x256xf32>
    %cst_4 = arith.constant 8.000000e+00 : f32
    %5 = vector.broadcast %cst_4 : f32 to vector<1x256xf32>
    %6 = arith.divf %4, %5 : vector<1x256xf32>
    %7 = vector.broadcast %6 : vector<1x256xf32> to vector<8x256xf32>
    %8 = arith.subf %2, %7 : vector<8x256xf32>
    %9 = arith.mulf %8, %8 : vector<8x256xf32>
    %cst_5 = arith.constant dense<0.000000e+00> : vector<256xf32>
    %10 = vector.multi_reduction <add>, %9, %cst_5 [0] : vector<8x256xf32> to vector<256xf32>
    %11 = vector.shape_cast %10 : vector<256xf32> to vector<1x256xf32>
    %cst_6 = arith.constant 8.000000e+00 : f32
    %12 = vector.broadcast %cst_6 : f32 to vector<1x256xf32>
    %13 = arith.divf %11, %12 : vector<1x256xf32>
    %14 = vector.broadcast %6 : vector<1x256xf32> to vector<8x256xf32>
    %15 = arith.subf %2, %14 : vector<8x256xf32>
    %cst_7 = arith.constant 9.99999974E-6 : f32
    %16 = vector.broadcast %cst_7 : f32 to vector<1x256xf32>
    %17 = arith.addf %13, %16 : vector<1x256xf32>
    %18 = math.rsqrt %17 : vector<1x256xf32>
    %19 = vector.broadcast %18 : vector<1x256xf32> to vector<8x256xf32>
    %20 = arith.mulf %15, %19 : vector<8x256xf32>
    %c0_8 = arith.constant 0 : index
    %c0_9 = arith.constant 0 : index
    %21 = vector.load %arg3[%c0_8, %c0_9] : memref<1x256xf32, #tpu.memory_space<vmem>>, vector<1x256xf32>
    %22 = vector.broadcast %21 : vector<1x256xf32> to vector<8x256xf32>
    %23 = arith.mulf %20, %22 : vector<8x256xf32>
    %c0_10 = arith.constant 0 : index
    %c0_11 = arith.constant 0 : index
    %24 = vector.load %arg4[%c0_10, %c0_11] : memref<1x256xf32, #tpu.memory_space<vmem>>, vector<1x256xf32>
    %25 = vector.broadcast %24 : vector<1x256xf32> to vector<8x256xf32>
    %26 = arith.addf %23, %25 : vector<8x256xf32>
    %cst_12 = arith.constant 0.000000e+00 : f32
    %27 = vector.broadcast %cst_12 : f32 to vector<8x256xf32>
    %28 = arith.maximumf %26, %27 : vector<8x256xf32>
    %c0_13 = arith.constant 0 : index
    %c0_14 = arith.constant 0 : index
    %29 = vector.load %arg5[%c0_13, %c0_14] : memref<256x128xf32, #tpu.memory_space<vmem>>, vector<256x128xf32>
    %cst_15 = arith.constant dense<0.000000e+00> : vector<8x128xf32>
    %30 = tpu.matmul %28, %29, %cst_15 {dimension_numbers = #tpu.dot_dimension_numbers<[1], [0], [0], [1], [0, 0, 1, 1], [], []>} : vector<8x256xf32>, vector<256x128xf32>, vector<8x128xf32> -> vector<8x128xf32>
    %c0_16 = arith.constant 0 : index
    %c0_17 = arith.constant 0 : index
    %31 = vector.load %arg6[%c0_16, %c0_17] : memref<1x128xf32, #tpu.memory_space<vmem>>, vector<1x128xf32>
    %32 = vector.broadcast %31 : vector<1x128xf32> to vector<8x128xf32>
    %33 = arith.addf %30, %32 : vector<8x128xf32>
    %c0_18 = arith.constant 0 : index
    %c0_19 = arith.constant 0 : index
    %34 = vector.load %arg7[%c0_18, %c0_19] : memref<8x128xf32, #tpu.memory_space<vmem>>, vector<8x128xf32>
    tpu.vector_store %arg7[%c0_18, %c0_19], %33 {strides = array<i32>} : memref<8x128xf32, #tpu.memory_space<vmem>>, vector<8x128xf32>,
    return
  }
  func.func @transform_0(%arg0: i32) -> (i32, i32) {
    %c0_i32 = arith.constant 0 : i32
    %c0_i32_0 = arith.constant 0 : i32
    %c0_i32_1 = arith.constant 0 : i32
    return %c0_i32, %c0_i32_0 : i32, i32
  }
  func.func @transform_1(%arg0: i32) -> (i32, i32) {
    %c0_i32 = arith.constant 0 : i32
    %c0_i32_0 = arith.constant 0 : i32
    %c0_i32_1 = arith.constant 0 : i32
    return %c0_i32, %c0_i32_0 : i32, i32
  }
  func.func @transform_2(%arg0: i32) -> (i32, i32) {
    %c0_i32 = arith.constant 0 : i32
    %c0_i32_0 = arith.constant 0 : i32
    %c0_i32_1 = arith.constant 0 : i32
    return %c0_i32, %c0_i32_0 : i32, i32
  }
  func.func @transform_3(%arg0: i32) -> (i32, i32) {
    %c0_i32 = arith.constant 0 : i32
    %c0_i32_0 = arith.constant 0 : i32
    %c0_i32_1 = arith.constant 0 : i32
    return %c0_i32, %c0_i32_0 : i32, i32
  }
  func.func @transform_4(%arg0: i32) -> (i32, i32) {
    %c0_i32 = arith.constant 0 : i32
    %c0_i32_0 = arith.constant 0 : i32
    %c0_i32_1 = arith.constant 0 : i32
    return %c0_i32, %c0_i32_0 : i32, i32
  }
  func.func @transform_5(%arg0: i32) -> (i32, i32) {
    %c0_i32 = arith.constant 0 : i32
    %c0_i32_0 = arith.constant 0 : i32
    %c0_i32_1 = arith.constant 0 : i32
    return %c0_i32, %c0_i32_0 : i32, i32
  }
  func.func @transform_6(%arg0: i32) -> (i32, i32) {
    %c0_i32 = arith.constant 0 : i32
    %c0_i32_0 = arith.constant 0 : i32
    %c0_i32_1 = arith.constant 0 : i32
    return %c0_i32, %c0_i32_0 : i32, i32
  }
}

module attributes {stable_mosaic.version = 11 : i64} {
  func.func @_byol_head_kernel(%arg0: i32, %arg1: memref<8x128xf32, #tpu.memory_space<vmem>>, %arg2: memref<128x256xf32, #tpu.memory_space<vmem>>, %arg3: memref<1x256xf32, #tpu.memory_space<vmem>>, %arg4: memref<1x256xf32, #tpu.memory_space<vmem>>, %arg5: memref<256x128xf32, #tpu.memory_space<vmem>>, %arg6: memref<1x128xf32, #tpu.memory_space<vmem>>, %arg7: memref<8x128xf32, #tpu.memory_space<vmem>>) attributes {dimension_semantics = [#tpu.dimension_semantics<arbitrary>], iteration_bounds = array<i64: 1>, scalar_prefetch = 0 : i64, scratch_operands = 0 : i64, tpu.core_type = #tpu.core_type<tc>, window_params = [{pipeline_mode = #tpu.pipeline_mode<synchronous>, transform_indices = @transform_0, window_bounds = array<i64: 8, 128>}, {pipeline_mode = #tpu.pipeline_mode<synchronous>, transform_indices = @transform_1, window_bounds = array<i64: 128, 256>}, {pipeline_mode = #tpu.pipeline_mode<synchronous>, transform_indices = @transform_2, window_bounds = array<i64: 1, 256>}, {pipeline_mode = #tpu.pipeline_mode<synchronous>, transform_indices = @transform_3, window_bounds = array<i64: 1, 256>}, {pipeline_mode = #tpu.pipeline_mode<synchronous>, transform_indices = @transform_4, window_bounds = array<i64: 256, 128>}, {pipeline_mode = #tpu.pipeline_mode<synchronous>, transform_indices = @transform_5, window_bounds = array<i64: 1, 128>}, {pipeline_mode = #tpu.pipeline_mode<synchronous>, transform_indices = @transform_6, window_bounds = array<i64: 8, 128>}]} {
    %c0 = arith.constant 0 : index
    %c0_0 = arith.constant 0 : index
    %0 = vector.load %arg1[%c0, %c0_0] : memref<8x128xf32, #tpu.memory_space<vmem>>, vector<8x128xf32>
    %c0_1 = arith.constant 0 : index
    %c0_2 = arith.constant 0 : index
    %1 = vector.load %arg2[%c0_1, %c0_2] : memref<128x256xf32, #tpu.memory_space<vmem>>, vector<128x256xf32>
    %cst = arith.constant dense<0.000000e+00> : vector<8x256xf32>
    %2 = tpu.matmul %0, %1, %cst {dimension_numbers = #tpu.dot_dimension_numbers<[1], [0], [0], [1], [0, 0, 1, 1], [], []>} : vector<8x128xf32>, vector<128x256xf32>, vector<8x256xf32> -> vector<8x256xf32>
    %cst_3 = arith.constant dense<0.000000e+00> : vector<256xf32>
    %3 = vector.multi_reduction <add>, %2, %cst_3 [0] : vector<8x256xf32> to vector<256xf32>
    %4 = vector.shape_cast %3 : vector<256xf32> to vector<1x256xf32>
    %cst_4 = arith.constant 8.000000e+00 : f32
    %5 = vector.broadcast %cst_4 : f32 to vector<1x256xf32>
    %6 = arith.divf %4, %5 : vector<1x256xf32>
    %7 = vector.broadcast %6 : vector<1x256xf32> to vector<8x256xf32>
    %8 = arith.subf %2, %7 : vector<8x256xf32>
    %9 = arith.mulf %8, %8 : vector<8x256xf32>
    %cst_5 = arith.constant dense<0.000000e+00> : vector<256xf32>
    %10 = vector.multi_reduction <add>, %9, %cst_5 [0] : vector<8x256xf32> to vector<256xf32>
    %11 = vector.shape_cast %10 : vector<256xf32> to vector<1x256xf32>
    %cst_6 = arith.constant 8.000000e+00 : f32
    %12 = vector.broadcast %cst_6 : f32 to vector<1x256xf32>
    %13 = arith.divf %11, %12 : vector<1x256xf32>
    %14 = vector.broadcast %6 : vector<1x256xf32> to vector<8x256xf32>
    %15 = arith.subf %2, %14 : vector<8x256xf32>
    %cst_7 = arith.constant 9.99999974E-6 : f32
    %16 = vector.broadcast %cst_7 : f32 to vector<1x256xf32>
    %17 = arith.addf %13, %16 : vector<1x256xf32>
    %18 = math.rsqrt %17 : vector<1x256xf32>
    %19 = vector.broadcast %18 : vector<1x256xf32> to vector<8x256xf32>
    %20 = arith.mulf %15, %19 : vector<8x256xf32>
    %c0_8 = arith.constant 0 : index
    %c0_9 = arith.constant 0 : index
    %21 = vector.load %arg3[%c0_8, %c0_9] : memref<1x256xf32, #tpu.memory_space<vmem>>, vector<1x256xf32>
    %22 = vector.broadcast %21 : vector<1x256xf32> to vector<8x256xf32>
    %23 = arith.mulf %20, %22 : vector<8x256xf32>
    %c0_10 = arith.constant 0 : index
    %c0_11 = arith.constant 0 : index
    %24 = vector.load %arg4[%c0_10, %c0_11] : memref<1x256xf32, #tpu.memory_space<vmem>>, vector<1x256xf32>
    %25 = vector.broadcast %24 : vector<1x256xf32> to vector<8x256xf32>
    %26 = arith.addf %23, %25 : vector<8x256xf32>
    %cst_12 = arith.constant 0.000000e+00 : f32
    %27 = vector.broadcast %cst_12 : f32 to vector<8x256xf32>
    %28 = arith.maximumf %26, %27 : vector<8x256xf32>
    %c0_13 = arith.constant 0 : index
    %c0_14 = arith.constant 0 : index
    %29 = vector.load %arg5[%c0_13, %c0_14] : memref<256x128xf32, #tpu.memory_space<vmem>>, vector<256x128xf32>
    %cst_15 = arith.constant dense<0.000000e+00> : vector<8x128xf32>
    %30 = tpu.matmul %28, %29, %cst_15 {dimension_numbers = #tpu.dot_dimension_numbers<[1], [0], [0], [1], [0, 0, 1, 1], [], []>} : vector<8x256xf32>, vector<256x128xf32>, vector<8x128xf32> -> vector<8x128xf32>
    %c0_16 = arith.constant 0 : index
    %c0_17 = arith.constant 0 : index
    %31 = vector.load %arg6[%c0_16, %c0_17] : memref<1x128xf32, #tpu.memory_space<vmem>>, vector<1x128xf32>
    %32 = vector.broadcast %31 : vector<1x128xf32> to vector<8x128xf32>
    %33 = arith.addf %30, %32 : vector<8x128xf32>
    %c0_18 = arith.constant 0 : index
    %c0_19 = arith.constant 0 : index
    %34 = vector.load %arg7[%c0_18, %c0_19] : memref<8x128xf32, #tpu.memory_space<vmem>>, vector<8x128xf32>
    tpu.vector_store %arg7[%c0_18, %c0_19], %33 {strides = array<i32>} : memref<8x128xf32, #tpu.memory_space<vmem>>, vector<8x128xf32>,
    return
  }
  func.func @transform_0(%arg0: i32) -> (i32, i32) {
    %c0_i32 = arith.constant 0 : i32
    %c0_i32_0 = arith.constant 0 : i32
    %c0_i32_1 = arith.constant 0 : i32
    return %c0_i32, %c0_i32_0 : i32, i32
  }
  func.func @transform_1(%arg0: i32) -> (i32, i32) {
    %c0_i32 = arith.constant 0 : i32
    %c0_i32_0 = arith.constant 0 : i32
    %c0_i32_1 = arith.constant 0 : i32
    return %c0_i32, %c0_i32_0 : i32, i32
  }
  func.func @transform_2(%arg0: i32) -> (i32, i32) {
    %c0_i32 = arith.constant 0 : i32
    %c0_i32_0 = arith.constant 0 : i32
    %c0_i32_1 = arith.constant 0 : i32
    return %c0_i32, %c0_i32_0 : i32, i32
  }
  func.func @transform_3(%arg0: i32) -> (i32, i32) {
    %c0_i32 = arith.constant 0 : i32
    %c0_i32_0 = arith.constant 0 : i32
    %c0_i32_1 = arith.constant 0 : i32
    return %c0_i32, %c0_i32_0 : i32, i32
  }
  func.func @transform_4(%arg0: i32) -> (i32, i32) {
    %c0_i32 = arith.constant 0 : i32
    %c0_i32_0 = arith.constant 0 : i32
    %c0_i32_1 = arith.constant 0 : i32
    return %c0_i32, %c0_i32_0 : i32, i32
  }
  func.func @transform_5(%arg0: i32) -> (i32, i32) {
    %c0_i32 = arith.constant 0 : i32
    %c0_i32_0 = arith.constant 0 : i32
    %c0_i32_1 = arith.constant 0 : i32
    return %c0_i32, %c0_i32_0 : i32, i32
  }
  func.func @transform_6(%arg0: i32) -> (i32, i32) {
    %c0_i32 = arith.constant 0 : i32
    %c0_i32_0 = arith.constant 0 : i32
    %c0_i32_1 = arith.constant 0 : i32
    return %c0_i32, %c0_i32_0 : i32, i32
  }
}

module attributes {stable_mosaic.version = 11 : i64} {
  func.func @_byol_head_kernel(%arg0: i32, %arg1: memref<8x1024xf32, #tpu.memory_space<vmem>>, %arg2: memref<1024x256xf32, #tpu.memory_space<vmem>>, %arg3: memref<1x256xf32, #tpu.memory_space<vmem>>, %arg4: memref<1x256xf32, #tpu.memory_space<vmem>>, %arg5: memref<256x128xf32, #tpu.memory_space<vmem>>, %arg6: memref<1x128xf32, #tpu.memory_space<vmem>>, %arg7: memref<8x128xf32, #tpu.memory_space<vmem>>) attributes {dimension_semantics = [#tpu.dimension_semantics<arbitrary>], iteration_bounds = array<i64: 1>, scalar_prefetch = 0 : i64, scratch_operands = 0 : i64, tpu.core_type = #tpu.core_type<tc>, window_params = [{pipeline_mode = #tpu.pipeline_mode<synchronous>, transform_indices = @transform_0, window_bounds = array<i64: 8, 1024>}, {pipeline_mode = #tpu.pipeline_mode<synchronous>, transform_indices = @transform_1, window_bounds = array<i64: 1024, 256>}, {pipeline_mode = #tpu.pipeline_mode<synchronous>, transform_indices = @transform_2, window_bounds = array<i64: 1, 256>}, {pipeline_mode = #tpu.pipeline_mode<synchronous>, transform_indices = @transform_3, window_bounds = array<i64: 1, 256>}, {pipeline_mode = #tpu.pipeline_mode<synchronous>, transform_indices = @transform_4, window_bounds = array<i64: 256, 128>}, {pipeline_mode = #tpu.pipeline_mode<synchronous>, transform_indices = @transform_5, window_bounds = array<i64: 1, 128>}, {pipeline_mode = #tpu.pipeline_mode<synchronous>, transform_indices = @transform_6, window_bounds = array<i64: 8, 128>}]} {
    %c0 = arith.constant 0 : index
    %c0_0 = arith.constant 0 : index
    %0 = vector.load %arg1[%c0, %c0_0] : memref<8x1024xf32, #tpu.memory_space<vmem>>, vector<8x1024xf32>
    %c0_1 = arith.constant 0 : index
    %c0_2 = arith.constant 0 : index
    %1 = vector.load %arg2[%c0_1, %c0_2] : memref<1024x256xf32, #tpu.memory_space<vmem>>, vector<1024x256xf32>
    %cst = arith.constant dense<0.000000e+00> : vector<8x256xf32>
    %2 = tpu.matmul %0, %1, %cst {dimension_numbers = #tpu.dot_dimension_numbers<[1], [0], [0], [1], [0, 0, 1, 1], [], []>} : vector<8x1024xf32>, vector<1024x256xf32>, vector<8x256xf32> -> vector<8x256xf32>
    %cst_3 = arith.constant dense<0.000000e+00> : vector<256xf32>
    %3 = vector.multi_reduction <add>, %2, %cst_3 [0] : vector<8x256xf32> to vector<256xf32>
    %4 = vector.shape_cast %3 : vector<256xf32> to vector<1x256xf32>
    %cst_4 = arith.constant 8.000000e+00 : f32
    %5 = vector.broadcast %cst_4 : f32 to vector<1x256xf32>
    %6 = arith.divf %4, %5 : vector<1x256xf32>
    %7 = vector.broadcast %6 : vector<1x256xf32> to vector<8x256xf32>
    %8 = arith.subf %2, %7 : vector<8x256xf32>
    %9 = arith.mulf %8, %8 : vector<8x256xf32>
    %cst_5 = arith.constant dense<0.000000e+00> : vector<256xf32>
    %10 = vector.multi_reduction <add>, %9, %cst_5 [0] : vector<8x256xf32> to vector<256xf32>
    %11 = vector.shape_cast %10 : vector<256xf32> to vector<1x256xf32>
    %cst_6 = arith.constant 8.000000e+00 : f32
    %12 = vector.broadcast %cst_6 : f32 to vector<1x256xf32>
    %13 = arith.divf %11, %12 : vector<1x256xf32>
    %14 = vector.broadcast %6 : vector<1x256xf32> to vector<8x256xf32>
    %15 = arith.subf %2, %14 : vector<8x256xf32>
    %cst_7 = arith.constant 9.99999974E-6 : f32
    %16 = vector.broadcast %cst_7 : f32 to vector<1x256xf32>
    %17 = arith.addf %13, %16 : vector<1x256xf32>
    %18 = math.rsqrt %17 : vector<1x256xf32>
    %19 = vector.broadcast %18 : vector<1x256xf32> to vector<8x256xf32>
    %20 = arith.mulf %15, %19 : vector<8x256xf32>
    %c0_8 = arith.constant 0 : index
    %c0_9 = arith.constant 0 : index
    %21 = vector.load %arg3[%c0_8, %c0_9] : memref<1x256xf32, #tpu.memory_space<vmem>>, vector<1x256xf32>
    %22 = vector.broadcast %21 : vector<1x256xf32> to vector<8x256xf32>
    %23 = arith.mulf %20, %22 : vector<8x256xf32>
    %c0_10 = arith.constant 0 : index
    %c0_11 = arith.constant 0 : index
    %24 = vector.load %arg4[%c0_10, %c0_11] : memref<1x256xf32, #tpu.memory_space<vmem>>, vector<1x256xf32>
    %25 = vector.broadcast %24 : vector<1x256xf32> to vector<8x256xf32>
    %26 = arith.addf %23, %25 : vector<8x256xf32>
    %cst_12 = arith.constant 0.000000e+00 : f32
    %27 = vector.broadcast %cst_12 : f32 to vector<8x256xf32>
    %28 = arith.maximumf %26, %27 : vector<8x256xf32>
    %c0_13 = arith.constant 0 : index
    %c0_14 = arith.constant 0 : index
    %29 = vector.load %arg5[%c0_13, %c0_14] : memref<256x128xf32, #tpu.memory_space<vmem>>, vector<256x128xf32>
    %cst_15 = arith.constant dense<0.000000e+00> : vector<8x128xf32>
    %30 = tpu.matmul %28, %29, %cst_15 {dimension_numbers = #tpu.dot_dimension_numbers<[1], [0], [0], [1], [0, 0, 1, 1], [], []>} : vector<8x256xf32>, vector<256x128xf32>, vector<8x128xf32> -> vector<8x128xf32>
    %c0_16 = arith.constant 0 : index
    %c0_17 = arith.constant 0 : index
    %31 = vector.load %arg6[%c0_16, %c0_17] : memref<1x128xf32, #tpu.memory_space<vmem>>, vector<1x128xf32>
    %32 = vector.broadcast %31 : vector<1x128xf32> to vector<8x128xf32>
    %33 = arith.addf %30, %32 : vector<8x128xf32>
    %c0_18 = arith.constant 0 : index
    %c0_19 = arith.constant 0 : index
    %34 = vector.load %arg7[%c0_18, %c0_19] : memref<8x128xf32, #tpu.memory_space<vmem>>, vector<8x128xf32>
    tpu.vector_store %arg7[%c0_18, %c0_19], %33 {strides = array<i32>} : memref<8x128xf32, #tpu.memory_space<vmem>>, vector<8x128xf32>,
    return
  }
  func.func @transform_0(%arg0: i32) -> (i32, i32) {
    %c0_i32 = arith.constant 0 : i32
    %c0_i32_0 = arith.constant 0 : i32
    %c0_i32_1 = arith.constant 0 : i32
    return %c0_i32, %c0_i32_0 : i32, i32
  }
  func.func @transform_1(%arg0: i32) -> (i32, i32) {
    %c0_i32 = arith.constant 0 : i32
    %c0_i32_0 = arith.constant 0 : i32
    %c0_i32_1 = arith.constant 0 : i32
    return %c0_i32, %c0_i32_0 : i32, i32
  }
  func.func @transform_2(%arg0: i32) -> (i32, i32) {
    %c0_i32 = arith.constant 0 : i32
    %c0_i32_0 = arith.constant 0 : i32
    %c0_i32_1 = arith.constant 0 : i32
    return %c0_i32, %c0_i32_0 : i32, i32
  }
  func.func @transform_3(%arg0: i32) -> (i32, i32) {
    %c0_i32 = arith.constant 0 : i32
    %c0_i32_0 = arith.constant 0 : i32
    %c0_i32_1 = arith.constant 0 : i32
    return %c0_i32, %c0_i32_0 : i32, i32
  }
  func.func @transform_4(%arg0: i32) -> (i32, i32) {
    %c0_i32 = arith.constant 0 : i32
    %c0_i32_0 = arith.constant 0 : i32
    %c0_i32_1 = arith.constant 0 : i32
    return %c0_i32, %c0_i32_0 : i32, i32
  }
  func.func @transform_5(%arg0: i32) -> (i32, i32) {
    %c0_i32 = arith.constant 0 : i32
    %c0_i32_0 = arith.constant 0 : i32
    %c0_i32_1 = arith.constant 0 : i32
    return %c0_i32, %c0_i32_0 : i32, i32
  }
  func.func @transform_6(%arg0: i32) -> (i32, i32) {
    %c0_i32 = arith.constant 0 : i32
    %c0_i32_0 = arith.constant 0 : i32
    %c0_i32_1 = arith.constant 0 : i32
    return %c0_i32, %c0_i32_0 : i32, i32
  }
}

module attributes {stable_mosaic.version = 11 : i64} {
  func.func @_ema_kernel(%arg0: i32, %arg1: memref<256x128xf32, #tpu.memory_space<vmem>>, %arg2: memref<256x128xf32, #tpu.memory_space<vmem>>, %arg3: memref<256x128xf32, #tpu.memory_space<vmem>>) attributes {dimension_semantics = [#tpu.dimension_semantics<arbitrary>], iteration_bounds = array<i64: 1>, scalar_prefetch = 0 : i64, scratch_operands = 0 : i64, tpu.core_type = #tpu.core_type<tc>, window_params = [{pipeline_mode = #tpu.pipeline_mode<synchronous>, transform_indices = @transform_0, window_bounds = array<i64: 256, 128>}, {pipeline_mode = #tpu.pipeline_mode<synchronous>, transform_indices = @transform_1, window_bounds = array<i64: 256, 128>}, {pipeline_mode = #tpu.pipeline_mode<synchronous>, transform_indices = @transform_2, window_bounds = array<i64: 256, 128>}]} {
    %c0 = arith.constant 0 : index
    %c0_0 = arith.constant 0 : index
    %0 = vector.load %arg1[%c0, %c0_0] : memref<256x128xf32, #tpu.memory_space<vmem>>, vector<256x128xf32>
    %cst = arith.constant 0.899999976 : f32
    %1 = vector.broadcast %cst : f32 to vector<256x128xf32>
    %2 = arith.mulf %0, %1 : vector<256x128xf32>
    %c0_1 = arith.constant 0 : index
    %c0_2 = arith.constant 0 : index
    %3 = vector.load %arg2[%c0_1, %c0_2] : memref<256x128xf32, #tpu.memory_space<vmem>>, vector<256x128xf32>
    %cst_3 = arith.constant 1.000000e-01 : f32
    %4 = vector.broadcast %cst_3 : f32 to vector<256x128xf32>
    %5 = arith.mulf %3, %4 : vector<256x128xf32>
    %6 = arith.addf %2, %5 : vector<256x128xf32>
    %c0_4 = arith.constant 0 : index
    %c0_5 = arith.constant 0 : index
    %7 = vector.load %arg3[%c0_4, %c0_5] : memref<256x128xf32, #tpu.memory_space<vmem>>, vector<256x128xf32>
    tpu.vector_store %arg3[%c0_4, %c0_5], %6 {strides = array<i32>} : memref<256x128xf32, #tpu.memory_space<vmem>>, vector<256x128xf32>,
    return
  }
  func.func @transform_0(%arg0: i32) -> (i32, i32) {
    %c0_i32 = arith.constant 0 : i32
    %c0_i32_0 = arith.constant 0 : i32
    %c0_i32_1 = arith.constant 0 : i32
    return %c0_i32, %c0_i32_0 : i32, i32
  }
  func.func @transform_1(%arg0: i32) -> (i32, i32) {
    %c0_i32 = arith.constant 0 : i32
    %c0_i32_0 = arith.constant 0 : i32
    %c0_i32_1 = arith.constant 0 : i32
    return %c0_i32, %c0_i32_0 : i32, i32
  }
  func.func @transform_2(%arg0: i32) -> (i32, i32) {
    %c0_i32 = arith.constant 0 : i32
    %c0_i32_0 = arith.constant 0 : i32
    %c0_i32_1 = arith.constant 0 : i32
    return %c0_i32, %c0_i32_0 : i32, i32
  }
}

module attributes {stable_mosaic.version = 11 : i64} {
  func.func @_ema_kernel(%arg0: i32, %arg1: memref<1024x256xf32, #tpu.memory_space<vmem>>, %arg2: memref<1024x256xf32, #tpu.memory_space<vmem>>, %arg3: memref<1024x256xf32, #tpu.memory_space<vmem>>) attributes {dimension_semantics = [#tpu.dimension_semantics<arbitrary>], iteration_bounds = array<i64: 1>, scalar_prefetch = 0 : i64, scratch_operands = 0 : i64, tpu.core_type = #tpu.core_type<tc>, window_params = [{pipeline_mode = #tpu.pipeline_mode<synchronous>, transform_indices = @transform_0, window_bounds = array<i64: 1024, 256>}, {pipeline_mode = #tpu.pipeline_mode<synchronous>, transform_indices = @transform_1, window_bounds = array<i64: 1024, 256>}, {pipeline_mode = #tpu.pipeline_mode<synchronous>, transform_indices = @transform_2, window_bounds = array<i64: 1024, 256>}]} {
    %c0 = arith.constant 0 : index
    %c0_0 = arith.constant 0 : index
    %0 = vector.load %arg1[%c0, %c0_0] : memref<1024x256xf32, #tpu.memory_space<vmem>>, vector<1024x256xf32>
    %cst = arith.constant 0.899999976 : f32
    %1 = vector.broadcast %cst : f32 to vector<1024x256xf32>
    %2 = arith.mulf %0, %1 : vector<1024x256xf32>
    %c0_1 = arith.constant 0 : index
    %c0_2 = arith.constant 0 : index
    %3 = vector.load %arg2[%c0_1, %c0_2] : memref<1024x256xf32, #tpu.memory_space<vmem>>, vector<1024x256xf32>
    %cst_3 = arith.constant 1.000000e-01 : f32
    %4 = vector.broadcast %cst_3 : f32 to vector<1024x256xf32>
    %5 = arith.mulf %3, %4 : vector<1024x256xf32>
    %6 = arith.addf %2, %5 : vector<1024x256xf32>
    %c0_4 = arith.constant 0 : index
    %c0_5 = arith.constant 0 : index
    %7 = vector.load %arg3[%c0_4, %c0_5] : memref<1024x256xf32, #tpu.memory_space<vmem>>, vector<1024x256xf32>
    tpu.vector_store %arg3[%c0_4, %c0_5], %6 {strides = array<i32>} : memref<1024x256xf32, #tpu.memory_space<vmem>>, vector<1024x256xf32>,
    return
  }
  func.func @transform_0(%arg0: i32) -> (i32, i32) {
    %c0_i32 = arith.constant 0 : i32
    %c0_i32_0 = arith.constant 0 : i32
    %c0_i32_1 = arith.constant 0 : i32
    return %c0_i32, %c0_i32_0 : i32, i32
  }
  func.func @transform_1(%arg0: i32) -> (i32, i32) {
    %c0_i32 = arith.constant 0 : i32
    %c0_i32_0 = arith.constant 0 : i32
    %c0_i32_1 = arith.constant 0 : i32
    return %c0_i32, %c0_i32_0 : i32, i32
  }
  func.func @transform_2(%arg0: i32) -> (i32, i32) {
    %c0_i32 = arith.constant 0 : i32
    %c0_i32_0 = arith.constant 0 : i32
    %c0_i32_1 = arith.constant 0 : i32
    return %c0_i32, %c0_i32_0 : i32, i32
  }
}

module attributes {stable_mosaic.version = 11 : i64} {
  func.func @_byol_head_kernel(%arg0: i32, %arg1: memref<8x1024xf32, #tpu.memory_space<vmem>>, %arg2: memref<1024x256xf32, #tpu.memory_space<vmem>>, %arg3: memref<1x256xf32, #tpu.memory_space<vmem>>, %arg4: memref<1x256xf32, #tpu.memory_space<vmem>>, %arg5: memref<256x128xf32, #tpu.memory_space<vmem>>, %arg6: memref<1x128xf32, #tpu.memory_space<vmem>>, %arg7: memref<8x128xf32, #tpu.memory_space<vmem>>) attributes {dimension_semantics = [#tpu.dimension_semantics<arbitrary>], iteration_bounds = array<i64: 1>, scalar_prefetch = 0 : i64, scratch_operands = 0 : i64, tpu.core_type = #tpu.core_type<tc>, window_params = [{pipeline_mode = #tpu.pipeline_mode<synchronous>, transform_indices = @transform_0, window_bounds = array<i64: 8, 1024>}, {pipeline_mode = #tpu.pipeline_mode<synchronous>, transform_indices = @transform_1, window_bounds = array<i64: 1024, 256>}, {pipeline_mode = #tpu.pipeline_mode<synchronous>, transform_indices = @transform_2, window_bounds = array<i64: 1, 256>}, {pipeline_mode = #tpu.pipeline_mode<synchronous>, transform_indices = @transform_3, window_bounds = array<i64: 1, 256>}, {pipeline_mode = #tpu.pipeline_mode<synchronous>, transform_indices = @transform_4, window_bounds = array<i64: 256, 128>}, {pipeline_mode = #tpu.pipeline_mode<synchronous>, transform_indices = @transform_5, window_bounds = array<i64: 1, 128>}, {pipeline_mode = #tpu.pipeline_mode<synchronous>, transform_indices = @transform_6, window_bounds = array<i64: 8, 128>}]} {
    %c0 = arith.constant 0 : index
    %c0_0 = arith.constant 0 : index
    %0 = vector.load %arg1[%c0, %c0_0] : memref<8x1024xf32, #tpu.memory_space<vmem>>, vector<8x1024xf32>
    %c0_1 = arith.constant 0 : index
    %c0_2 = arith.constant 0 : index
    %1 = vector.load %arg2[%c0_1, %c0_2] : memref<1024x256xf32, #tpu.memory_space<vmem>>, vector<1024x256xf32>
    %cst = arith.constant dense<0.000000e+00> : vector<8x256xf32>
    %2 = tpu.matmul %0, %1, %cst {dimension_numbers = #tpu.dot_dimension_numbers<[1], [0], [0], [1], [0, 0, 1, 1], [], []>} : vector<8x1024xf32>, vector<1024x256xf32>, vector<8x256xf32> -> vector<8x256xf32>
    %cst_3 = arith.constant dense<0.000000e+00> : vector<256xf32>
    %3 = vector.multi_reduction <add>, %2, %cst_3 [0] : vector<8x256xf32> to vector<256xf32>
    %4 = vector.shape_cast %3 : vector<256xf32> to vector<1x256xf32>
    %cst_4 = arith.constant 8.000000e+00 : f32
    %5 = vector.broadcast %cst_4 : f32 to vector<1x256xf32>
    %6 = arith.divf %4, %5 : vector<1x256xf32>
    %7 = vector.broadcast %6 : vector<1x256xf32> to vector<8x256xf32>
    %8 = arith.subf %2, %7 : vector<8x256xf32>
    %9 = arith.mulf %8, %8 : vector<8x256xf32>
    %cst_5 = arith.constant dense<0.000000e+00> : vector<256xf32>
    %10 = vector.multi_reduction <add>, %9, %cst_5 [0] : vector<8x256xf32> to vector<256xf32>
    %11 = vector.shape_cast %10 : vector<256xf32> to vector<1x256xf32>
    %cst_6 = arith.constant 8.000000e+00 : f32
    %12 = vector.broadcast %cst_6 : f32 to vector<1x256xf32>
    %13 = arith.divf %11, %12 : vector<1x256xf32>
    %14 = vector.broadcast %6 : vector<1x256xf32> to vector<8x256xf32>
    %15 = arith.subf %2, %14 : vector<8x256xf32>
    %cst_7 = arith.constant 9.99999974E-6 : f32
    %16 = vector.broadcast %cst_7 : f32 to vector<1x256xf32>
    %17 = arith.addf %13, %16 : vector<1x256xf32>
    %18 = math.rsqrt %17 : vector<1x256xf32>
    %19 = vector.broadcast %18 : vector<1x256xf32> to vector<8x256xf32>
    %20 = arith.mulf %15, %19 : vector<8x256xf32>
    %c0_8 = arith.constant 0 : index
    %c0_9 = arith.constant 0 : index
    %21 = vector.load %arg3[%c0_8, %c0_9] : memref<1x256xf32, #tpu.memory_space<vmem>>, vector<1x256xf32>
    %22 = vector.broadcast %21 : vector<1x256xf32> to vector<8x256xf32>
    %23 = arith.mulf %20, %22 : vector<8x256xf32>
    %c0_10 = arith.constant 0 : index
    %c0_11 = arith.constant 0 : index
    %24 = vector.load %arg4[%c0_10, %c0_11] : memref<1x256xf32, #tpu.memory_space<vmem>>, vector<1x256xf32>
    %25 = vector.broadcast %24 : vector<1x256xf32> to vector<8x256xf32>
    %26 = arith.addf %23, %25 : vector<8x256xf32>
    %cst_12 = arith.constant 0.000000e+00 : f32
    %27 = vector.broadcast %cst_12 : f32 to vector<8x256xf32>
    %28 = arith.maximumf %26, %27 : vector<8x256xf32>
    %c0_13 = arith.constant 0 : index
    %c0_14 = arith.constant 0 : index
    %29 = vector.load %arg5[%c0_13, %c0_14] : memref<256x128xf32, #tpu.memory_space<vmem>>, vector<256x128xf32>
    %cst_15 = arith.constant dense<0.000000e+00> : vector<8x128xf32>
    %30 = tpu.matmul %28, %29, %cst_15 {dimension_numbers = #tpu.dot_dimension_numbers<[1], [0], [0], [1], [0, 0, 1, 1], [], []>} : vector<8x256xf32>, vector<256x128xf32>, vector<8x128xf32> -> vector<8x128xf32>
    %c0_16 = arith.constant 0 : index
    %c0_17 = arith.constant 0 : index
    %31 = vector.load %arg6[%c0_16, %c0_17] : memref<1x128xf32, #tpu.memory_space<vmem>>, vector<1x128xf32>
    %32 = vector.broadcast %31 : vector<1x128xf32> to vector<8x128xf32>
    %33 = arith.addf %30, %32 : vector<8x128xf32>
    %c0_18 = arith.constant 0 : index
    %c0_19 = arith.constant 0 : index
    %34 = vector.load %arg7[%c0_18, %c0_19] : memref<8x128xf32, #tpu.memory_space<vmem>>, vector<8x128xf32>
    tpu.vector_store %arg7[%c0_18, %c0_19], %33 {strides = array<i32>} : memref<8x128xf32, #tpu.memory_space<vmem>>, vector<8x128xf32>,
    return
  }
  func.func @transform_0(%arg0: i32) -> (i32, i32) {
    %c0_i32 = arith.constant 0 : i32
    %c0_i32_0 = arith.constant 0 : i32
    %c0_i32_1 = arith.constant 0 : i32
    return %c0_i32, %c0_i32_0 : i32, i32
  }
  func.func @transform_1(%arg0: i32) -> (i32, i32) {
    %c0_i32 = arith.constant 0 : i32
    %c0_i32_0 = arith.constant 0 : i32
    %c0_i32_1 = arith.constant 0 : i32
    return %c0_i32, %c0_i32_0 : i32, i32
  }
  func.func @transform_2(%arg0: i32) -> (i32, i32) {
    %c0_i32 = arith.constant 0 : i32
    %c0_i32_0 = arith.constant 0 : i32
    %c0_i32_1 = arith.constant 0 : i32
    return %c0_i32, %c0_i32_0 : i32, i32
  }
  func.func @transform_3(%arg0: i32) -> (i32, i32) {
    %c0_i32 = arith.constant 0 : i32
    %c0_i32_0 = arith.constant 0 : i32
    %c0_i32_1 = arith.constant 0 : i32
    return %c0_i32, %c0_i32_0 : i32, i32
  }
  func.func @transform_4(%arg0: i32) -> (i32, i32) {
    %c0_i32 = arith.constant 0 : i32
    %c0_i32_0 = arith.constant 0 : i32
    %c0_i32_1 = arith.constant 0 : i32
    return %c0_i32, %c0_i32_0 : i32, i32
  }
  func.func @transform_5(%arg0: i32) -> (i32, i32) {
    %c0_i32 = arith.constant 0 : i32
    %c0_i32_0 = arith.constant 0 : i32
    %c0_i32_1 = arith.constant 0 : i32
    return %c0_i32, %c0_i32_0 : i32, i32
  }
  func.func @transform_6(%arg0: i32) -> (i32, i32) {
    %c0_i32 = arith.constant 0 : i32
    %c0_i32_0 = arith.constant 0 : i32
    %c0_i32_1 = arith.constant 0 : i32
    return %c0_i32, %c0_i32_0 : i32, i32
  }
}

</mosaic_0001>

<llo_original>
// kernel: byol_forward.17
$region0: #{byol_forward.17}
  #allocation0 [shape = 'u32[]', space=smem, size = 0x4, offset = 0x4, fixed_abs, tag = 'smem constant byte address 0x4 - core index']
  #allocation1 [shape = 'u32[144,128]{1,0:T(1,128)}', space=vmem, size = 0x12000, scoped, tag = 'internal scratch']
  %s0 = inlined_call_operand.hbm [shape: f32[1,256], index: 0, kind: input, shape index: {}]
  %s1 = inlined_call_operand.vmem [shape: f32[1,256], index: 1, kind: input, shape index: {}]
  %s2 = inlined_call_operand.vmem [shape: f32[1,256], index: 2, kind: output, shape index: {}]
  %s3 = sld [smem:[#allocation0]]
  $region22: #{byol_forward.17} parent=0
    _
  %s5 = ssub.s32 1, %s3
  %s6 = scalar_select 0, %s5, %s3
  $region1: #{byol_forward.17} parent=0
    #allocation2 [shape = 'u8[1024]{0}', space=vmem, size = 0x400, scoped, tag = 'input window, operand 0, single buffered']
    #allocation3 [shape = 's32[1]{0}', space=sflag, size = 0x4, scoped, tag = 'scoped memory for byol_forward.17']
    %7 = vsyncpa [#allocation3], 0
    // Predicated region
    $region2: #{byol_forward.17} parent=1 // pred_check
      _
    $region3: #{byol_forward.17} parent=1 // pred_check_branch
      %9 = sbr.rel (0) target = $region5
    $region4: #{byol_forward.17} parent=1 // pred_region
      %s11 = ssub.s32 32, 32
      %12 = vsyncadd [#allocation3], %s11
      %s14 = sshll.u32 [#allocation2], 4
      %s15 = int_to_ptr.vmem [resolvable:$true] %s14
      %17 = dma.hbm_to_vmem [thread:$0]  %s0, 32, %s15, [#allocation3]
    $region5: #{byol_forward.17} parent=1 // pred_fallthru
      _
    // Predicated region
    $region6: #{byol_forward.17} parent=1 // pred_check
      _
    $region7: #{byol_forward.17} parent=1 // pred_check_branch
      %19 = sbr.rel (0) target = $region9
    $region8: #{byol_forward.17} parent=1 // pred_region
      _
    $region9: #{byol_forward.17} parent=1 // pred_fallthru
      _
    // Predicated region
    $region10: #{byol_forward.17} parent=1 // pred_check
      _
    $region11: #{byol_forward.17} parent=1 // pred_check_branch
      %21 = sbr.rel (0) target = $region13
    $region12: #{byol_forward.17} parent=1 // pred_region
      %22 = dma.done [#allocation3], 32
    $region13: #{byol_forward.17} parent=1 // pred_fallthru
      _
    %v23 = vld [vmem:[#allocation2] sm:$0x3]
    %v24 = vmul.f32 %v23, 0.9
    %v25 = vld [vmem:[%s1] sm:$0x3]
    %v26 = vmul.f32 %v25, 0.1
    %v27 = vadd.f32 %v24, %v26
    %v28 = vlaneseq
    %vm29 = vcmp.ge.s32.totalorder %v28, 0
    %vm30 = vcmp.lt.s32.totalorder %v28, 256
    %vm31 = vmand %vm29, %vm30
    %32 = vst.msk [vmem:[%s2] sm:$0x3] %vm31, %v27
    // Predicated region
    $region14: #{byol_forward.17} parent=1 // pred_check
      _
    $region15: #{byol_forward.17} parent=1 // pred_check_branch
      %34 = sbr.rel (0) target = $region17
    $region16: #{byol_forward.17} parent=1 // pred_region
      _
    $region17: #{byol_forward.17} parent=1 // pred_fallthru
      _
    // Predicated region
    $region18: #{byol_forward.17} parent=1 // pred_check
      _
    $region19: #{byol_forward.17} parent=1 // pred_check_branch
      %36 = sbr.rel (0) target = $region21
    $region20: #{byol_forward.17} parent=1 // pred_region
      _
    $region21: #{byol_forward.17} parent=1 // pred_fallthru
      _
    %37 = vsyncpa [#allocation3], 1

// kernel: byol_forward.24
$region0: #{byol_forward.24}
  #allocation0 [shape = 'u32[]', space=smem, size = 0x4, offset = 0x4, fixed_abs, tag = 'smem constant byte address 0x4 - core index']
  #allocation1 [shape = 'u32[144,128]{1,0:T(1,128)}', space=vmem, size = 0x12000, scoped, tag = 'internal scratch']
  %s0 = inlined_call_operand.vmem [shape: f32[1,128], index: 0, kind: input, shape index: {}]
  %s1 = inlined_call_operand.vmem [shape: f32[1,128], index: 1, kind: input, shape index: {}]
  %s2 = inlined_call_operand.vmem [shape: f32[1,128], index: 2, kind: output, shape index: {}]
  %s3 = sld [smem:[#allocation0]]
  $region18: #{byol_forward.24} parent=0
    _
  %s5 = ssub.s32 1, %s3
  %s6 = scalar_select 0, %s5, %s3
  // Predicated region
  $region2: #{byol_forward.24} parent=0 // pred_check
    _
  $region3: #{byol_forward.24} parent=0 // pred_check_branch
    %8 = sbr.rel (0) target = $region5
  $region4: #{byol_forward.24} parent=0 // pred_region
    _
  $region5: #{byol_forward.24} parent=0 // pred_fallthru
    _
  // Predicated region
  $region6: #{byol_forward.24} parent=0 // pred_check
    _
  $region7: #{byol_forward.24} parent=0 // pred_check_branch
    %10 = sbr.rel (0) target = $region9
  $region8: #{byol_forward.24} parent=0 // pred_region
    _
  $region9: #{byol_forward.24} parent=0 // pred_fallthru
    _
  %v11 = vld [vmem:[%s0] sm:$0x1]
  %v12 = vmul.f32 %v11, 0.9
  %v13 = vld [vmem:[%s1] sm:$0x1]
  %v14 = vmul.f32 %v13, 0.1
  %v15 = vadd.f32 %v12, %v14
  %16 = vst [vmem:[%s2] sm:$0x1] %v15
  // Predicated region
  $region10: #{byol_forward.24} parent=0 // pred_check
    _
  $region11: #{byol_forward.24} parent=0 // pred_check_branch
    %18 = sbr.rel (0) target = $region13
  $region12: #{byol_forward.24} parent=0 // pred_region
    _
  $region13: #{byol_forward.24} parent=0 // pred_fallthru
    _
  // Predicated region
  $region14: #{byol_forward.24} parent=0 // pred_check
    _
  $region15: #{byol_forward.24} parent=0 // pred_check_branch
    %20 = sbr.rel (0) target = $region17
  $region16: #{byol_forward.24} parent=0 // pred_region
    _
  $region17: #{byol_forward.24} parent=0 // pred_fallthru
    _

// kernel: byol_forward.16
$region0: #{byol_forward.16}
  #allocation0 [shape = 'u32[]', space=smem, size = 0x4, offset = 0x4, fixed_abs, tag = 'smem constant byte address 0x4 - core index']
  #allocation1 [shape = 'u32[144,128]{1,0:T(1,128)}', space=vmem, size = 0x12000, scoped, tag = 'internal scratch']
  %s0 = inlined_call_operand.hbm [shape: f32[1,128], index: 0, kind: input, shape index: {}]
  %s1 = inlined_call_operand.vmem [shape: f32[1,128], index: 1, kind: input, shape index: {}]
  %s2 = inlined_call_operand.vmem [shape: f32[1,128], index: 2, kind: output, shape index: {}]
  %s3 = sld [smem:[#allocation0]]
  $region22: #{byol_forward.16} parent=0
    _
  %s5 = ssub.s32 1, %s3
  %s6 = scalar_select 0, %s5, %s3
  $region1: #{byol_forward.16} parent=0
    #allocation2 [shape = 'u8[512]{0}', space=vmem, size = 0x400, scoped, tag = 'input window, operand 0, single buffered']
    #allocation3 [shape = 's32[1]{0}', space=sflag, size = 0x4, scoped, tag = 'scoped memory for byol_forward.16']
    %7 = vsyncpa [#allocation3], 0
    // Predicated region
    $region2: #{byol_forward.16} parent=1 // pred_check
      _
    $region3: #{byol_forward.16} parent=1 // pred_check_branch
      %9 = sbr.rel (0) target = $region5
    $region4: #{byol_forward.16} parent=1 // pred_region
      %s11 = ssub.s32 16, 16
      %12 = vsyncadd [#allocation3], %s11
      %s14 = sshll.u32 [#allocation2], 4
      %s15 = int_to_ptr.vmem [resolvable:$true] %s14
      %17 = dma.hbm_to_vmem [thread:$0]  %s0, 16, %s15, [#allocation3]
    $region5: #{byol_forward.16} parent=1 // pred_fallthru
      _
    // Predicated region
    $region6: #{byol_forward.16} parent=1 // pred_check
      _
    $region7: #{byol_forward.16} parent=1 // pred_check_branch
      %19 = sbr.rel (0) target = $region9
    $region8: #{byol_forward.16} parent=1 // pred_region
      _
    $region9: #{byol_forward.16} parent=1 // pred_fallthru
      _
    // Predicated region
    $region10: #{byol_forward.16} parent=1 // pred_check
      _
    $region11: #{byol_forward.16} parent=1 // pred_check_branch
      %21 = sbr.rel (0) target = $region13
    $region12: #{byol_forward.16} parent=1 // pred_region
      %22 = dma.done [#allocation3], 16
    $region13: #{byol_forward.16} parent=1 // pred_fallthru
      _
    %v23 = vld [vmem:[#allocation2] sm:$0x1]
    %v24 = vmul.f32 %v23, 0.9
    %v25 = vld [vmem:[%s1] sm:$0x1]
    %v26 = vmul.f32 %v25, 0.1
    %v27 = vadd.f32 %v24, %v26
    %28 = vst [vmem:[%s2] sm:$0x1] %v27
    // Predicated region
    $region14: #{byol_forward.16} parent=1 // pred_check
      _
    $region15: #{byol_forward.16} parent=1 // pred_check_branch
      %30 = sbr.rel (0) target = $region17
    $region16: #{byol_forward.16} parent=1 // pred_region
      _
    $region17: #{byol_forward.16} parent=1 // pred_fallthru
      _
    // Predicated region
    $region18: #{byol_forward.16} parent=1 // pred_check
      _
    $region19: #{byol_forward.16} parent=1 // pred_check_branch
      %32 = sbr.rel (0) target = $region21
    $region20: #{byol_forward.16} parent=1 // pred_region
      _
    $region21: #{byol_forward.16} parent=1 // pred_fallthru
      _
    %33 = vsyncpa [#allocation3], 1

// kernel: byol_forward.25
$region0: #{byol_forward.25}
  #allocation0 [shape = 'u32[]', space=smem, size = 0x4, offset = 0x4, fixed_abs, tag = 'smem constant byte address 0x4 - core index']
  #allocation1 [shape = 'u32[144,128]{1,0:T(1,128)}', space=vmem, size = 0x12000, scoped, tag = 'internal scratch']
  %s0 = inlined_call_operand.vmem [shape: f32[1,256], index: 0, kind: input, shape index: {}]
  %s1 = inlined_call_operand.vmem [shape: f32[1,256], index: 1, kind: input, shape index: {}]
  %s2 = inlined_call_operand.vmem [shape: f32[1,256], index: 2, kind: output, shape index: {}]
  %s3 = sld [smem:[#allocation0]]
  $region18: #{byol_forward.25} parent=0
    _
  %s5 = ssub.s32 1, %s3
  %s6 = scalar_select 0, %s5, %s3
  // Predicated region
  $region2: #{byol_forward.25} parent=0 // pred_check
    _
  $region3: #{byol_forward.25} parent=0 // pred_check_branch
    %8 = sbr.rel (0) target = $region5
  $region4: #{byol_forward.25} parent=0 // pred_region
    _
  $region5: #{byol_forward.25} parent=0 // pred_fallthru
    _
  // Predicated region
  $region6: #{byol_forward.25} parent=0 // pred_check
    _
  $region7: #{byol_forward.25} parent=0 // pred_check_branch
    %10 = sbr.rel (0) target = $region9
  $region8: #{byol_forward.25} parent=0 // pred_region
    _
  $region9: #{byol_forward.25} parent=0 // pred_fallthru
    _
  %v11 = vld [vmem:[%s0] sm:$0x3]
  %v12 = vmul.f32 %v11, 0.9
  %v13 = vld [vmem:[%s1] sm:$0x3]
  %v14 = vmul.f32 %v13, 0.1
  %v15 = vadd.f32 %v12, %v14
  %v16 = vlaneseq
  %vm17 = vcmp.ge.s32.totalorder %v16, 0
  %vm18 = vcmp.lt.s32.totalorder %v16, 256
  %vm19 = vmand %vm17, %vm18
  %20 = vst.msk [vmem:[%s2] sm:$0x3] %vm19, %v15
  // Predicated region
  $region10: #{byol_forward.25} parent=0 // pred_check
    _
  $region11: #{byol_forward.25} parent=0 // pred_check_branch
    %22 = sbr.rel (0) target = $region13
  $region12: #{byol_forward.25} parent=0 // pred_region
    _
  $region13: #{byol_forward.25} parent=0 // pred_fallthru
    _
  // Predicated region
  $region14: #{byol_forward.25} parent=0 // pred_check
    _
  $region15: #{byol_forward.25} parent=0 // pred_check_branch
    %24 = sbr.rel (0) target = $region17
  $region16: #{byol_forward.25} parent=0 // pred_region
    _
  $region17: #{byol_forward.25} parent=0 // pred_fallthru
    _

// kernel: byol_forward.22
$region0: #{byol_forward.22}
  #allocation0 [shape = 'u32[]', space=smem, size = 0x4, offset = 0x4, fixed_abs, tag = 'smem constant byte address 0x4 - core index']
  #allocation1 [shape = 'u32[144,128]{1,0:T(1,128)}', space=vmem, size = 0x12000, scoped, tag = 'internal scratch']
  %s0 = inlined_call_operand.vmem [shape: f32[8,128], index: 0, kind: input, shape index: {}]
  %s1 = inlined_call_operand.vmem [shape: f32[128,256], index: 1, kind: input, shape index: {}]
  %s2 = inlined_call_operand.vmem [shape: f32[1,256], index: 2, kind: input, shape index: {}]
  %s3 = inlined_call_operand.vmem [shape: f32[1,256], index: 3, kind: input, shape index: {}]
  %s4 = inlined_call_operand.vmem [shape: f32[256,128], index: 4, kind: input, shape index: {}]
  %s5 = inlined_call_operand.vmem [shape: f32[1,128], index: 5, kind: input, shape index: {}]
  %s6 = inlined_call_operand.hbm [shape: f32[8,128], index: 6, kind: output, shape index: {}]
  %s7 = sld [smem:[#allocation0]]
  $region34: #{byol_forward.22} parent=0
    _
  %s9 = ssub.s32 1, %s7
  %s10 = scalar_select 0, %s9, %s7
  $region1: #{byol_forward.22} parent=0
    #allocation2 [shape = 'u8[4096]{0}', space=vmem, size = 0x1000, scoped, tag = 'output window, operand 0, single buffered']
    #allocation3 [shape = 's32[1]{0}', space=sflag, size = 0x4, scoped, tag = 'scoped memory for byol_forward.22']
    %11 = vsyncpa [#allocation3], 0
    // Predicated region
    $region2: #{byol_forward.22} parent=1 // pred_check
      _
    $region3: #{byol_forward.22} parent=1 // pred_check_branch
      %13 = sbr.rel (0) target = $region5
    $region4: #{byol_forward.22} parent=1 // pred_region
      _
    $region5: #{byol_forward.22} parent=1 // pred_fallthru
      _
    // Predicated region
    $region6: #{byol_forward.22} parent=1 // pred_check
      _
    $region7: #{byol_forward.22} parent=1 // pred_check_branch
      %15 = sbr.rel (0) target = $region9
    $region8: #{byol_forward.22} parent=1 // pred_region
      _
    $region9: #{byol_forward.22} parent=1 // pred_fallthru
      _
    // Predicated region
    $region10: #{byol_forward.22} parent=1 // pred_check
      _
    $region11: #{byol_forward.22} parent=1 // pred_check_branch
      %17 = sbr.rel (0) target = $region13
    $region12: #{byol_forward.22} parent=1 // pred_region
      _
    $region13: #{byol_forward.22} parent=1 // pred_fallthru
      _
    // Predicated region
    $region14: #{byol_forward.22} parent=1 // pred_check
      _
    $region15: #{byol_forward.22} parent=1 // pred_check_branch
      %19 = sbr.rel (0) target = $region17
    $region16: #{byol_forward.22} parent=1 // pred_region
      _
    $region17: #{byol_forward.22} parent=1 // pred_fallthru
      _
    // Predicated region
    $region18: #{byol_forward.22} parent=1 // pred_check
      _
    $region19: #{byol_forward.22} parent=1 // pred_check_branch
      %21 = sbr.rel (0) target = $region21
    $region20: #{byol_forward.22} parent=1 // pred_region
      _
    $region21: #{byol_forward.22} parent=1 // pred_fallthru
      _
    // Predicated region
    $region22: #{byol_forward.22} parent=1 // pred_check
      _
    $region23: #{byol_forward.22} parent=1 // pred_check_branch
      %23 = sbr.rel (0) target = $region25
    $region24: #{byol_forward.22} parent=1 // pred_region
      _
    $region25: #{byol_forward.22} parent=1 // pred_fallthru
      _
    %v24 = vld [vmem:[%s0] sm:$0xff]
    %v25 = vld [vmem:[%s1] sm:$0xff]
    %v26 = vld [vmem:[%s1 + $0x8] sm:$0xff]
    %v27 = vld [vmem:[%s1 + $0x10] sm:$0xff]
    %v28 = vld [vmem:[%s1 + $0x18] sm:$0xff]
    %v29 = vld [vmem:[%s1 + $0x20] sm:$0xff]
    %v30 = vld [vmem:[%s1 + $0x28] sm:$0xff]
    %v31 = vld [vmem:[%s1 + $0x30] sm:$0xff]
    %v32 = vld [vmem:[%s1 + $0x38] sm:$0xff]
    %v33 = vld [vmem:[%s1 + $0x40] sm:$0xff]
    %v34 = vld [vmem:[%s1 + $0x48] sm:$0xff]
    %v35 = vld [vmem:[%s1 + $0x50] sm:$0xff]
    %v36 = vld [vmem:[%s1 + $0x58] sm:$0xff]
    %v37 = vld [vmem:[%s1 + $0x60] sm:$0xff]
    %v38 = vld [vmem:[%s1 + $0x68] sm:$0xff]
    %v39 = vld [vmem:[%s1 + $0x70] sm:$0xff]
    %v40 = vld [vmem:[%s1 + $0x78] sm:$0xff]
    %v41 = vld [vmem:[%s1 + $0x80] sm:$0xff]
    %v42 = vld [vmem:[%s1 + $0x88] sm:$0xff]
    %v43 = vld [vmem:[%s1 + $0x90] sm:$0xff]
    %v44 = vld [vmem:[%s1 + $0x98] sm:$0xff]
    %v45 = vld [vmem:[%s1 + $0xa0] sm:$0xff]
    %v46 = vld [vmem:[%s1 + $0xa8] sm:$0xff]
    %v47 = vld [vmem:[%s1 + $0xb0] sm:$0xff]
    %v48 = vld [vmem:[%s1 + $0xb8] sm:$0xff]
    %v49 = vld [vmem:[%s1 + $0xc0] sm:$0xff]
    %v50 = vld [vmem:[%s1 + $0xc8] sm:$0xff]
    %v51 = vld [vmem:[%s1 + $0xd0] sm:$0xff]
    %v52 = vld [vmem:[%s1 + $0xd8] sm:$0xff]
    %v53 = vld [vmem:[%s1 + $0xe0] sm:$0xff]
    %v54 = vld [vmem:[%s1 + $0xe8] sm:$0xff]
    %v55 = vld [vmem:[%s1 + $0xf0] sm:$0xff]
    %v56 = vld [vmem:[%s1 + $0xf8] sm:$0xff]
    %57 = vmatprep.subr.mxu0 %v26
    %58 = vmatpush1.msra.mxu0 %v25
    %59 = vmatprep.subr.mxu0 %v28
    %60 = vmatpush1.msra.mxu0 %v27
    %61 = vmatprep.subr.mxu0 %v30
    %62 = vmatpush1.msra.mxu0 %v29
    %63 = vmatprep.subr.mxu0 %v32
    %64 = vmatpush1.msra.mxu0 %v31
    %65 = vmatprep.subr.mxu0 %v34
    %66 = vmatpush1.msra.mxu0 %v33
    %67 = vmatprep.subr.mxu0 %v36
    %68 = vmatpush1.msra.mxu0 %v35
    %69 = vmatprep.subr.mxu0 %v38
    %70 = vmatpush1.msra.mxu0 %v37
    %71 = vmatprep.subr.mxu0 %v40
    %72 = vmatpush1.msra.mxu0 %v39
    %73 = vmatprep.subr.mxu0 %v42
    %74 = vmatpush1.msra.mxu0 %v41
    %75 = vmatprep.subr.mxu0 %v44
    %76 = vmatpush1.msra.mxu0 %v43
    %77 = vmatprep.subr.mxu0 %v46
    %78 = vmatpush1.msra.mxu0 %v45
    %79 = vmatprep.subr.mxu0 %v48
    %80 = vmatpush1.msra.mxu0 %v47
    %81 = vmatprep.subr.mxu0 %v50
    %82 = vmatpush1.msra.mxu0 %v49
    %83 = vmatprep.subr.mxu0 %v52
    %84 = vmatpush1.msra.mxu0 %v51
    %85 = vmatprep.subr.mxu0 %v54
    %86 = vmatpush1.msra.mxu0 %v53
    %87 = vmatprep.subr.mxu0 %v56
    %88 = vmatpush1.msra.mxu0 %v55
    %89 = vmatprep.subr.mxu0 0.0
    %90 = vmatpush1.msra.mxu0 0.0
    %91 = vmatprep.subr.mxu0 0.0
    %92 = vmatpush1.msra.mxu0 0.0
    %93 = vmatprep.subr.mxu0 0.0
    %94 = vmatpush1.msra.mxu0 0.0
    %95 = vmatprep.subr.mxu0 0.0
    %96 = vmatpush1.msra.mxu0 0.0
    %97 = vmatprep.subr.mxu0 0.0
    %98 = vmatpush1.msra.mxu0 0.0
    %99 = vmatprep.subr.mxu0 0.0
    %100 = vmatpush1.msra.mxu0 0.0
    %101 = vmatprep.subr.mxu0 0.0
    %102 = vmatpush1.msra.mxu0 0.0
    %103 = vmatprep.subr.mxu0 0.0
    %104 = vmatpush1.msra.mxu0 0.0
    %105 = vmatprep.subr.mxu0 0.0
    %106 = vmatpush1.msra.mxu0 0.0
    %107 = vmatprep.subr.mxu0 0.0
    %108 = vmatpush1.msra.mxu0 0.0
    %109 = vmatprep.subr.mxu0 0.0
    %110 = vmatpush1.msra.mxu0 0.0
    %111 = vmatprep.subr.mxu0 0.0
    %112 = vmatpush1.msra.mxu0 0.0
    %113 = vmatprep.subr.mxu0 0.0
    %114 = vmatpush1.msra.mxu0 0.0
    %115 = vmatprep.subr.mxu0 0.0
    %116 = vmatpush1.msra.mxu0 0.0
    %117 = vmatprep.subr.mxu0 0.0
    %118 = vmatpush1.msra.mxu0 0.0
    %119 = vmatprep.subr.mxu0 0.0
    %120 = vmatpush1.msra.mxu0 0.0
    %121 = vmatprep.mubr.f32.mxu0 0.0
    %122 = vmatmul.mubr.f32.gmra.mrb[0].mxu0 %v24
    %v123 = vpop.f32.mrb[0].mxu0
    %v124 = vadd.f32 0.0, %v123
    %v125 = vpop.f32.mrb[0].mxu0
    %v126 = vadd.f32 0.0, %v125
    %127 = vdwg.mxu0
    %v128 = vrot.slane %v124, 4
    %v129 = vadd.f32 %v124, %v128
    %v130 = vrot.slane %v129, 2
    %v131 = vadd.f32 %v129, %v130
    %v132 = vrot.slane %v131, 1
    %v133 = vadd.f32 %v131, %v132
    %v134 = vrot.slane %v126, 4
    %v135 = vadd.f32 %v126, %v134
    %v136 = vrot.slane %v135, 2
    %v137 = vadd.f32 %v135, %v136
    %v138 = vrot.slane %v137, 1
    %v139 = vadd.f32 %v137, %v138
    %v140 = vrcp.pop 8.0
    %v141 = vmul.f32 %v133, %v140
    %v142 = vmul.f32 %v139, %v140
    %v143 = vsub.f32 %v124, %v141
    %v144 = vsub.f32 %v126, %v142
    %v145 = vmul.f32 %v143, %v143
    %v146 = vmul.f32 %v144, %v144
    %v147 = vrot.slane %v145, 4
    %v148 = vadd.f32 %v145, %v147
    %v149 = vrot.slane %v148, 2
    %v150 = vadd.f32 %v148, %v149
    %v151 = vrot.slane %v150, 1
    %v152 = vadd.f32 %v150, %v151
    %v153 = vrot.slane %v146, 4
    %v154 = vadd.f32 %v146, %v153
    %v155 = vrot.slane %v154, 2
    %v156 = vadd.f32 %v154, %v155
    %v157 = vrot.slane %v156, 1
    %v158 = vadd.f32 %v156, %v157
    %v159 = vmul.f32 %v152, %v140
    %v160 = vmul.f32 %v158, %v140
    %v161 = vadd.f32 %v159, 1e-05
    %v162 = vadd.f32 %v160, 1e-05
    %v163 = vrsqrt.pop %v161
    %v164 = vrsqrt.pop %v162
    %v165 = vmul.f32 %v143, %v163
    %v166 = vmul.f32 %v144, %v164
    %v167 = vld [vmem:[%s2] sm:$0x3]
    %v169 = vlaneseq
    %v170 = vshrl.u32 %v169, 7
    %v171 = vsub.s32 0, %v170
    %v172 = vrot.slane %v167, %v171
    %v173 = vlaneseq
    %v174 = vshrl.u32 %v173, 7
    %v175 = vsub.s32 1, %v174
    %v176 = vrot.slane %v167, %v175
    %v179 = vmul.f32 %v165, %v172
    %v180 = vmul.f32 %v166, %v176
    %v181 = vld [vmem:[%s3] sm:$0x3]
    %v183 = vlaneseq
    %v184 = vshrl.u32 %v183, 7
    %v185 = vsub.s32 0, %v184
    %v186 = vrot.slane %v181, %v185
    %v187 = vlaneseq
    %v188 = vshrl.u32 %v187, 7
    %v189 = vsub.s32 1, %v188
    %v190 = vrot.slane %v181, %v189
    %v193 = vadd.f32 %v179, %v186
    %v194 = vadd.f32 %v180, %v190
    %v195 = vmax.f32 %v193, 0.0
    %v196 = vmax.f32 %v194, 0.0
    %v197 = vld [vmem:[%s4] sm:$0xff]
    %v198 = vld [vmem:[%s4 + $0x8] sm:$0xff]
    %v199 = vld [vmem:[%s4 + $0x10] sm:$0xff]
    %v200 = vld [vmem:[%s4 + $0x18] sm:$0xff]
    %v201 = vld [vmem:[%s4 + $0x20] sm:$0xff]
    %v202 = vld [vmem:[%s4 + $0x28] sm:$0xff]
    %v203 = vld [vmem:[%s4 + $0x30] sm:$0xff]
    %v204 = vld [vmem:[%s4 + $0x38] sm:$0xff]
    %v205 = vld [vmem:[%s4 + $0x40] sm:$0xff]
    %v206 = vld [vmem:[%s4 + $0x48] sm:$0xff]
    %v207 = vld [vmem:[%s4 + $0x50] sm:$0xff]
    %v208 = vld [vmem:[%s4 + $0x58] sm:$0xff]
    %v209 = vld [vmem:[%s4 + $0x60] sm:$0xff]
    %v210 = vld [vmem:[%s4 + $0x68] sm:$0xff]
    %v211 = vld [vmem:[%s4 + $0x70] sm:$0xff]
    %v212 = vld [vmem:[%s4 + $0x78] sm:$0xff]
    %v213 = vld [vmem:[%s4 + $0x80] sm:$0xff]
    %v214 = vld [vmem:[%s4 + $0x88] sm:$0xff]
    %v215 = vld [vmem:[%s4 + $0x90] sm:$0xff]
    %v216 = vld [vmem:[%s4 + $0x98] sm:$0xff]
    %v217 = vld [vmem:[%s4 + $0xa0] sm:$0xff]
    %v218 = vld [vmem:[%s4 + $0xa8] sm:$0xff]
    %v219 = vld [vmem:[%s4 + $0xb0] sm:$0xff]
    %v220 = vld [vmem:[%s4 + $0xb8] sm:$0xff]
    %v221 = vld [vmem:[%s4 + $0xc0] sm:$0xff]
    %v222 = vld [vmem:[%s4 + $0xc8] sm:$0xff]
    %v223 = vld [vmem:[%s4 + $0xd0] sm:$0xff]
    %v224 = vld [vmem:[%s4 + $0xd8] sm:$0xff]
    %v225 = vld [vmem:[%s4 + $0xe0] sm:$0xff]
    %v226 = vld [vmem:[%s4 + $0xe8] sm:$0xff]
    %v227 = vld [vmem:[%s4 + $0xf0] sm:$0xff]
    %v228 = vld [vmem:[%s4 + $0xf8] sm:$0xff]
    %v229 = vld [vmem:[%s5] sm:$0x1]
    %v231 = vlaneseq
    %v232 = vshrl.u32 %v231, 7
    %v233 = vsub.s32 0, %v232
    %v234 = vrot.slane %v229, %v233
    %236 = vmatprep.subr.mxu0 0.0
    %237 = vmatpush1.msra.mxu0 %v197
    %238 = vmatprep.subr.mxu0 0.0
    %239 = vmatpush1.msra.mxu0 %v198
    %240 = vmatprep.subr.mxu0 0.0
    %241 = vmatpush1.msra.mxu0 %v199
    %242 = vmatprep.subr.mxu0 0.0
    %243 = vmatpush1.msra.mxu0 %v200
    %244 = vmatprep.subr.mxu0 0.0
    %245 = vmatpush1.msra.mxu0 %v201
    %246 = vmatprep.subr.mxu0 0.0
    %247 = vmatpush1.msra.mxu0 %v202
    %248 = vmatprep.subr.mxu0 0.0
    %249 = vmatpush1.msra.mxu0 %v203
    %250 = vmatprep.subr.mxu0 0.0
    %251 = vmatpush1.msra.mxu0 %v204
    %252 = vmatprep.subr.mxu0 0.0
    %253 = vmatpush1.msra.mxu0 %v205
    %254 = vmatprep.subr.mxu0 0.0
    %255 = vmatpush1.msra.mxu0 %v206
    %256 = vmatprep.subr.mxu0 0.0
    %257 = vmatpush1.msra.mxu0 %v207
    %258 = vmatprep.subr.mxu0 0.0
    %259 = vmatpush1.msra.mxu0 %v208
    %260 = vmatprep.subr.mxu0 0.0
    %261 = vmatpush1.msra.mxu0 %v209
    %262 = vmatprep.subr.mxu0 0.0
    %263 = vmatpush1.msra.mxu0 %v210
    %264 = vmatprep.subr.mxu0 0.0
    %265 = vmatpush1.msra.mxu0 %v211
    %266 = vmatprep.subr.mxu0 0.0
    %267 = vmatpush1.msra.mxu0 %v212
    %268 = vmatprep.subr.mxu0 0.0
    %269 = vmatpush1.msra.mxu0 %v213
    %270 = vmatprep.subr.mxu0 0.0
    %271 = vmatpush1.msra.mxu0 %v214
    %272 = vmatprep.subr.mxu0 0.0
    %273 = vmatpush1.msra.mxu0 %v215
    %274 = vmatprep.subr.mxu0 0.0
    %275 = vmatpush1.msra.mxu0 %v216
    %276 = vmatprep.subr.mxu0 0.0
    %277 = vmatpush1.msra.mxu0 %v217
    %278 = vmatprep.subr.mxu0 0.0
    %279 = vmatpush1.msra.mxu0 %v218
    %280 = vmatprep.subr.mxu0 0.0
    %281 = vmatpush1.msra.mxu0 %v219
    %282 = vmatprep.subr.mxu0 0.0
    %283 = vmatpush1.msra.mxu0 %v220
    %284 = vmatprep.subr.mxu0 0.0
    %285 = vmatpush1.msra.mxu0 %v221
    %286 = vmatprep.subr.mxu0 0.0
    %287 = vmatpush1.msra.mxu0 %v222
    %288 = vmatprep.subr.mxu0 0.0
    %289 = vmatpush1.msra.mxu0 %v223
    %290 = vmatprep.subr.mxu0 0.0
    %291 = vmatpush1.msra.mxu0 %v224
    %292 = vmatprep.subr.mxu0 0.0
    %293 = vmatpush1.msra.mxu0 %v225
    %294 = vmatprep.subr.mxu0 0.0
    %295 = vmatpush1.msra.mxu0 %v226
    %296 = vmatprep.subr.mxu0 0.0
    %297 = vmatpush1.msra.mxu0 %v227
    %298 = vmatprep.subr.mxu0 0.0
    %299 = vmatpush1.msra.mxu0 %v228
    %300 = vmatprep.mubr.f32.mxu0 %v196
    %301 = vmatmul.mubr.f32.gmra.mrb[0].mxu0 %v195
    %v302 = vpop.f32.mrb[0].mxu0
    %v303 = vadd.f32 %v234, %v302
    %v304 = vpop.f32.mrb[0].mxu0
    %305 = vdwg.mxu0
    %306 = vst [vmem:[#allocation2] sm:$0xff] %v303
    // Predicated region
    $region26: #{byol_forward.22} parent=1 // pred_check
      _
    $region27: #{byol_forward.22} parent=1 // pred_check_branch
      %308 = sbr.rel (0) target = $region29
    $region28: #{byol_forward.22} parent=1 // pred_region
      %s310 = ssub.s32 128, 128
      %311 = vsyncadd [#allocation3], %s310
      %s313 = sshll.u32 [#allocation2], 4
      %s314 = int_to_ptr.vmem [resolvable:$true] %s313
      %316 = dma.vmem_to_hbm [thread:$0]  %s314, 128, %s6, [#allocation3]
    $region29: #{byol_forward.22} parent=1 // pred_fallthru
      _
    // Predicated region
    $region30: #{byol_forward.22} parent=1 // pred_check
      _
    $region31: #{byol_forward.22} parent=1 // pred_check_branch
      %318 = sbr.rel (0) target = $region33
    $region32: #{byol_forward.22} parent=1 // pred_region
      %319 = dma.done [#allocation3], 128
    $region33: #{byol_forward.22} parent=1 // pred_fallthru
      _
    %320 = vsyncpa [#allocation3], 1

// kernel: byol_forward.21
$region0: #{byol_forward.21}
  #allocation0 [shape = 'u32[]', space=smem, size = 0x4, offset = 0x4, fixed_abs, tag = 'smem constant byte address 0x4 - core index']
  #allocation1 [shape = 'u32[144,128]{1,0:T(1,128)}', space=vmem, size = 0x12000, scoped, tag = 'internal scratch']
  %s0 = inlined_call_operand.vmem [shape: f32[8,1024], index: 0, kind: input, shape index: {}]
  %s1 = inlined_call_operand.hbm [shape: f32[1024,256], index: 1, kind: input, shape index: {}]
  %s2 = inlined_call_operand.vmem [shape: f32[1,256], index: 2, kind: input, shape index: {}]
  %s3 = inlined_call_operand.vmem [shape: f32[1,256], index: 3, kind: input, shape index: {}]
  %s4 = inlined_call_operand.vmem [shape: f32[256,128], index: 4, kind: input, shape index: {}]
  %s5 = inlined_call_operand.vmem [shape: f32[1,128], index: 5, kind: input, shape index: {}]
  %s6 = inlined_call_operand.vmem [shape: f32[8,128], index: 6, kind: output, shape index: {}]
  %s7 = sld [smem:[#allocation0]]
  $region38: #{byol_forward.21} parent=0
    _
  %s9 = ssub.s32 1, %s7
  %s10 = scalar_select 0, %s9, %s7
  $region1: #{byol_forward.21} parent=0
    #allocation2 [shape = 'u8[1048576]{0}', space=vmem, size = 0x100000, scoped, tag = 'input window, operand 1, single buffered']
    #allocation3 [shape = 's32[1]{0}', space=sflag, size = 0x4, scoped, tag = 'scoped memory for byol_forward.21']
    %11 = vsyncpa [#allocation3], 0
    // Predicated region
    $region2: #{byol_forward.21} parent=1 // pred_check
      _
    $region3: #{byol_forward.21} parent=1 // pred_check_branch
      %13 = sbr.rel (0) target = $region5
    $region4: #{byol_forward.21} parent=1 // pred_region
      _
    $region5: #{byol_forward.21} parent=1 // pred_fallthru
      _
    // Predicated region
    $region6: #{byol_forward.21} parent=1 // pred_check
      _
    $region7: #{byol_forward.21} parent=1 // pred_check_branch
      %15 = sbr.rel (0) target = $region9
    $region8: #{byol_forward.21} parent=1 // pred_region
      %s17 = ssub.s32 32768, 32768
      %18 = vsyncadd [#allocation3], %s17
      %s19 = sshll.u32 [#allocation2], 4
      %s20 = int_to_ptr.vmem [resolvable:$true] %s19
      %25 = dma.hbm_to_vmem [thread:$0]  %s1, 32768, %s20, [#allocation3], 256, 256, 16
    $region9: #{byol_forward.21} parent=1 // pred_fallthru
      _
    // Predicated region
    $region10: #{byol_forward.21} parent=1 // pred_check
      _
    $region11: #{byol_forward.21} parent=1 // pred_check_branch
      %27 = sbr.rel (0) target = $region13
    $region12: #{byol_forward.21} parent=1 // pred_region
      _
    $region13: #{byol_forward.21} parent=1 // pred_fallthru
      _
    // Predicated region
    $region14: #{byol_forward.21} parent=1 // pred_check
      _
    $region15: #{byol_forward.21} parent=1 // pred_check_branch
      %29 = sbr.rel (0) target = $region17
    $region16: #{byol_forward.21} parent=1 // pred_region
      _
    $region17: #{byol_forward.21} parent=1 // pred_fallthru
      _
    // Predicated region
    $region18: #{byol_forward.21} parent=1 // pred_check
      _
    $region19: #{byol_forward.21} parent=1 // pred_check_branch
      %31 = sbr.rel (0) target = $region21
    $region20: #{byol_forward.21} parent=1 // pred_region
      _
    $region21: #{byol_forward.21} parent=1 // pred_fallthru
      _
    // Predicated region
    $region22: #{byol_forward.21} parent=1 // pred_check
      _
    $region23: #{byol_forward.21} parent=1 // pred_check_branch
      %33 = sbr.rel (0) target = $region25
    $region24: #{byol_forward.21} parent=1 // pred_region
      _
    $region25: #{byol_forward.21} parent=1 // pred_fallthru
      _
    // Predicated region
    $region26: #{byol_forward.21} parent=1 // pred_check
      _
    $region27: #{byol_forward.21} parent=1 // pred_check_branch
      %35 = sbr.rel (0) target = $region29
    $region28: #{byol_forward.21} parent=1 // pred_region
      %36 = dma.done [#allocation3], 32768
    $region29: #{byol_forward.21} parent=1 // pred_fallthru
      _
    %v37 = vld [vmem:[%s0] sm:$0xff]
    %v38 = vld [vmem:[%s0 + $0x8] sm:$0xff]
    %v39 = vld [vmem:[%s0 + $0x10] sm:$0xff]
    %v40 = vld [vmem:[%s0 + $0x18] sm:$0xff]
    %v41 = vld [vmem:[%s0 + $0x20] sm:$0xff]
    %v42 = vld [vmem:[%s0 + $0x28] sm:$0xff]
    %v43 = vld [vmem:[%s0 + $0x30] sm:$0xff]
    %v44 = vld [vmem:[%s0 + $0x38] sm:$0xff]
    %v45 = vld [vmem:[#allocation2] sm:$0xff]
    %v46 = vld [vmem:[#allocation2 + $0x8] sm:$0xff]
    %v47 = vld [vmem:[#allocation2 + $0x10] sm:$0xff]
    %v48 = vld [vmem:[#allocation2 + $0x18] sm:$0xff]
    %v49 = vld [vmem:[#allocation2 + $0x20] sm:$0xff]
    %v50 = vld [vmem:[#allocation2 + $0x28] sm:$0xff]
    %v51 = vld [vmem:[#allocation2 + $0x30] sm:$0xff]
    %v52 = vld [vmem:[#allocation2 + $0x38] sm:$0xff]
    %v53 = vld [vmem:[#allocation2 + $0x40] sm:$0xff]
    %v54 = vld [vmem:[#allocation2 + $0x48] sm:$0xff]
    %v55 = vld [vmem:[#allocation2 + $0x50] sm:$0xff]
    %v56 = vld [vmem:[#allocation2 + $0x58] sm:$0xff]
    %v57 = vld [vmem:[#allocation2 + $0x60] sm:$0xff]
    %v58 = vld [vmem:[#allocation2 + $0x68] sm:$0xff]
    %v59 = vld [vmem:[#allocation2 + $0x70] sm:$0xff]
    %v60 = vld [vmem:[#allocation2 + $0x78] sm:$0xff]
    %v61 = vld [vmem:[#allocation2 + $0x80] sm:$0xff]
    %v62 = vld [vmem:[#allocation2 + $0x88] sm:$0xff]
    %v63 = vld [vmem:[#allocation2 + $0x90] sm:$0xff]
    %v64 = vld [vmem:[#allocation2 + $0x98] sm:$0xff]
    %v65 = vld [vmem:[#allocation2 + $0xa0] sm:$0xff]
    %v66 = vld [vmem:[#allocation2 + $0xa8] sm:$0xff]
    %v67 = vld [vmem:[#allocation2 + $0xb0] sm:$0xff]
    %v68 = vld [vmem:[#allocation2 + $0xb8] sm:$0xff]
    %v69 = vld [vmem:[#allocation2 + $0xc0] sm:$0xff]
    %v70 = vld [vmem:[#allocation2 + $0xc8] sm:$0xff]
    %v71 = vld [vmem:[#allocation2 + $0xd0] sm:$0xff]
    %v72 = vld [vmem:[#allocation2 + $0xd8] sm:$0xff]
    %v73 = vld [vmem:[#allocation2 + $0xe0] sm:$0xff]
    %v74 = vld [vmem:[#allocation2 + $0xe8] sm:$0xff]
    %v75 = vld [vmem:[#allocation2 + $0xf0] sm:$0xff]
    %v76 = vld [vmem:[#allocation2 + $0xf8] sm:$0xff]
    %v77 = vld [vmem:[#allocation2 + $0x100] sm:$0xff]
    %v78 = vld [vmem:[#allocation2 + $0x108] sm:$0xff]
    %v79 = vld [vmem:[#allocation2 + $0x110] sm:$0xff]
    %v80 = vld [vmem:[#allocation2 + $0x118] sm:$0xff]
    %v81 = vld [vmem:[#allocation2 + $0x120] sm:$0xff]
    %v82 = vld [vmem:[#allocation2 + $0x128] sm:$0xff]
    %v83 = vld [vmem:[#allocation2 + $0x130] sm:$0xff]
    %v84 = vld [vmem:[#allocation2 + $0x138] sm:$0xff]
    %v85 = vld [vmem:[#allocation2 + $0x140] sm:$0xff]
    %v86 = vld [vmem:[#allocation2 + $0x148] sm:$0xff]
    %v87 = vld [vmem:[#allocation2 + $0x150] sm:$0xff]
    %v88 = vld [vmem:[#allocation2 + $0x158] sm:$0xff]
    %v89 = vld [vmem:[#allocation2 + $0x160] sm:$0xff]
    %v90 = vld [vmem:[#allocation2 + $0x168] sm:$0xff]
    %v91 = vld [vmem:[#allocation2 + $0x170] sm:$0xff]
    %v92 = vld [vmem:[#allocation2 + $0x178] sm:$0xff]
    %v93 = vld [vmem:[#allocation2 + $0x180] sm:$0xff]
    %v94 = vld [vmem:[#allocation2 + $0x188] sm:$0xff]
    %v95 = vld [vmem:[#allocation2 + $0x190] sm:$0xff]
    %v96 = vld [vmem:[#allocation2 + $0x198] sm:$0xff]
    %v97 = vld [vmem:[#allocation2 + $0x1a0] sm:$0xff]
    %v98 = vld [vmem:[#allocation2 + $0x1a8] sm:$0xff]
    %v99 = vld [vmem:[#allocation2 + $0x1b0] sm:$0xff]
    %v100 = vld [vmem:[#allocation2 + $0x1b8] sm:$0xff]
    %v101 = vld [vmem:[#allocation2 + $0x1c0] sm:$0xff]
    %v102 = vld [vmem:[#allocation2 + $0x1c8] sm:$0xff]
    %v103 = vld [vmem:[#allocation2 + $0x1d0] sm:$0xff]
    %v104 = vld [vmem:[#allocation2 + $0x1d8] sm:$0xff]
    %v105 = vld [vmem:[#allocation2 + $0x1e0] sm:$0xff]
    %v106 = vld [vmem:[#allocation2 + $0x1e8] sm:$0xff]
    %v107 = vld [vmem:[#allocation2 + $0x1f0] sm:$0xff]
    %v108 = vld [vmem:[#allocation2 + $0x1f8] sm:$0xff]
    %v109 = vld [vmem:[#allocation2 + $0x200] sm:$0xff]
    %v110 = vld [vmem:[#allocation2 + $0x208] sm:$0xff]
    %v111 = vld [vmem:[#allocation2 + $0x210] sm:$0xff]
    %v112 = vld [vmem:[#allocation2 + $0x218] sm:$0xff]
    %v113 = vld [vmem:[#allocation2 + $0x220] sm:$0xff]
    %v114 = vld [vmem:[#allocation2 + $0x228] sm:$0xff]
    %v115 = vld [vmem:[#allocation2 + $0x230] sm:$0xff]
    %v116 = vld [vmem:[#allocation2 + $0x238] sm:$0xff]
    %v117 = vld [vmem:[#allocation2 + $0x240] sm:$0xff]
    %v118 = vld [vmem:[#allocation2 + $0x248] sm:$0xff]
    %v119 = vld [vmem:[#allocation2 + $0x250] sm:$0xff]
    %v120 = vld [vmem:[#allocation2 + $0x258] sm:$0xff]
    %v121 = vld [vmem:[#allocation2 + $0x260] sm:$0xff]
    %v122 = vld [vmem:[#allocation2 + $0x268] sm:$0xff]
    %v123 = vld [vmem:[#allocation2 + $0x270] sm:$0xff]
    %v124 = vld [vmem:[#allocation2 + $0x278] sm:$0xff]
    %v125 = vld [vmem:[#allocation2 + $0x280] sm:$0xff]
    %v126 = vld [vmem:[#allocation2 + $0x288] sm:$0xff]
    %v127 = vld [vmem:[#allocation2 + $0x290] sm:$0xff]
    %v128 = vld [vmem:[#allocation2 + $0x298] sm:$0xff]
    %v129 = vld [vmem:[#allocation2 + $0x2a0] sm:$0xff]
    %v130 = vld [vmem:[#allocation2 + $0x2a8] sm:$0xff]
    %v131 = vld [vmem:[#allocation2 + $0x2b0] sm:$0xff]
    %v132 = vld [vmem:[#allocation2 + $0x2b8] sm:$0xff]
    %v133 = vld [vmem:[#allocation2 + $0x2c0] sm:$0xff]
    %v134 = vld [vmem:[#allocation2 + $0x2c8] sm:$0xff]
    %v135 = vld [vmem:[#allocation2 + $0x2d0] sm:$0xff]
    %v136 = vld [vmem:[#allocation2 + $0x2d8] sm:$0xff]
    %v137 = vld [vmem:[#allocation2 + $0x2e0] sm:$0xff]
    %v138 = vld [vmem:[#allocation2 + $0x2e8] sm:$0xff]
    %v139 = vld [vmem:[#allocation2 + $0x2f0] sm:$0xff]
    %v140 = vld [vmem:[#allocation2 + $0x2f8] sm:$0xff]
    %v141 = vld [vmem:[#allocation2 + $0x300] sm:$0xff]
    %v142 = vld [vmem:[#allocation2 + $0x308] sm:$0xff]
    %v143 = vld [vmem:[#allocation2 + $0x310] sm:$0xff]
    %v144 = vld [vmem:[#allocation2 + $0x318] sm:$0xff]
    %v145 = vld [vmem:[#allocation2 + $0x320] sm:$0xff]
    %v146 = vld [vmem:[#allocation2 + $0x328] sm:$0xff]
    %v147 = vld [vmem:[#allocation2 + $0x330] sm:$0xff]
    %v148 = vld [vmem:[#allocation2 + $0x338] sm:$0xff]
    %v149 = vld [vmem:[#allocation2 + $0x340] sm:$0xff]
    %v150 = vld [vmem:[#allocation2 + $0x348] sm:$0xff]
    %v151 = vld [vmem:[#allocation2 + $0x350] sm:$0xff]
    %v152 = vld [vmem:[#allocation2 + $0x358] sm:$0xff]
    %v153 = vld [vmem:[#allocation2 + $0x360] sm:$0xff]
    %v154 = vld [vmem:[#allocation2 + $0x368] sm:$0xff]
    %v155 = vld [vmem:[#allocation2 + $0x370] sm:$0xff]
    %v156 = vld [vmem:[#allocation2 + $0x378] sm:$0xff]
    %v157 = vld [vmem:[#allocation2 + $0x380] sm:$0xff]
    %v158 = vld [vmem:[#allocation2 + $0x388] sm:$0xff]
    %v159 = vld [vmem:[#allocation2 + $0x390] sm:$0xff]
    %v160 = vld [vmem:[#allocation2 + $0x398] sm:$0xff]
    %v161 = vld [vmem:[#allocation2 + $0x3a0] sm:$0xff]
    %v162 = vld [vmem:[#allocation2 + $0x3a8] sm:$0xff]
    %v163 = vld [vmem:[#allocation2 + $0x3b0] sm:$0xff]
    %v164 = vld [vmem:[#allocation2 + $0x3b8] sm:$0xff]
    %v165 = vld [vmem:[#allocation2 + $0x3c0] sm:$0xff]
    %v166 = vld [vmem:[#allocation2 + $0x3c8] sm:$0xff]
    %v167 = vld [vmem:[#allocation2 + $0x3d0] sm:$0xff]
    %v168 = vld [vmem:[#allocation2 + $0x3d8] sm:$0xff]
    %v169 = vld [vmem:[#allocation2 + $0x3e0] sm:$0xff]
    %v170 = vld [vmem:[#allocation2 + $0x3e8] sm:$0xff]
    %v171 = vld [vmem:[#allocation2 + $0x3f0] sm:$0xff]
    %v172 = vld [vmem:[#allocation2 + $0x3f8] sm:$0xff]
    %v173 = vld [vmem:[#allocation2 + $0x400] sm:$0xff]
    %v174 = vld [vmem:[#allocation2 + $0x408] sm:$0xff]
    %v175 = vld [vmem:[#allocation2 + $0x410] sm:$0xff]
    %v176 = vld [vmem:[#allocation2 + $0x418] sm:$0xff]
    %v177 = vld [vmem:[#allocation2 + $0x420] sm:$0xff]
    %v178 = vld [vmem:[#allocation2 + $0x428] sm:$0xff]
    %v179 = vld [vmem:[#allocation2 + $0x430] sm:$0xff]
    %v180 = vld [vmem:[#allocation2 + $0x438] sm:$0xff]
    %v181 = vld [vmem:[#allocation2 + $0x440] sm:$0xff]
    %v182 = vld [vmem:[#allocation2 + $0x448] sm:$0xff]
    %v183 = vld [vmem:[#allocation2 + $0x450] sm:$0xff]
    %v184 = vld [vmem:[#allocation2 + $0x458] sm:$0xff]
    %v185 = vld [vmem:[#allocation2 + $0x460] sm:$0xff]
    %v186 = vld [vmem:[#allocation2 + $0x468] sm:$0xff]
    %v187 = vld [vmem:[#allocation2 + $0x470] sm:$0xff]
    %v188 = vld [vmem:[#allocation2 + $0x478] sm:$0xff]
    %v189 = vld [vmem:[#allocation2 + $0x480] sm:$0xff]
    %v190 = vld [vmem:[#allocation2 + $0x488] sm:$0xff]
    %v191 = vld [vmem:[#allocation2 + $0x490] sm:$0xff]
    %v192 = vld [vmem:[#allocation2 + $0x498] sm:$0xff]
    %v193 = vld [vmem:[#allocation2 + $0x4a0] sm:$0xff]
    %v194 = vld [vmem:[#allocation2 + $0x4a8] sm:$0xff]
    %v195 = vld [vmem:[#allocation2 + $0x4b0] sm:$0xff]
    %v196 = vld [vmem:[#allocation2 + $0x4b8] sm:$0xff]
    %v197 = vld [vmem:[#allocation2 + $0x4c0] sm:$0xff]
    %v198 = vld [vmem:[#allocation2 + $0x4c8] sm:$0xff]
    %v199 = vld [vmem:[#allocation2 + $0x4d0] sm:$0xff]
    %v200 = vld [vmem:[#allocation2 + $0x4d8] sm:$0xff]
    %v201 = vld [vmem:[#allocation2 + $0x4e0] sm:$0xff]
    %v202 = vld [vmem:[#allocation2 + $0x4e8] sm:$0xff]
    %v203 = vld [vmem:[#allocation2 + $0x4f0] sm:$0xff]
    %v204 = vld [vmem:[#allocation2 + $0x4f8] sm:$0xff]
    %v205 = vld [vmem:[#allocation2 + $0x500] sm:$0xff]
    %v206 = vld [vmem:[#allocation2 + $0x508] sm:$0xff]
    %v207 = vld [vmem:[#allocation2 + $0x510] sm:$0xff]
    %v208 = vld [vmem:[#allocation2 + $0x518] sm:$0xff]
    %v209 = vld [vmem:[#allocation2 + $0x520] sm:$0xff]
    %v210 = vld [vmem:[#allocation2 + $0x528] sm:$0xff]
    %v211 = vld [vmem:[#allocation2 + $0x530] sm:$0xff]
    %v212 = vld [vmem:[#allocation2 + $0x538] sm:$0xff]
    %v213 = vld [vmem:[#allocation2 + $0x540] sm:$0xff]
    %v214 = vld [vmem:[#allocation2 + $0x548] sm:$0xff]
    %v215 = vld [vmem:[#allocation2 + $0x550] sm:$0xff]
    %v216 = vld [vmem:[#allocation2 + $0x558] sm:$0xff]
    %v217 = vld [vmem:[#allocation2 + $0x560] sm:$0xff]
    %v218 = vld [vmem:[#allocation2 + $0x568] sm:$0xff]
    %v219 = vld [vmem:[#allocation2 + $0x570] sm:$0xff]
    %v220 = vld [vmem:[#allocation2 + $0x578] sm:$0xff]
    %v221 = vld [vmem:[#allocation2 + $0x580] sm:$0xff]
    %v222 = vld [vmem:[#allocation2 + $0x588] sm:$0xff]
    %v223 = vld [vmem:[#allocation2 + $0x590] sm:$0xff]
    %v224 = vld [vmem:[#allocation2 + $0x598] sm:$0xff]
    %v225 = vld [vmem:[#allocation2 + $0x5a0] sm:$0xff]
    %v226 = vld [vmem:[#allocation2 + $0x5a8] sm:$0xff]
    %v227 = vld [vmem:[#allocation2 + $0x5b0] sm:$0xff]
    %v228 = vld [vmem:[#allocation2 + $0x5b8] sm:$0xff]
    %v229 = vld [vmem:[#allocation2 + $0x5c0] sm:$0xff]
    %v230 = vld [vmem:[#allocation2 + $0x5c8] sm:$0xff]
    %v231 = vld [vmem:[#allocation2 + $0x5d0] sm:$0xff]
    %v232 = vld [vmem:[#allocation2 + $0x5d8] sm:$0xff]
    %v233 = vld [vmem:[#allocation2 + $0x5e0] sm:$0xff]
    %v234 = vld [vmem:[#allocation2 + $0x5e8] sm:$0xff]
    %v235 = vld [vmem:[#allocation2 + $0x5f0] sm:$0xff]
    %v236 = vld [vmem:[#allocation2 + $0x5f8] sm:$0xff]
    %v237 = vld [vmem:[#allocation2 + $0x600] sm:$0xff]
    %v238 = vld [vmem:[#allocation2 + $0x608] sm:$0xff]
    %v239 = vld [vmem:[#allocation2 + $0x610] sm:$0xff]
    %v240 = vld [vmem:[#allocation2 + $0x618] sm:$0xff]
    %v241 = vld [vmem:[#allocation2 + $0x620] sm:$0xff]
    %v242 = vld [vmem:[#allocation2 + $0x628] sm:$0xff]
    %v243 = vld [vmem:[#allocation2 + $0x630] sm:$0xff]
    %v244 = vld [vmem:[#allocation2 + $0x638] sm:$0xff]
    %v245 = vld [vmem:[#allocation2 + $0x640] sm:$0xff]
    %v246 = vld [vmem:[#allocation2 + $0x648] sm:$0xff]
    %v247 = vld [vmem:[#allocation2 + $0x650] sm:$0xff]
    %v248 = vld [vmem:[#allocation2 + $0x658] sm:$0xff]
    %v249 = vld [vmem:[#allocation2 + $0x660] sm:$0xff]
    %v250 = vld [vmem:[#allocation2 + $0x668] sm:$0xff]
    %v251 = vld [vmem:[#allocation2 + $0x670] sm:$0xff]
    %v252 = vld [vmem:[#allocation2 + $0x678] sm:$0xff]
    %v253 = vld [vmem:[#allocation2 + $0x680] sm:$0xff]
    %v254 = vld [vmem:[#allocation2 + $0x688] sm:$0xff]
    %v255 = vld [vmem:[#allocation2 + $0x690] sm:$0xff]
    %v256 = vld [vmem:[#allocation2 + $0x698] sm:$0xff]
    %v257 = vld [vmem:[#allocation2 + $0x6a0] sm:$0xff]
    %v258 = vld [vmem:[#allocation2 + $0x6a8] sm:$0xff]
    %v259 = vld [vmem:[#allocation2 + $0x6b0] sm:$0xff]
    %v260 = vld [vmem:[#allocation2 + $0x6b8] sm:$0xff]
    %v261 = vld [vmem:[#allocation2 + $0x6c0] sm:$0xff]
    %v262 = vld [vmem:[#allocation2 + $0x6c8] sm:$0xff]
    %v263 = vld [vmem:[#allocation2 + $0x6d0] sm:$0xff]
    %v264 = vld [vmem:[#allocation2 + $0x6d8] sm:$0xff]
    %v265 = vld [vmem:[#allocation2 + $0x6e0] sm:$0xff]
    %v266 = vld [vmem:[#allocation2 + $0x6e8] sm:$0xff]
    %v267 = vld [vmem:[#allocation2 + $0x6f0] sm:$0xff]
    %v268 = vld [vmem:[#allocation2 + $0x6f8] sm:$0xff]
    %v269 = vld [vmem:[#allocation2 + $0x700] sm:$0xff]
    %v270 = vld [vmem:[#allocation2 + $0x708] sm:$0xff]
    %v271 = vld [vmem:[#allocation2 + $0x710] sm:$0xff]
    %v272 = vld [vmem:[#allocation2 + $0x718] sm:$0xff]
    %v273 = vld [vmem:[#allocation2 + $0x720] sm:$0xff]
    %v274 = vld [vmem:[#allocation2 + $0x728] sm:$0xff]
    %v275 = vld [vmem:[#allocation2 + $0x730] sm:$0xff]
    %v276 = vld [vmem:[#allocation2 + $0x738] sm:$0xff]
    %v277 = vld [vmem:[#allocation2 + $0x740] sm:$0xff]
    %v278 = vld [vmem:[#allocation2 + $0x748] sm:$0xff]
    %v279 = vld [vmem:[#allocation2 + $0x750] sm:$0xff]
    %v280 = vld [vmem:[#allocation2 + $0x758] sm:$0xff]
    %v281 = vld [vmem:[#allocation2 + $0x760] sm:$0xff]
    %v282 = vld [vmem:[#allocation2 + $0x768] sm:$0xff]
    %v283 = vld [vmem:[#allocation2 + $0x770] sm:$0xff]
    %v284 = vld [vmem:[#allocation2 + $0x778] sm:$0xff]
    %v285 = vld [vmem:[#allocation2 + $0x780] sm:$0xff]
    %v286 = vld [vmem:[#allocation2 + $0x788] sm:$0xff]
    %v287 = vld [vmem:[#allocation2 + $0x790] sm:$0xff]
    %v288 = vld [vmem:[#allocation2 + $0x798] sm:$0xff]
    %v289 = vld [vmem:[#allocation2 + $0x7a0] sm:$0xff]
    %v290 = vld [vmem:[#allocation2 + $0x7a8] sm:$0xff]
    %v291 = vld [vmem:[#allocation2 + $0x7b0] sm:$0xff]
    %v292 = vld [vmem:[#allocation2 + $0x7b8] sm:$0xff]
    %v293 = vld [vmem:[#allocation2 + $0x7c0] sm:$0xff]
    %v294 = vld [vmem:[#allocation2 + $0x7c8] sm:$0xff]
    %v295 = vld [vmem:[#allocation2 + $0x7d0] sm:$0xff]
    %v296 = vld [vmem:[#allocation2 + $0x7d8] sm:$0xff]
    %v297 = vld [vmem:[#allocation2 + $0x7e0] sm:$0xff]
    %v298 = vld [vmem:[#allocation2 + $0x7e8] sm:$0xff]
    %v299 = vld [vmem:[#allocation2 + $0x7f0] sm:$0xff]
    %v300 = vld [vmem:[#allocation2 + $0x7f8] sm:$0xff]
    %301 = vmatprep.subr.mxu0 %v46
    %302 = vmatpush1.msra.mxu0 %v45
    %303 = vmatprep.subr.mxu0 %v48
    %304 = vmatpush1.msra.mxu0 %v47
    %305 = vmatprep.subr.mxu0 %v50
    %306 = vmatpush1.msra.mxu0 %v49
    %307 = vmatprep.subr.mxu0 %v52
    %308 = vmatpush1.msra.mxu0 %v51
    %309 = vmatprep.subr.mxu0 %v54
    %310 = vmatpush1.msra.mxu0 %v53
    %311 = vmatprep.subr.mxu0 %v56
    %312 = vmatpush1.msra.mxu0 %v55
    %313 = vmatprep.subr.mxu0 %v58
    %314 = vmatpush1.msra.mxu0 %v57
    %315 = vmatprep.subr.mxu0 %v60
    %316 = vmatpush1.msra.mxu0 %v59
    %317 = vmatprep.subr.mxu0 %v62
    %318 = vmatpush1.msra.mxu0 %v61
    %319 = vmatprep.subr.mxu0 %v64
    %320 = vmatpush1.msra.mxu0 %v63
    %321 = vmatprep.subr.mxu0 %v66
    %322 = vmatpush1.msra.mxu0 %v65
    %323 = vmatprep.subr.mxu0 %v68
    %324 = vmatpush1.msra.mxu0 %v67
    %325 = vmatprep.subr.mxu0 %v70
    %326 = vmatpush1.msra.mxu0 %v69
    %327 = vmatprep.subr.mxu0 %v72
    %328 = vmatpush1.msra.mxu0 %v71
    %329 = vmatprep.subr.mxu0 %v74
    %330 = vmatpush1.msra.mxu0 %v73
    %331 = vmatprep.subr.mxu0 %v76
    %332 = vmatpush1.msra.mxu0 %v75
    %333 = vmatprep.subr.mxu0 %v78
    %334 = vmatpush1.msra.mxu0 %v77
    %335 = vmatprep.subr.mxu0 %v80
    %336 = vmatpush1.msra.mxu0 %v79
    %337 = vmatprep.subr.mxu0 %v82
    %338 = vmatpush1.msra.mxu0 %v81
    %339 = vmatprep.subr.mxu0 %v84
    %340 = vmatpush1.msra.mxu0 %v83
    %341 = vmatprep.subr.mxu0 %v86
    %342 = vmatpush1.msra.mxu0 %v85
    %343 = vmatprep.subr.mxu0 %v88
    %344 = vmatpush1.msra.mxu0 %v87
    %345 = vmatprep.subr.mxu0 %v90
    %346 = vmatpush1.msra.mxu0 %v89
    %347 = vmatprep.subr.mxu0 %v92
    %348 = vmatpush1.msra.mxu0 %v91
    %349 = vmatprep.subr.mxu0 %v94
    %350 = vmatpush1.msra.mxu0 %v93
    %351 = vmatprep.subr.mxu0 %v96
    %352 = vmatpush1.msra.mxu0 %v95
    %353 = vmatprep.subr.mxu0 %v98
    %354 = vmatpush1.msra.mxu0 %v97
    %355 = vmatprep.subr.mxu0 %v100
    %356 = vmatpush1.msra.mxu0 %v99
    %357 = vmatprep.subr.mxu0 %v102
    %358 = vmatpush1.msra.mxu0 %v101
    %359 = vmatprep.subr.mxu0 %v104
    %360 = vmatpush1.msra.mxu0 %v103
    %361 = vmatprep.subr.mxu0 %v106
    %362 = vmatpush1.msra.mxu0 %v105
    %363 = vmatprep.subr.mxu0 %v108
    %364 = vmatpush1.msra.mxu0 %v107
    %365 = vmatprep.mubr.f32.mxu0 %v38
    %366 = vmatmul.mubr.f32.gmra.mrb[0].mxu0 %v37
    %v367 = vpop.f32.mrb[0].mxu0
    %v368 = vadd.f32 0.0, %v367
    %v369 = vpop.f32.mrb[0].mxu0
    %v370 = vadd.f32 0.0, %v369
    %371 = vdwg.mxu0
    %372 = vmatprep.subr.mxu0 %v110
    %373 = vmatpush1.msra.mxu0 %v109
    %374 = vmatprep.subr.mxu0 %v112
    %375 = vmatpush1.msra.mxu0 %v111
    %376 = vmatprep.subr.mxu0 %v114
    %377 = vmatpush1.msra.mxu0 %v113
    %378 = vmatprep.subr.mxu0 %v116
    %379 = vmatpush1.msra.mxu0 %v115
    %380 = vmatprep.subr.mxu0 %v118
    %381 = vmatpush1.msra.mxu0 %v117
    %382 = vmatprep.subr.mxu0 %v120
    %383 = vmatpush1.msra.mxu0 %v119
    %384 = vmatprep.subr.mxu0 %v122
    %385 = vmatpush1.msra.mxu0 %v121
    %386 = vmatprep.subr.mxu0 %v124
    %387 = vmatpush1.msra.mxu0 %v123
    %388 = vmatprep.subr.mxu0 %v126
    %389 = vmatpush1.msra.mxu0 %v125
    %390 = vmatprep.subr.mxu0 %v128
    %391 = vmatpush1.msra.mxu0 %v127
    %392 = vmatprep.subr.mxu0 %v130
    %393 = vmatpush1.msra.mxu0 %v129
    %394 = vmatprep.subr.mxu0 %v132
    %395 = vmatpush1.msra.mxu0 %v131
    %396 = vmatprep.subr.mxu0 %v134
    %397 = vmatpush1.msra.mxu0 %v133
    %398 = vmatprep.subr.mxu0 %v136
    %399 = vmatpush1.msra.mxu0 %v135
    %400 = vmatprep.subr.mxu0 %v138
    %401 = vmatpush1.msra.mxu0 %v137
    %402 = vmatprep.subr.mxu0 %v140
    %403 = vmatpush1.msra.mxu0 %v139
    %404 = vmatprep.subr.mxu0 %v142
    %405 = vmatpush1.msra.mxu0 %v141
    %406 = vmatprep.subr.mxu0 %v144
    %407 = vmatpush1.msra.mxu0 %v143
    %408 = vmatprep.subr.mxu0 %v146
    %409 = vmatpush1.msra.mxu0 %v145
    %410 = vmatprep.subr.mxu0 %v148
    %411 = vmatpush1.msra.mxu0 %v147
    %412 = vmatprep.subr.mxu0 %v150
    %413 = vmatpush1.msra.mxu0 %v149
    %414 = vmatprep.subr.mxu0 %v152
    %415 = vmatpush1.msra.mxu0 %v151
    %416 = vmatprep.subr.mxu0 %v154
    %417 = vmatpush1.msra.mxu0 %v153
    %418 = vmatprep.subr.mxu0 %v156
    %419 = vmatpush1.msra.mxu0 %v155
    %420 = vmatprep.subr.mxu0 %v158
    %421 = vmatpush1.msra.mxu0 %v157
    %422 = vmatprep.subr.mxu0 %v160
    %423 = vmatpush1.msra.mxu0 %v159
    %424 = vmatprep.subr.mxu0 %v162
    %425 = vmatpush1.msra.mxu0 %v161
    %426 = vmatprep.subr.mxu0 %v164
    %427 = vmatpush1.msra.mxu0 %v163
    %428 = vmatprep.subr.mxu0 %v166
    %429 = vmatpush1.msra.mxu0 %v165
    %430 = vmatprep.subr.mxu0 %v168
    %431 = vmatpush1.msra.mxu0 %v167
    %432 = vmatprep.subr.mxu0 %v170
    %433 = vmatpush1.msra.mxu0 %v169
    %434 = vmatprep.subr.mxu0 %v172
    %435 = vmatpush1.msra.mxu0 %v171
    %436 = vmatprep.mubr.f32.mxu0 %v40
    %437 = vmatmul.mubr.f32.gmra.mrb[0].mxu0 %v39
    %v438 = vpop.f32.mrb[0].mxu0
    %v439 = vadd.f32 %v368, %v438
    %v440 = vpop.f32.mrb[0].mxu0
    %v441 = vadd.f32 %v370, %v440
    %442 = vdwg.mxu0
    %443 = vmatprep.subr.mxu0 %v174
    %444 = vmatpush1.msra.mxu0 %v173
    %445 = vmatprep.subr.mxu0 %v176
    %446 = vmatpush1.msra.mxu0 %v175
    %447 = vmatprep.subr.mxu0 %v178
    %448 = vmatpush1.msra.mxu0 %v177
    %449 = vmatprep.subr.mxu0 %v180
    %450 = vmatpush1.msra.mxu0 %v179
    %451 = vmatprep.subr.mxu0 %v182
    %452 = vmatpush1.msra.mxu0 %v181
    %453 = vmatprep.subr.mxu0 %v184
    %454 = vmatpush1.msra.mxu0 %v183
    %455 = vmatprep.subr.mxu0 %v186
    %456 = vmatpush1.msra.mxu0 %v185
    %457 = vmatprep.subr.mxu0 %v188
    %458 = vmatpush1.msra.mxu0 %v187
    %459 = vmatprep.subr.mxu0 %v190
    %460 = vmatpush1.msra.mxu0 %v189
    %461 = vmatprep.subr.mxu0 %v192
    %462 = vmatpush1.msra.mxu0 %v191
    %463 = vmatprep.subr.mxu0 %v194
    %464 = vmatpush1.msra.mxu0 %v193
    %465 = vmatprep.subr.mxu0 %v196
    %466 = vmatpush1.msra.mxu0 %v195
    %467 = vmatprep.subr.mxu0 %v198
    %468 = vmatpush1.msra.mxu0 %v197
    %469 = vmatprep.subr.mxu0 %v200
    %470 = vmatpush1.msra.mxu0 %v199
    %471 = vmatprep.subr.mxu0 %v202
    %472 = vmatpush1.msra.mxu0 %v201
    %473 = vmatprep.subr.mxu0 %v204
    %474 = vmatpush1.msra.mxu0 %v203
    %475 = vmatprep.subr.mxu0 %v206
    %476 = vmatpush1.msra.mxu0 %v205
    %477 = vmatprep.subr.mxu0 %v208
    %478 = vmatpush1.msra.mxu0 %v207
    %479 = vmatprep.subr.mxu0 %v210
    %480 = vmatpush1.msra.mxu0 %v209
    %481 = vmatprep.subr.mxu0 %v212
    %482 = vmatpush1.msra.mxu0 %v211
    %483 = vmatprep.subr.mxu0 %v214
    %484 = vmatpush1.msra.mxu0 %v213
    %485 = vmatprep.subr.mxu0 %v216
    %486 = vmatpush1.msra.mxu0 %v215
    %487 = vmatprep.subr.mxu0 %v218
    %488 = vmatpush1.msra.mxu0 %v217
    %489 = vmatprep.subr.mxu0 %v220
    %490 = vmatpush1.msra.mxu0 %v219
    %491 = vmatprep.subr.mxu0 %v222
    %492 = vmatpush1.msra.mxu0 %v221
    %493 = vmatprep.subr.mxu0 %v224
    %494 = vmatpush1.msra.mxu0 %v223
    %495 = vmatprep.subr.mxu0 %v226
    %496 = vmatpush1.msra.mxu0 %v225
    %497 = vmatprep.subr.mxu0 %v228
    %498 = vmatpush1.msra.mxu0 %v227
    %499 = vmatprep.subr.mxu0 %v230
    %500 = vmatpush1.msra.mxu0 %v229
    %501 = vmatprep.subr.mxu0 %v232
    %502 = vmatpush1.msra.mxu0 %v231
    %503 = vmatprep.subr.mxu0 %v234
    %504 = vmatpush1.msra.mxu0 %v233
    %505 = vmatprep.subr.mxu0 %v236
    %506 = vmatpush1.msra.mxu0 %v235
    %507 = vmatprep.mubr.f32.mxu0 %v42
    %508 = vmatmul.mubr.f32.gmra.mrb[0].mxu0 %v41
    %v509 = vpop.f32.mrb[0].mxu0
    %v510 = vadd.f32 %v439, %v509
    %v511 = vpop.f32.mrb[0].mxu0
    %v512 = vadd.f32 %v441, %v511
    %513 = vdwg.mxu0
    %514 = vmatprep.subr.mxu0 %v238
    %515 = vmatpush1.msra.mxu0 %v237
    %516 = vmatprep.subr.mxu0 %v240
    %517 = vmatpush1.msra.mxu0 %v239
    %518 = vmatprep.subr.mxu0 %v242
    %519 = vmatpush1.msra.mxu0 %v241
    %520 = vmatprep.subr.mxu0 %v244
    %521 = vmatpush1.msra.mxu0 %v243
    %522 = vmatprep.subr.mxu0 %v246
    %523 = vmatpush1.msra.mxu0 %v245
    %524 = vmatprep.subr.mxu0 %v248
    %525 = vmatpush1.msra.mxu0 %v247
    %526 = vmatprep.subr.mxu0 %v250
    %527 = vmatpush1.msra.mxu0 %v249
    %528 = vmatprep.subr.mxu0 %v252
    %529 = vmatpush1.msra.mxu0 %v251
    %530 = vmatprep.subr.mxu0 %v254
    %531 = vmatpush1.msra.mxu0 %v253
    %532 = vmatprep.subr.mxu0 %v256
    %533 = vmatpush1.msra.mxu0 %v255
    %534 = vmatprep.subr.mxu0 %v258
    %535 = vmatpush1.msra.mxu0 %v257
    %536 = vmatprep.subr.mxu0 %v260
    %537 = vmatpush1.msra.mxu0 %v259
    %538 = vmatprep.subr.mxu0 %v262
    %539 = vmatpush1.msra.mxu0 %v261
    %540 = vmatprep.subr.mxu0 %v264
    %541 = vmatpush1.msra.mxu0 %v263
    %542 = vmatprep.subr.mxu0 %v266
    %543 = vmatpush1.msra.mxu0 %v265
    %544 = vmatprep.subr.mxu0 %v268
    %545 = vmatpush1.msra.mxu0 %v267
    %546 = vmatprep.subr.mxu0 %v270
    %547 = vmatpush1.msra.mxu0 %v269
    %548 = vmatprep.subr.mxu0 %v272
    %549 = vmatpush1.msra.mxu0 %v271
    %550 = vmatprep.subr.mxu0 %v274
    %551 = vmatpush1.msra.mxu0 %v273
    %552 = vmatprep.subr.mxu0 %v276
    %553 = vmatpush1.msra.mxu0 %v275
    %554 = vmatprep.subr.mxu0 %v278
    %555 = vmatpush1.msra.mxu0 %v277
    %556 = vmatprep.subr.mxu0 %v280
    %557 = vmatpush1.msra.mxu0 %v279
    %558 = vmatprep.subr.mxu0 %v282
    %559 = vmatpush1.msra.mxu0 %v281
    %560 = vmatprep.subr.mxu0 %v284
    %561 = vmatpush1.msra.mxu0 %v283
    %562 = vmatprep.subr.mxu0 %v286
    %563 = vmatpush1.msra.mxu0 %v285
    %564 = vmatprep.subr.mxu0 %v288
    %565 = vmatpush1.msra.mxu0 %v287
    %566 = vmatprep.subr.mxu0 %v290
    %567 = vmatpush1.msra.mxu0 %v289
    %568 = vmatprep.subr.mxu0 %v292
    %569 = vmatpush1.msra.mxu0 %v291
    %570 = vmatprep.subr.mxu0 %v294
    %571 = vmatpush1.msra.mxu0 %v293
    %572 = vmatprep.subr.mxu0 %v296
    %573 = vmatpush1.msra.mxu0 %v295
    %574 = vmatprep.subr.mxu0 %v298
    %575 = vmatpush1.msra.mxu0 %v297
    %576 = vmatprep.subr.mxu0 %v300
    %577 = vmatpush1.msra.mxu0 %v299
    %578 = vmatprep.mubr.f32.mxu0 %v44
    %579 = vmatmul.mubr.f32.gmra.mrb[0].mxu0 %v43
    %v580 = vpop.f32.mrb[0].mxu0
    %v581 = vadd.f32 %v510, %v580
    %v582 = vpop.f32.mrb[0].mxu0
    %v583 = vadd.f32 %v512, %v582
    %584 = vdwg.mxu0
    %v585 = vrot.slane %v581, 4
    %v586 = vadd.f32 %v581, %v585
    %v587 = vrot.slane %v586, 2
    %v588 = vadd.f32 %v586, %v587
    %v589 = vrot.slane %v588, 1
    %v590 = vadd.f32 %v588, %v589
    %v591 = vrot.slane %v583, 4
    %v592 = vadd.f32 %v583, %v591
    %v593 = vrot.slane %v592, 2
    %v594 = vadd.f32 %v592, %v593
    %v595 = vrot.slane %v594, 1
    %v596 = vadd.f32 %v594, %v595
    %v597 = vrcp.pop 8.0
    %v598 = vmul.f32 %v590, %v597
    %v599 = vmul.f32 %v596, %v597
    %v600 = vsub.f32 %v581, %v598
    %v601 = vsub.f32 %v583, %v599
    %v602 = vmul.f32 %v600, %v600
    %v603 = vmul.f32 %v601, %v601
    %v604 = vrot.slane %v602, 4
    %v605 = vadd.f32 %v602, %v604
    %v606 = vrot.slane %v605, 2
    %v607 = vadd.f32 %v605, %v606
    %v608 = vrot.slane %v607, 1
    %v609 = vadd.f32 %v607, %v608
    %v610 = vrot.slane %v603, 4
    %v611 = vadd.f32 %v603, %v610
    %v612 = vrot.slane %v611, 2
    %v613 = vadd.f32 %v611, %v612
    %v614 = vrot.slane %v613, 1
    %v615 = vadd.f32 %v613, %v614
    %v616 = vmul.f32 %v609, %v597
    %v617 = vmul.f32 %v615, %v597
    %v618 = vadd.f32 %v616, 1e-05
    %v619 = vadd.f32 %v617, 1e-05
    %v620 = vrsqrt.pop %v618
    %v621 = vrsqrt.pop %v619
    %v622 = vmul.f32 %v600, %v620
    %v623 = vmul.f32 %v601, %v621
    %v624 = vld [vmem:[%s2] sm:$0x3]
    %v626 = vlaneseq
    %v627 = vshrl.u32 %v626, 7
    %v628 = vsub.s32 0, %v627
    %v629 = vrot.slane %v624, %v628
    %v630 = vlaneseq
    %v631 = vshrl.u32 %v630, 7
    %v632 = vsub.s32 1, %v631
    %v633 = vrot.slane %v624, %v632
    %v636 = vmul.f32 %v622, %v629
    %v637 = vmul.f32 %v623, %v633
    %v638 = vld [vmem:[%s3] sm:$0x3]
    %v640 = vlaneseq
    %v641 = vshrl.u32 %v640, 7
    %v642 = vsub.s32 0, %v641
    %v643 = vrot.slane %v638, %v642
    %v644 = vlaneseq
    %v645 = vshrl.u32 %v644, 7
    %v646 = vsub.s32 1, %v645
    %v647 = vrot.slane %v638, %v646
    %v650 = vadd.f32 %v636, %v643
    %v651 = vadd.f32 %v637, %v647
    %v652 = vmax.f32 %v650, 0.0
    %v653 = vmax.f32 %v651, 0.0
    %v654 = vld [vmem:[%s4] sm:$0xff]
    %v655 = vld [vmem:[%s4 + $0x8] sm:$0xff]
    %v656 = vld [vmem:[%s4 + $0x10] sm:$0xff]
    %v657 = vld [vmem:[%s4 + $0x18] sm:$0xff]
    %v658 = vld [vmem:[%s4 + $0x20] sm:$0xff]
    %v659 = vld [vmem:[%s4 + $0x28] sm:$0xff]
    %v660 = vld [vmem:[%s4 + $0x30] sm:$0xff]
    %v661 = vld [vmem:[%s4 + $0x38] sm:$0xff]
    %v662 = vld [vmem:[%s4 + $0x40] sm:$0xff]
    %v663 = vld [vmem:[%s4 + $0x48] sm:$0xff]
    %v664 = vld [vmem:[%s4 + $0x50] sm:$0xff]
    %v665 = vld [vmem:[%s4 + $0x58] sm:$0xff]
    %v666 = vld [vmem:[%s4 + $0x60] sm:$0xff]
    %v667 = vld [vmem:[%s4 + $0x68] sm:$0xff]
    %v668 = vld [vmem:[%s4 + $0x70] sm:$0xff]
    %v669 = vld [vmem:[%s4 + $0x78] sm:$0xff]
    %v670 = vld [vmem:[%s4 + $0x80] sm:$0xff]
    %v671 = vld [vmem:[%s4 + $0x88] sm:$0xff]
    %v672 = vld [vmem:[%s4 + $0x90] sm:$0xff]
    %v673 = vld [vmem:[%s4 + $0x98] sm:$0xff]
    %v674 = vld [vmem:[%s4 + $0xa0] sm:$0xff]
    %v675 = vld [vmem:[%s4 + $0xa8] sm:$0xff]
    %v676 = vld [vmem:[%s4 + $0xb0] sm:$0xff]
    %v677 = vld [vmem:[%s4 + $0xb8] sm:$0xff]
    %v678 = vld [vmem:[%s4 + $0xc0] sm:$0xff]
    %v679 = vld [vmem:[%s4 + $0xc8] sm:$0xff]
    %v680 = vld [vmem:[%s4 + $0xd0] sm:$0xff]
    %v681 = vld [vmem:[%s4 + $0xd8] sm:$0xff]
    %v682 = vld [vmem:[%s4 + $0xe0] sm:$0xff]
    %v683 = vld [vmem:[%s4 + $0xe8] sm:$0xff]
    %v684 = vld [vmem:[%s4 + $0xf0] sm:$0xff]
    %v685 = vld [vmem:[%s4 + $0xf8] sm:$0xff]
    %v686 = vld [vmem:[%s5] sm:$0x1]
    %v688 = vlaneseq
    %v689 = vshrl.u32 %v688, 7
    %v690 = vsub.s32 0, %v689
    %v691 = vrot.slane %v686, %v690
    %693 = vmatprep.subr.mxu0 0.0
    %694 = vmatpush1.msra.mxu0 %v654
    %695 = vmatprep.subr.mxu0 0.0
    %696 = vmatpush1.msra.mxu0 %v655
    %697 = vmatprep.subr.mxu0 0.0
    %698 = vmatpush1.msra.mxu0 %v656
    %699 = vmatprep.subr.mxu0 0.0
    %700 = vmatpush1.msra.mxu0 %v657
    %701 = vmatprep.subr.mxu0 0.0
    %702 = vmatpush1.msra.mxu0 %v658
    %703 = vmatprep.subr.mxu0 0.0
    %704 = vmatpush1.msra.mxu0 %v659
    %705 = vmatprep.subr.mxu0 0.0
    %706 = vmatpush1.msra.mxu0 %v660
    %707 = vmatprep.subr.mxu0 0.0
    %708 = vmatpush1.msra.mxu0 %v661
    %709 = vmatprep.subr.mxu0 0.0
    %710 = vmatpush1.msra.mxu0 %v662
    %711 = vmatprep.subr.mxu0 0.0
    %712 = vmatpush1.msra.mxu0 %v663
    %713 = vmatprep.subr.mxu0 0.0
    %714 = vmatpush1.msra.mxu0 %v664
    %715 = vmatprep.subr.mxu0 0.0
    %716 = vmatpush1.msra.mxu0 %v665
    %717 = vmatprep.subr.mxu0 0.0
    %718 = vmatpush1.msra.mxu0 %v666
    %719 = vmatprep.subr.mxu0 0.0
    %720 = vmatpush1.msra.mxu0 %v667
    %721 = vmatprep.subr.mxu0 0.0
    %722 = vmatpush1.msra.mxu0 %v668
    %723 = vmatprep.subr.mxu0 0.0
    %724 = vmatpush1.msra.mxu0 %v669
    %725 = vmatprep.subr.mxu0 0.0
    %726 = vmatpush1.msra.mxu0 %v670
    %727 = vmatprep.subr.mxu0 0.0
    %728 = vmatpush1.msra.mxu0 %v671
    %729 = vmatprep.subr.mxu0 0.0
    %730 = vmatpush1.msra.mxu0 %v672
    %731 = vmatprep.subr.mxu0 0.0
    %732 = vmatpush1.msra.mxu0 %v673
    %733 = vmatprep.subr.mxu0 0.0
    %734 = vmatpush1.msra.mxu0 %v674
    %735 = vmatprep.subr.mxu0 0.0
    %736 = vmatpush1.msra.mxu0 %v675
    %737 = vmatprep.subr.mxu0 0.0
    %738 = vmatpush1.msra.mxu0 %v676
    %739 = vmatprep.subr.mxu0 0.0
    %740 = vmatpush1.msra.mxu0 %v677
    %741 = vmatprep.subr.mxu0 0.0
    %742 = vmatpush1.msra.mxu0 %v678
    %743 = vmatprep.subr.mxu0 0.0
    %744 = vmatpush1.msra.mxu0 %v679
    %745 = vmatprep.subr.mxu0 0.0
    %746 = vmatpush1.msra.mxu0 %v680
    %747 = vmatprep.subr.mxu0 0.0
    %748 = vmatpush1.msra.mxu0 %v681
    %749 = vmatprep.subr.mxu0 0.0
    %750 = vmatpush1.msra.mxu0 %v682
    %751 = vmatprep.subr.mxu0 0.0
    %752 = vmatpush1.msra.mxu0 %v683
    %753 = vmatprep.subr.mxu0 0.0
    %754 = vmatpush1.msra.mxu0 %v684
    %755 = vmatprep.subr.mxu0 0.0
    %756 = vmatpush1.msra.mxu0 %v685
    %757 = vmatprep.mubr.f32.mxu0 %v653
    %758 = vmatmul.mubr.f32.gmra.mrb[0].mxu0 %v652
    %v759 = vpop.f32.mrb[0].mxu0
    %v760 = vadd.f32 %v691, %v759
    %v761 = vpop.f32.mrb[0].mxu0
    %762 = vdwg.mxu0
    %763 = vst [vmem:[%s6] sm:$0xff] %v760
    // Predicated region
    $region30: #{byol_forward.21} parent=1 // pred_check
      _
    $region31: #{byol_forward.21} parent=1 // pred_check_branch
      %765 = sbr.rel (0) target = $region33
    $region32: #{byol_forward.21} parent=1 // pred_region
      _
    $region33: #{byol_forward.21} parent=1 // pred_fallthru
      _
    // Predicated region
    $region34: #{byol_forward.21} parent=1 // pred_check
      _
    $region35: #{byol_forward.21} parent=1 // pred_check_branch
      %767 = sbr.rel (0) target = $region37
    $region36: #{byol_forward.21} parent=1 // pred_region
      _
    $region37: #{byol_forward.21} parent=1 // pred_fallthru
      _
    %768 = vsyncpa [#allocation3], 1

// kernel: byol_forward.20
$region0: #{byol_forward.20}
  #allocation0 [shape = 'u32[]', space=smem, size = 0x4, offset = 0x4, fixed_abs, tag = 'smem constant byte address 0x4 - core index']
  #allocation1 [shape = 'u32[144,128]{1,0:T(1,128)}', space=vmem, size = 0x12000, scoped, tag = 'internal scratch']
  %s0 = inlined_call_operand.vmem [shape: f32[256,128], index: 0, kind: input, shape index: {}]
  %s1 = inlined_call_operand.vmem [shape: f32[256,128], index: 1, kind: input, shape index: {}]
  %s2 = inlined_call_operand.vmem [shape: f32[256,128], index: 2, kind: output, shape index: {}]
  %s3 = sld [smem:[#allocation0]]
  $region18: #{byol_forward.20} parent=0
    _
  %s5 = ssub.s32 1, %s3
  %s6 = scalar_select 0, %s5, %s3
  // Predicated region
  $region2: #{byol_forward.20} parent=0 // pred_check
    _
  $region3: #{byol_forward.20} parent=0 // pred_check_branch
    %8 = sbr.rel (0) target = $region5
  $region4: #{byol_forward.20} parent=0 // pred_region
    _
  $region5: #{byol_forward.20} parent=0 // pred_fallthru
    _
  // Predicated region
  $region6: #{byol_forward.20} parent=0 // pred_check
    _
  $region7: #{byol_forward.20} parent=0 // pred_check_branch
    %10 = sbr.rel (0) target = $region9
  $region8: #{byol_forward.20} parent=0 // pred_region
    _
  $region9: #{byol_forward.20} parent=0 // pred_fallthru
    _
  %v11 = vld [vmem:[%s0] sm:$0xff]
  %v12 = vld [vmem:[%s0 + $0x8] sm:$0xff]
  %v13 = vld [vmem:[%s0 + $0x10] sm:$0xff]
  %v14 = vld [vmem:[%s0 + $0x18] sm:$0xff]
  %v15 = vld [vmem:[%s0 + $0x20] sm:$0xff]
  %v16 = vld [vmem:[%s0 + $0x28] sm:$0xff]
  %v17 = vld [vmem:[%s0 + $0x30] sm:$0xff]
  %v18 = vld [vmem:[%s0 + $0x38] sm:$0xff]
  %v19 = vld [vmem:[%s0 + $0x40] sm:$0xff]
  %v20 = vld [vmem:[%s0 + $0x48] sm:$0xff]
  %v21 = vld [vmem:[%s0 + $0x50] sm:$0xff]
  %v22 = vld [vmem:[%s0 + $0x58] sm:$0xff]
  %v23 = vld [vmem:[%s0 + $0x60] sm:$0xff]
  %v24 = vld [vmem:[%s0 + $0x68] sm:$0xff]
  %v25 = vld [vmem:[%s0 + $0x70] sm:$0xff]
  %v26 = vld [vmem:[%s0 + $0x78] sm:$0xff]
  %v27 = vld [vmem:[%s0 + $0x80] sm:$0xff]
  %v28 = vld [vmem:[%s0 + $0x88] sm:$0xff]
  %v29 = vld [vmem:[%s0 + $0x90] sm:$0xff]
  %v30 = vld [vmem:[%s0 + $0x98] sm:$0xff]
  %v31 = vld [vmem:[%s0 + $0xa0] sm:$0xff]
  %v32 = vld [vmem:[%s0 + $0xa8] sm:$0xff]
  %v33 = vld [vmem:[%s0 + $0xb0] sm:$0xff]
  %v34 = vld [vmem:[%s0 + $0xb8] sm:$0xff]
  %v35 = vld [vmem:[%s0 + $0xc0] sm:$0xff]
  %v36 = vld [vmem:[%s0 + $0xc8] sm:$0xff]
  %v37 = vld [vmem:[%s0 + $0xd0] sm:$0xff]
  %v38 = vld [vmem:[%s0 + $0xd8] sm:$0xff]
  %v39 = vld [vmem:[%s0 + $0xe0] sm:$0xff]
  %v40 = vld [vmem:[%s0 + $0xe8] sm:$0xff]
  %v41 = vld [vmem:[%s0 + $0xf0] sm:$0xff]
  %v42 = vld [vmem:[%s0 + $0xf8] sm:$0xff]
  %v43 = vmul.f32 %v11, 0.9
  %v44 = vmul.f32 %v12, 0.9
  %v45 = vmul.f32 %v13, 0.9
  %v46 = vmul.f32 %v14, 0.9
  %v47 = vmul.f32 %v15, 0.9
  %v48 = vmul.f32 %v16, 0.9
  %v49 = vmul.f32 %v17, 0.9
  %v50 = vmul.f32 %v18, 0.9
  %v51 = vmul.f32 %v19, 0.9
  %v52 = vmul.f32 %v20, 0.9
  %v53 = vmul.f32 %v21, 0.9
  %v54 = vmul.f32 %v22, 0.9
  %v55 = vmul.f32 %v23, 0.9
  %v56 = vmul.f32 %v24, 0.9
  %v57 = vmul.f32 %v25, 0.9
  %v58 = vmul.f32 %v26, 0.9
  %v59 = vmul.f32 %v27, 0.9
  %v60 = vmul.f32 %v28, 0.9
  %v61 = vmul.f32 %v29, 0.9
  %v62 = vmul.f32 %v30, 0.9
  %v63 = vmul.f32 %v31, 0.9
  %v64 = vmul.f32 %v32, 0.9
  %v65 = vmul.f32 %v33, 0.9
  %v66 = vmul.f32 %v34, 0.9
  %v67 = vmul.f32 %v35, 0.9
  %v68 = vmul.f32 %v36, 0.9
  %v69 = vmul.f32 %v37, 0.9
  %v70 = vmul.f32 %v38, 0.9
  %v71 = vmul.f32 %v39, 0.9
  %v72 = vmul.f32 %v40, 0.9
  %v73 = vmul.f32 %v41, 0.9
  %v74 = vmul.f32 %v42, 0.9
  %v75 = vld [vmem:[%s1] sm:$0xff]
  %v76 = vld [vmem:[%s1 + $0x8] sm:$0xff]
  %v77 = vld [vmem:[%s1 + $0x10] sm:$0xff]
  %v78 = vld [vmem:[%s1 + $0x18] sm:$0xff]
  %v79 = vld [vmem:[%s1 + $0x20] sm:$0xff]
  %v80 = vld [vmem:[%s1 + $0x28] sm:$0xff]
  %v81 = vld [vmem:[%s1 + $0x30] sm:$0xff]
  %v82 = vld [vmem:[%s1 + $0x38] sm:$0xff]
  %v83 = vld [vmem:[%s1 + $0x40] sm:$0xff]
  %v84 = vld [vmem:[%s1 + $0x48] sm:$0xff]
  %v85 = vld [vmem:[%s1 + $0x50] sm:$0xff]
  %v86 = vld [vmem:[%s1 + $0x58] sm:$0xff]
  %v87 = vld [vmem:[%s1 + $0x60] sm:$0xff]
  %v88 = vld [vmem:[%s1 + $0x68] sm:$0xff]
  %v89 = vld [vmem:[%s1 + $0x70] sm:$0xff]
  %v90 = vld [vmem:[%s1 + $0x78] sm:$0xff]
  %v91 = vld [vmem:[%s1 + $0x80] sm:$0xff]
  %v92 = vld [vmem:[%s1 + $0x88] sm:$0xff]
  %v93 = vld [vmem:[%s1 + $0x90] sm:$0xff]
  %v94 = vld [vmem:[%s1 + $0x98] sm:$0xff]
  %v95 = vld [vmem:[%s1 + $0xa0] sm:$0xff]
  %v96 = vld [vmem:[%s1 + $0xa8] sm:$0xff]
  %v97 = vld [vmem:[%s1 + $0xb0] sm:$0xff]
  %v98 = vld [vmem:[%s1 + $0xb8] sm:$0xff]
  %v99 = vld [vmem:[%s1 + $0xc0] sm:$0xff]
  %v100 = vld [vmem:[%s1 + $0xc8] sm:$0xff]
  %v101 = vld [vmem:[%s1 + $0xd0] sm:$0xff]
  %v102 = vld [vmem:[%s1 + $0xd8] sm:$0xff]
  %v103 = vld [vmem:[%s1 + $0xe0] sm:$0xff]
  %v104 = vld [vmem:[%s1 + $0xe8] sm:$0xff]
  %v105 = vld [vmem:[%s1 + $0xf0] sm:$0xff]
  %v106 = vld [vmem:[%s1 + $0xf8] sm:$0xff]
  %v107 = vmul.f32 %v75, 0.1
  %v108 = vmul.f32 %v76, 0.1
  %v109 = vmul.f32 %v77, 0.1
  %v110 = vmul.f32 %v78, 0.1
  %v111 = vmul.f32 %v79, 0.1
  %v112 = vmul.f32 %v80, 0.1
  %v113 = vmul.f32 %v81, 0.1
  %v114 = vmul.f32 %v82, 0.1
  %v115 = vmul.f32 %v83, 0.1
  %v116 = vmul.f32 %v84, 0.1
  %v117 = vmul.f32 %v85, 0.1
  %v118 = vmul.f32 %v86, 0.1
  %v119 = vmul.f32 %v87, 0.1
  %v120 = vmul.f32 %v88, 0.1
  %v121 = vmul.f32 %v89, 0.1
  %v122 = vmul.f32 %v90, 0.1
  %v123 = vmul.f32 %v91, 0.1
  %v124 = vmul.f32 %v92, 0.1
  %v125 = vmul.f32 %v93, 0.1
  %v126 = vmul.f32 %v94, 0.1
  %v127 = vmul.f32 %v95, 0.1
  %v128 = vmul.f32 %v96, 0.1
  %v129 = vmul.f32 %v97, 0.1
  %v130 = vmul.f32 %v98, 0.1
  %v131 = vmul.f32 %v99, 0.1
  %v132 = vmul.f32 %v100, 0.1
  %v133 = vmul.f32 %v101, 0.1
  %v134 = vmul.f32 %v102, 0.1
  %v135 = vmul.f32 %v103, 0.1
  %v136 = vmul.f32 %v104, 0.1
  %v137 = vmul.f32 %v105, 0.1
  %v138 = vmul.f32 %v106, 0.1
  %v139 = vadd.f32 %v43, %v107
  %v140 = vadd.f32 %v44, %v108
  %v141 = vadd.f32 %v45, %v109
  %v142 = vadd.f32 %v46, %v110
  %v143 = vadd.f32 %v47, %v111
  %v144 = vadd.f32 %v48, %v112
  %v145 = vadd.f32 %v49, %v113
  %v146 = vadd.f32 %v50, %v114
  %v147 = vadd.f32 %v51, %v115
  %v148 = vadd.f32 %v52, %v116
  %v149 = vadd.f32 %v53, %v117
  %v150 = vadd.f32 %v54, %v118
  %v151 = vadd.f32 %v55, %v119
  %v152 = vadd.f32 %v56, %v120
  %v153 = vadd.f32 %v57, %v121
  %v154 = vadd.f32 %v58, %v122
  %v155 = vadd.f32 %v59, %v123
  %v156 = vadd.f32 %v60, %v124
  %v157 = vadd.f32 %v61, %v125
  %v158 = vadd.f32 %v62, %v126
  %v159 = vadd.f32 %v63, %v127
  %v160 = vadd.f32 %v64, %v128
  %v161 = vadd.f32 %v65, %v129
  %v162 = vadd.f32 %v66, %v130
  %v163 = vadd.f32 %v67, %v131
  %v164 = vadd.f32 %v68, %v132
  %v165 = vadd.f32 %v69, %v133
  %v166 = vadd.f32 %v70, %v134
  %v167 = vadd.f32 %v71, %v135
  %v168 = vadd.f32 %v72, %v136
  %v169 = vadd.f32 %v73, %v137
  %v170 = vadd.f32 %v74, %v138
  %171 = vst [vmem:[%s2] sm:$0xff] %v139
  %172 = vst [vmem:[%s2 + $0x8] sm:$0xff] %v140
  %173 = vst [vmem:[%s2 + $0x10] sm:$0xff] %v141
  %174 = vst [vmem:[%s2 + $0x18] sm:$0xff] %v142
  %175 = vst [vmem:[%s2 + $0x20] sm:$0xff] %v143
  %176 = vst [vmem:[%s2 + $0x28] sm:$0xff] %v144
  %177 = vst [vmem:[%s2 + $0x30] sm:$0xff] %v145
  %178 = vst [vmem:[%s2 + $0x38] sm:$0xff] %v146
  %179 = vst [vmem:[%s2 + $0x40] sm:$0xff] %v147
  %180 = vst [vmem:[%s2 + $0x48] sm:$0xff] %v148
  %181 = vst [vmem:[%s2 + $0x50] sm:$0xff] %v149
  %182 = vst [vmem:[%s2 + $0x58] sm:$0xff] %v150
  %183 = vst [vmem:[%s2 + $0x60] sm:$0xff] %v151
  %184 = vst [vmem:[%s2 + $0x68] sm:$0xff] %v152
  %185 = vst [vmem:[%s2 + $0x70] sm:$0xff] %v153
  %186 = vst [vmem:[%s2 + $0x78] sm:$0xff] %v154
  %187 = vst [vmem:[%s2 + $0x80] sm:$0xff] %v155
  %188 = vst [vmem:[%s2 + $0x88] sm:$0xff] %v156
  %189 = vst [vmem:[%s2 + $0x90] sm:$0xff] %v157
  %190 = vst [vmem:[%s2 + $0x98] sm:$0xff] %v158
  %191 = vst [vmem:[%s2 + $0xa0] sm:$0xff] %v159
  %192 = vst [vmem:[%s2 + $0xa8] sm:$0xff] %v160
  %193 = vst [vmem:[%s2 + $0xb0] sm:$0xff] %v161
  %194 = vst [vmem:[%s2 + $0xb8] sm:$0xff] %v162
  %195 = vst [vmem:[%s2 + $0xc0] sm:$0xff] %v163
  %196 = vst [vmem:[%s2 + $0xc8] sm:$0xff] %v164
  %197 = vst [vmem:[%s2 + $0xd0] sm:$0xff] %v165
  %198 = vst [vmem:[%s2 + $0xd8] sm:$0xff] %v166
  %199 = vst [vmem:[%s2 + $0xe0] sm:$0xff] %v167
  %200 = vst [vmem:[%s2 + $0xe8] sm:$0xff] %v168
  %201 = vst [vmem:[%s2 + $0xf0] sm:$0xff] %v169
  %202 = vst [vmem:[%s2 + $0xf8] sm:$0xff] %v170
  // Predicated region
  $region10: #{byol_forward.20} parent=0 // pred_check
    _
  $region11: #{byol_forward.20} parent=0 // pred_check_branch
    %204 = sbr.rel (0) target = $region13
  $region12: #{byol_forward.20} parent=0 // pred_region
    _
  $region13: #{byol_forward.20} parent=0 // pred_fallthru
    _
  // Predicated region
  $region14: #{byol_forward.20} parent=0 // pred_check
    _
  $region15: #{byol_forward.20} parent=0 // pred_check_branch
    %206 = sbr.rel (0) target = $region17
  $region16: #{byol_forward.20} parent=0 // pred_region
    _
  $region17: #{byol_forward.20} parent=0 // pred_fallthru
    _

// kernel: byol_forward.29
$region0: #{byol_forward.29}
  #allocation0 [shape = 'u32[]', space=smem, size = 0x4, offset = 0x4, fixed_abs, tag = 'smem constant byte address 0x4 - core index']
  #allocation1 [shape = 'u32[144,128]{1,0:T(1,128)}', space=vmem, size = 0x12000, scoped, tag = 'internal scratch']
  %s0 = inlined_call_operand.vmem [shape: f32[8,1024], index: 0, kind: input, shape index: {}]
  %s1 = inlined_call_operand.vmem [shape: f32[1024,256], index: 1, kind: input, shape index: {}]
  %s2 = inlined_call_operand.vmem [shape: f32[1,256], index: 2, kind: input, shape index: {}]
  %s3 = inlined_call_operand.vmem [shape: f32[1,256], index: 3, kind: input, shape index: {}]
  %s4 = inlined_call_operand.vmem [shape: f32[256,128], index: 4, kind: input, shape index: {}]
  %s5 = inlined_call_operand.vmem [shape: f32[1,128], index: 5, kind: input, shape index: {}]
  %s6 = inlined_call_operand.vmem [shape: f32[8,128], index: 6, kind: output, shape index: {}]
  %s7 = sld [smem:[#allocation0]]
  $region34: #{byol_forward.29} parent=0
    _
  %s9 = ssub.s32 1, %s7
  %s10 = scalar_select 0, %s9, %s7
  // Predicated region
  $region2: #{byol_forward.29} parent=0 // pred_check
    _
  $region3: #{byol_forward.29} parent=0 // pred_check_branch
    %12 = sbr.rel (0) target = $region5
  $region4: #{byol_forward.29} parent=0 // pred_region
    _
  $region5: #{byol_forward.29} parent=0 // pred_fallthru
    _
  // Predicated region
  $region6: #{byol_forward.29} parent=0 // pred_check
    _
  $region7: #{byol_forward.29} parent=0 // pred_check_branch
    %14 = sbr.rel (0) target = $region9
  $region8: #{byol_forward.29} parent=0 // pred_region
    _
  $region9: #{byol_forward.29} parent=0 // pred_fallthru
    _
  // Predicated region
  $region10: #{byol_forward.29} parent=0 // pred_check
    _
  $region11: #{byol_forward.29} parent=0 // pred_check_branch
    %16 = sbr.rel (0) target = $region13
  $region12: #{byol_forward.29} parent=0 // pred_region
    _
  $region13: #{byol_forward.29} parent=0 // pred_fallthru
    _
  // Predicated region
  $region14: #{byol_forward.29} parent=0 // pred_check
    _
  $region15: #{byol_forward.29} parent=0 // pred_check_branch
    %18 = sbr.rel (0) target = $region17
  $region16: #{byol_forward.29} parent=0 // pred_region
    _
  $region17: #{byol_forward.29} parent=0 // pred_fallthru
    _
  // Predicated region
  $region18: #{byol_forward.29} parent=0 // pred_check
    _
  $region19: #{byol_forward.29} parent=0 // pred_check_branch
    %20 = sbr.rel (0) target = $region21
  $region20: #{byol_forward.29} parent=0 // pred_region
    _
  $region21: #{byol_forward.29} parent=0 // pred_fallthru
    _
  // Predicated region
  $region22: #{byol_forward.29} parent=0 // pred_check
    _
  $region23: #{byol_forward.29} parent=0 // pred_check_branch
    %22 = sbr.rel (0) target = $region25
  $region24: #{byol_forward.29} parent=0 // pred_region
    _
  $region25: #{byol_forward.29} parent=0 // pred_fallthru
    _
  %v23 = vld [vmem:[%s0] sm:$0xff]
  %v24 = vld [vmem:[%s0 + $0x8] sm:$0xff]
  %v25 = vld [vmem:[%s0 + $0x10] sm:$0xff]
  %v26 = vld [vmem:[%s0 + $0x18] sm:$0xff]
  %v27 = vld [vmem:[%s0 + $0x20] sm:$0xff]
  %v28 = vld [vmem:[%s0 + $0x28] sm:$0xff]
  %v29 = vld [vmem:[%s0 + $0x30] sm:$0xff]
  %v30 = vld [vmem:[%s0 + $0x38] sm:$0xff]
  %v31 = vld [vmem:[%s1] sm:$0xff]
  %v32 = vld [vmem:[%s1 + $0x8] sm:$0xff]
  %v33 = vld [vmem:[%s1 + $0x10] sm:$0xff]
  %v34 = vld [vmem:[%s1 + $0x18] sm:$0xff]
  %v35 = vld [vmem:[%s1 + $0x20] sm:$0xff]
  %v36 = vld [vmem:[%s1 + $0x28] sm:$0xff]
  %v37 = vld [vmem:[%s1 + $0x30] sm:$0xff]
  %v38 = vld [vmem:[%s1 + $0x38] sm:$0xff]
  %v39 = vld [vmem:[%s1 + $0x40] sm:$0xff]
  %v40 = vld [vmem:[%s1 + $0x48] sm:$0xff]
  %v41 = vld [vmem:[%s1 + $0x50] sm:$0xff]
  %v42 = vld [vmem:[%s1 + $0x58] sm:$0xff]
  %v43 = vld [vmem:[%s1 + $0x60] sm:$0xff]
  %v44 = vld [vmem:[%s1 + $0x68] sm:$0xff]
  %v45 = vld [vmem:[%s1 + $0x70] sm:$0xff]
  %v46 = vld [vmem:[%s1 + $0x78] sm:$0xff]
  %v47 = vld [vmem:[%s1 + $0x80] sm:$0xff]
  %v48 = vld [vmem:[%s1 + $0x88] sm:$0xff]
  %v49 = vld [vmem:[%s1 + $0x90] sm:$0xff]
  %v50 = vld [vmem:[%s1 + $0x98] sm:$0xff]
  %v51 = vld [vmem:[%s1 + $0xa0] sm:$0xff]
  %v52 = vld [vmem:[%s1 + $0xa8] sm:$0xff]
  %v53 = vld [vmem:[%s1 + $0xb0] sm:$0xff]
  %v54 = vld [vmem:[%s1 + $0xb8] sm:$0xff]
  %v55 = vld [vmem:[%s1 + $0xc0] sm:$0xff]
  %v56 = vld [vmem:[%s1 + $0xc8] sm:$0xff]
  %v57 = vld [vmem:[%s1 + $0xd0] sm:$0xff]
  %v58 = vld [vmem:[%s1 + $0xd8] sm:$0xff]
  %v59 = vld [vmem:[%s1 + $0xe0] sm:$0xff]
  %v60 = vld [vmem:[%s1 + $0xe8] sm:$0xff]
  %v61 = vld [vmem:[%s1 + $0xf0] sm:$0xff]
  %v62 = vld [vmem:[%s1 + $0xf8] sm:$0xff]
  %v63 = vld [vmem:[%s1 + $0x100] sm:$0xff]
  %v64 = vld [vmem:[%s1 + $0x108] sm:$0xff]
  %v65 = vld [vmem:[%s1 + $0x110] sm:$0xff]
  %v66 = vld [vmem:[%s1 + $0x118] sm:$0xff]
  %v67 = vld [vmem:[%s1 + $0x120] sm:$0xff]
  %v68 = vld [vmem:[%s1 + $0x128] sm:$0xff]
  %v69 = vld [vmem:[%s1 + $0x130] sm:$0xff]
  %v70 = vld [vmem:[%s1 + $0x138] sm:$0xff]
  %v71 = vld [vmem:[%s1 + $0x140] sm:$0xff]
  %v72 = vld [vmem:[%s1 + $0x148] sm:$0xff]
  %v73 = vld [vmem:[%s1 + $0x150] sm:$0xff]
  %v74 = vld [vmem:[%s1 + $0x158] sm:$0xff]
  %v75 = vld [vmem:[%s1 + $0x160] sm:$0xff]
  %v76 = vld [vmem:[%s1 + $0x168] sm:$0xff]
  %v77 = vld [vmem:[%s1 + $0x170] sm:$0xff]
  %v78 = vld [vmem:[%s1 + $0x178] sm:$0xff]
  %v79 = vld [vmem:[%s1 + $0x180] sm:$0xff]
  %v80 = vld [vmem:[%s1 + $0x188] sm:$0xff]
  %v81 = vld [vmem:[%s1 + $0x190] sm:$0xff]
  %v82 = vld [vmem:[%s1 + $0x198] sm:$0xff]
  %v83 = vld [vmem:[%s1 + $0x1a0] sm:$0xff]
  %v84 = vld [vmem:[%s1 + $0x1a8] sm:$0xff]
  %v85 = vld [vmem:[%s1 + $0x1b0] sm:$0xff]
  %v86 = vld [vmem:[%s1 + $0x1b8] sm:$0xff]
  %v87 = vld [vmem:[%s1 + $0x1c0] sm:$0xff]
  %v88 = vld [vmem:[%s1 + $0x1c8] sm:$0xff]
  %v89 = vld [vmem:[%s1 + $0x1d0] sm:$0xff]
  %v90 = vld [vmem:[%s1 + $0x1d8] sm:$0xff]
  %v91 = vld [vmem:[%s1 + $0x1e0] sm:$0xff]
  %v92 = vld [vmem:[%s1 + $0x1e8] sm:$0xff]
  %v93 = vld [vmem:[%s1 + $0x1f0] sm:$0xff]
  %v94 = vld [vmem:[%s1 + $0x1f8] sm:$0xff]
  %v95 = vld [vmem:[%s1 + $0x200] sm:$0xff]
  %v96 = vld [vmem:[%s1 + $0x208] sm:$0xff]
  %v97 = vld [vmem:[%s1 + $0x210] sm:$0xff]
  %v98 = vld [vmem:[%s1 + $0x218] sm:$0xff]
  %v99 = vld [vmem:[%s1 + $0x220] sm:$0xff]
  %v100 = vld [vmem:[%s1 + $0x228] sm:$0xff]
  %v101 = vld [vmem:[%s1 + $0x230] sm:$0xff]
  %v102 = vld [vmem:[%s1 + $0x238] sm:$0xff]
  %v103 = vld [vmem:[%s1 + $0x240] sm:$0xff]
  %v104 = vld [vmem:[%s1 + $0x248] sm:$0xff]
  %v105 = vld [vmem:[%s1 + $0x250] sm:$0xff]
  %v106 = vld [vmem:[%s1 + $0x258] sm:$0xff]
  %v107 = vld [vmem:[%s1 + $0x260] sm:$0xff]
  %v108 = vld [vmem:[%s1 + $0x268] sm:$0xff]
  %v109 = vld [vmem:[%s1 + $0x270] sm:$0xff]
  %v110 = vld [vmem:[%s1 + $0x278] sm:$0xff]
  %v111 = vld [vmem:[%s1 + $0x280] sm:$0xff]
  %v112 = vld [vmem:[%s1 + $0x288] sm:$0xff]
  %v113 = vld [vmem:[%s1 + $0x290] sm:$0xff]
  %v114 = vld [vmem:[%s1 + $0x298] sm:$0xff]
  %v115 = vld [vmem:[%s1 + $0x2a0] sm:$0xff]
  %v116 = vld [vmem:[%s1 + $0x2a8] sm:$0xff]
  %v117 = vld [vmem:[%s1 + $0x2b0] sm:$0xff]
  %v118 = vld [vmem:[%s1 + $0x2b8] sm:$0xff]
  %v119 = vld [vmem:[%s1 + $0x2c0] sm:$0xff]
  %v120 = vld [vmem:[%s1 + $0x2c8] sm:$0xff]
  %v121 = vld [vmem:[%s1 + $0x2d0] sm:$0xff]
  %v122 = vld [vmem:[%s1 + $0x2d8] sm:$0xff]
  %v123 = vld [vmem:[%s1 + $0x2e0] sm:$0xff]
  %v124 = vld [vmem:[%s1 + $0x2e8] sm:$0xff]
  %v125 = vld [vmem:[%s1 + $0x2f0] sm:$0xff]
  %v126 = vld [vmem:[%s1 + $0x2f8] sm:$0xff]
  %v127 = vld [vmem:[%s1 + $0x300] sm:$0xff]
  %v128 = vld [vmem:[%s1 + $0x308] sm:$0xff]
  %v129 = vld [vmem:[%s1 + $0x310] sm:$0xff]
  %v130 = vld [vmem:[%s1 + $0x318] sm:$0xff]
  %v131 = vld [vmem:[%s1 + $0x320] sm:$0xff]
  %v132 = vld [vmem:[%s1 + $0x328] sm:$0xff]
  %v133 = vld [vmem:[%s1 + $0x330] sm:$0xff]
  %v134 = vld [vmem:[%s1 + $0x338] sm:$0xff]
  %v135 = vld [vmem:[%s1 + $0x340] sm:$0xff]
  %v136 = vld [vmem:[%s1 + $0x348] sm:$0xff]
  %v137 = vld [vmem:[%s1 + $0x350] sm:$0xff]
  %v138 = vld [vmem:[%s1 + $0x358] sm:$0xff]
  %v139 = vld [vmem:[%s1 + $0x360] sm:$0xff]
  %v140 = vld [vmem:[%s1 + $0x368] sm:$0xff]
  %v141 = vld [vmem:[%s1 + $0x370] sm:$0xff]
  %v142 = vld [vmem:[%s1 + $0x378] sm:$0xff]
  %v143 = vld [vmem:[%s1 + $0x380] sm:$0xff]
  %v144 = vld [vmem:[%s1 + $0x388] sm:$0xff]
  %v145 = vld [vmem:[%s1 + $0x390] sm:$0xff]
  %v146 = vld [vmem:[%s1 + $0x398] sm:$0xff]
  %v147 = vld [vmem:[%s1 + $0x3a0] sm:$0xff]
  %v148 = vld [vmem:[%s1 + $0x3a8] sm:$0xff]
  %v149 = vld [vmem:[%s1 + $0x3b0] sm:$0xff]
  %v150 = vld [vmem:[%s1 + $0x3b8] sm:$0xff]
  %v151 = vld [vmem:[%s1 + $0x3c0] sm:$0xff]
  %v152 = vld [vmem:[%s1 + $0x3c8] sm:$0xff]
  %v153 = vld [vmem:[%s1 + $0x3d0] sm:$0xff]
  %v154 = vld [vmem:[%s1 + $0x3d8] sm:$0xff]
  %v155 = vld [vmem:[%s1 + $0x3e0] sm:$0xff]
  %v156 = vld [vmem:[%s1 + $0x3e8] sm:$0xff]
  %v157 = vld [vmem:[%s1 + $0x3f0] sm:$0xff]
  %v158 = vld [vmem:[%s1 + $0x3f8] sm:$0xff]
  %v159 = vld [vmem:[%s1 + $0x400] sm:$0xff]
  %v160 = vld [vmem:[%s1 + $0x408] sm:$0xff]
  %v161 = vld [vmem:[%s1 + $0x410] sm:$0xff]
  %v162 = vld [vmem:[%s1 + $0x418] sm:$0xff]
  %v163 = vld [vmem:[%s1 + $0x420] sm:$0xff]
  %v164 = vld [vmem:[%s1 + $0x428] sm:$0xff]
  %v165 = vld [vmem:[%s1 + $0x430] sm:$0xff]
  %v166 = vld [vmem:[%s1 + $0x438] sm:$0xff]
  %v167 = vld [vmem:[%s1 + $0x440] sm:$0xff]
  %v168 = vld [vmem:[%s1 + $0x448] sm:$0xff]
  %v169 = vld [vmem:[%s1 + $0x450] sm:$0xff]
  %v170 = vld [vmem:[%s1 + $0x458] sm:$0xff]
  %v171 = vld [vmem:[%s1 + $0x460] sm:$0xff]
  %v172 = vld [vmem:[%s1 + $0x468] sm:$0xff]
  %v173 = vld [vmem:[%s1 + $0x470] sm:$0xff]
  %v174 = vld [vmem:[%s1 + $0x478] sm:$0xff]
  %v175 = vld [vmem:[%s1 + $0x480] sm:$0xff]
  %v176 = vld [vmem:[%s1 + $0x488] sm:$0xff]
  %v177 = vld [vmem:[%s1 + $0x490] sm:$0xff]
  %v178 = vld [vmem:[%s1 + $0x498] sm:$0xff]
  %v179 = vld [vmem:[%s1 + $0x4a0] sm:$0xff]
  %v180 = vld [vmem:[%s1 + $0x4a8] sm:$0xff]
  %v181 = vld [vmem:[%s1 + $0x4b0] sm:$0xff]
  %v182 = vld [vmem:[%s1 + $0x4b8] sm:$0xff]
  %v183 = vld [vmem:[%s1 + $0x4c0] sm:$0xff]
  %v184 = vld [vmem:[%s1 + $0x4c8] sm:$0xff]
  %v185 = vld [vmem:[%s1 + $0x4d0] sm:$0xff]
  %v186 = vld [vmem:[%s1 + $0x4d8] sm:$0xff]
  %v187 = vld [vmem:[%s1 + $0x4e0] sm:$0xff]
  %v188 = vld [vmem:[%s1 + $0x4e8] sm:$0xff]
  %v189 = vld [vmem:[%s1 + $0x4f0] sm:$0xff]
  %v190 = vld [vmem:[%s1 + $0x4f8] sm:$0xff]
  %v191 = vld [vmem:[%s1 + $0x500] sm:$0xff]
  %v192 = vld [vmem:[%s1 + $0x508] sm:$0xff]
  %v193 = vld [vmem:[%s1 + $0x510] sm:$0xff]
  %v194 = vld [vmem:[%s1 + $0x518] sm:$0xff]
  %v195 = vld [vmem:[%s1 + $0x520] sm:$0xff]
  %v196 = vld [vmem:[%s1 + $0x528] sm:$0xff]
  %v197 = vld [vmem:[%s1 + $0x530] sm:$0xff]
  %v198 = vld [vmem:[%s1 + $0x538] sm:$0xff]
  %v199 = vld [vmem:[%s1 + $0x540] sm:$0xff]
  %v200 = vld [vmem:[%s1 + $0x548] sm:$0xff]
  %v201 = vld [vmem:[%s1 + $0x550] sm:$0xff]
  %v202 = vld [vmem:[%s1 + $0x558] sm:$0xff]
  %v203 = vld [vmem:[%s1 + $0x560] sm:$0xff]
  %v204 = vld [vmem:[%s1 + $0x568] sm:$0xff]
  %v205 = vld [vmem:[%s1 + $0x570] sm:$0xff]
  %v206 = vld [vmem:[%s1 + $0x578] sm:$0xff]
  %v207 = vld [vmem:[%s1 + $0x580] sm:$0xff]
  %v208 = vld [vmem:[%s1 + $0x588] sm:$0xff]
  %v209 = vld [vmem:[%s1 + $0x590] sm:$0xff]
  %v210 = vld [vmem:[%s1 + $0x598] sm:$0xff]
  %v211 = vld [vmem:[%s1 + $0x5a0] sm:$0xff]
  %v212 = vld [vmem:[%s1 + $0x5a8] sm:$0xff]
  %v213 = vld [vmem:[%s1 + $0x5b0] sm:$0xff]
  %v214 = vld [vmem:[%s1 + $0x5b8] sm:$0xff]
  %v215 = vld [vmem:[%s1 + $0x5c0] sm:$0xff]
  %v216 = vld [vmem:[%s1 + $0x5c8] sm:$0xff]
  %v217 = vld [vmem:[%s1 + $0x5d0] sm:$0xff]
  %v218 = vld [vmem:[%s1 + $0x5d8] sm:$0xff]
  %v219 = vld [vmem:[%s1 + $0x5e0] sm:$0xff]
  %v220 = vld [vmem:[%s1 + $0x5e8] sm:$0xff]
  %v221 = vld [vmem:[%s1 + $0x5f0] sm:$0xff]
  %v222 = vld [vmem:[%s1 + $0x5f8] sm:$0xff]
  %v223 = vld [vmem:[%s1 + $0x600] sm:$0xff]
  %v224 = vld [vmem:[%s1 + $0x608] sm:$0xff]
  %v225 = vld [vmem:[%s1 + $0x610] sm:$0xff]
  %v226 = vld [vmem:[%s1 + $0x618] sm:$0xff]
  %v227 = vld [vmem:[%s1 + $0x620] sm:$0xff]
  %v228 = vld [vmem:[%s1 + $0x628] sm:$0xff]
  %v229 = vld [vmem:[%s1 + $0x630] sm:$0xff]
  %v230 = vld [vmem:[%s1 + $0x638] sm:$0xff]
  %v231 = vld [vmem:[%s1 + $0x640] sm:$0xff]
  %v232 = vld [vmem:[%s1 + $0x648] sm:$0xff]
  %v233 = vld [vmem:[%s1 + $0x650] sm:$0xff]
  %v234 = vld [vmem:[%s1 + $0x658] sm:$0xff]
  %v235 = vld [vmem:[%s1 + $0x660] sm:$0xff]
  %v236 = vld [vmem:[%s1 + $0x668] sm:$0xff]
  %v237 = vld [vmem:[%s1 + $0x670] sm:$0xff]
  %v238 = vld [vmem:[%s1 + $0x678] sm:$0xff]
  %v239 = vld [vmem:[%s1 + $0x680] sm:$0xff]
  %v240 = vld [vmem:[%s1 + $0x688] sm:$0xff]
  %v241 = vld [vmem:[%s1 + $0x690] sm:$0xff]
  %v242 = vld [vmem:[%s1 + $0x698] sm:$0xff]
  %v243 = vld [vmem:[%s1 + $0x6a0] sm:$0xff]
  %v244 = vld [vmem:[%s1 + $0x6a8] sm:$0xff]
  %v245 = vld [vmem:[%s1 + $0x6b0] sm:$0xff]
  %v246 = vld [vmem:[%s1 + $0x6b8] sm:$0xff]
  %v247 = vld [vmem:[%s1 + $0x6c0] sm:$0xff]
  %v248 = vld [vmem:[%s1 + $0x6c8] sm:$0xff]
  %v249 = vld [vmem:[%s1 + $0x6d0] sm:$0xff]
  %v250 = vld [vmem:[%s1 + $0x6d8] sm:$0xff]
  %v251 = vld [vmem:[%s1 + $0x6e0] sm:$0xff]
  %v252 = vld [vmem:[%s1 + $0x6e8] sm:$0xff]
  %v253 = vld [vmem:[%s1 + $0x6f0] sm:$0xff]
  %v254 = vld [vmem:[%s1 + $0x6f8] sm:$0xff]
  %v255 = vld [vmem:[%s1 + $0x700] sm:$0xff]
  %v256 = vld [vmem:[%s1 + $0x708] sm:$0xff]
  %v257 = vld [vmem:[%s1 + $0x710] sm:$0xff]
  %v258 = vld [vmem:[%s1 + $0x718] sm:$0xff]
  %v259 = vld [vmem:[%s1 + $0x720] sm:$0xff]
  %v260 = vld [vmem:[%s1 + $0x728] sm:$0xff]
  %v261 = vld [vmem:[%s1 + $0x730] sm:$0xff]
  %v262 = vld [vmem:[%s1 + $0x738] sm:$0xff]
  %v263 = vld [vmem:[%s1 + $0x740] sm:$0xff]
  %v264 = vld [vmem:[%s1 + $0x748] sm:$0xff]
  %v265 = vld [vmem:[%s1 + $0x750] sm:$0xff]
  %v266 = vld [vmem:[%s1 + $0x758] sm:$0xff]
  %v267 = vld [vmem:[%s1 + $0x760] sm:$0xff]
  %v268 = vld [vmem:[%s1 + $0x768] sm:$0xff]
  %v269 = vld [vmem:[%s1 + $0x770] sm:$0xff]
  %v270 = vld [vmem:[%s1 + $0x778] sm:$0xff]
  %v271 = vld [vmem:[%s1 + $0x780] sm:$0xff]
  %v272 = vld [vmem:[%s1 + $0x788] sm:$0xff]
  %v273 = vld [vmem:[%s1 + $0x790] sm:$0xff]
  %v274 = vld [vmem:[%s1 + $0x798] sm:$0xff]
  %v275 = vld [vmem:[%s1 + $0x7a0] sm:$0xff]
  %v276 = vld [vmem:[%s1 + $0x7a8] sm:$0xff]
  %v277 = vld [vmem:[%s1 + $0x7b0] sm:$0xff]
  %v278 = vld [vmem:[%s1 + $0x7b8] sm:$0xff]
  %v279 = vld [vmem:[%s1 + $0x7c0] sm:$0xff]
  %v280 = vld [vmem:[%s1 + $0x7c8] sm:$0xff]
  %v281 = vld [vmem:[%s1 + $0x7d0] sm:$0xff]
  %v282 = vld [vmem:[%s1 + $0x7d8] sm:$0xff]
  %v283 = vld [vmem:[%s1 + $0x7e0] sm:$0xff]
  %v284 = vld [vmem:[%s1 + $0x7e8] sm:$0xff]
  %v285 = vld [vmem:[%s1 + $0x7f0] sm:$0xff]
  %v286 = vld [vmem:[%s1 + $0x7f8] sm:$0xff]
  %287 = vmatprep.subr.mxu0 %v32
  %288 = vmatpush1.msra.mxu0 %v31
  %289 = vmatprep.subr.mxu0 %v34
  %290 = vmatpush1.msra.mxu0 %v33
  %291 = vmatprep.subr.mxu0 %v36
  %292 = vmatpush1.msra.mxu0 %v35
  %293 = vmatprep.subr.mxu0 %v38
  %294 = vmatpush1.msra.mxu0 %v37
  %295 = vmatprep.subr.mxu0 %v40
  %296 = vmatpush1.msra.mxu0 %v39
  %297 = vmatprep.subr.mxu0 %v42
  %298 = vmatpush1.msra.mxu0 %v41
  %299 = vmatprep.subr.mxu0 %v44
  %300 = vmatpush1.msra.mxu0 %v43
  %301 = vmatprep.subr.mxu0 %v46
  %302 = vmatpush1.msra.mxu0 %v45
  %303 = vmatprep.subr.mxu0 %v48
  %304 = vmatpush1.msra.mxu0 %v47
  %305 = vmatprep.subr.mxu0 %v50
  %306 = vmatpush1.msra.mxu0 %v49
  %307 = vmatprep.subr.mxu0 %v52
  %308 = vmatpush1.msra.mxu0 %v51
  %309 = vmatprep.subr.mxu0 %v54
  %310 = vmatpush1.msra.mxu0 %v53
  %311 = vmatprep.subr.mxu0 %v56
  %312 = vmatpush1.msra.mxu0 %v55
  %313 = vmatprep.subr.mxu0 %v58
  %314 = vmatpush1.msra.mxu0 %v57
  %315 = vmatprep.subr.mxu0 %v60
  %316 = vmatpush1.msra.mxu0 %v59
  %317 = vmatprep.subr.mxu0 %v62
  %318 = vmatpush1.msra.mxu0 %v61
  %319 = vmatprep.subr.mxu0 %v64
  %320 = vmatpush1.msra.mxu0 %v63
  %321 = vmatprep.subr.mxu0 %v66
  %322 = vmatpush1.msra.mxu0 %v65
  %323 = vmatprep.subr.mxu0 %v68
  %324 = vmatpush1.msra.mxu0 %v67
  %325 = vmatprep.subr.mxu0 %v70
  %326 = vmatpush1.msra.mxu0 %v69
  %327 = vmatprep.subr.mxu0 %v72
  %328 = vmatpush1.msra.mxu0 %v71
  %329 = vmatprep.subr.mxu0 %v74
  %330 = vmatpush1.msra.mxu0 %v73
  %331 = vmatprep.subr.mxu0 %v76
  %332 = vmatpush1.msra.mxu0 %v75
  %333 = vmatprep.subr.mxu0 %v78
  %334 = vmatpush1.msra.mxu0 %v77
  %335 = vmatprep.subr.mxu0 %v80
  %336 = vmatpush1.msra.mxu0 %v79
  %337 = vmatprep.subr.mxu0 %v82
  %338 = vmatpush1.msra.mxu0 %v81
  %339 = vmatprep.subr.mxu0 %v84
  %340 = vmatpush1.msra.mxu0 %v83
  %341 = vmatprep.subr.mxu0 %v86
  %342 = vmatpush1.msra.mxu0 %v85
  %343 = vmatprep.subr.mxu0 %v88
  %344 = vmatpush1.msra.mxu0 %v87
  %345 = vmatprep.subr.mxu0 %v90
  %346 = vmatpush1.msra.mxu0 %v89
  %347 = vmatprep.subr.mxu0 %v92
  %348 = vmatpush1.msra.mxu0 %v91
  %349 = vmatprep.subr.mxu0 %v94
  %350 = vmatpush1.msra.mxu0 %v93
  %351 = vmatprep.mubr.f32.mxu0 %v24
  %352 = vmatmul.mubr.f32.gmra.mrb[0].mxu0 %v23
  %v353 = vpop.f32.mrb[0].mxu0
  %v354 = vadd.f32 0.0, %v353
  %v355 = vpop.f32.mrb[0].mxu0
  %v356 = vadd.f32 0.0, %v355
  %357 = vdwg.mxu0
  %358 = vmatprep.subr.mxu0 %v96
  %359 = vmatpush1.msra.mxu0 %v95
  %360 = vmatprep.subr.mxu0 %v98
  %361 = vmatpush1.msra.mxu0 %v97
  %362 = vmatprep.subr.mxu0 %v100
  %363 = vmatpush1.msra.mxu0 %v99
  %364 = vmatprep.subr.mxu0 %v102
  %365 = vmatpush1.msra.mxu0 %v101
  %366 = vmatprep.subr.mxu0 %v104
  %367 = vmatpush1.msra.mxu0 %v103
  %368 = vmatprep.subr.mxu0 %v106
  %369 = vmatpush1.msra.mxu0 %v105
  %370 = vmatprep.subr.mxu0 %v108
  %371 = vmatpush1.msra.mxu0 %v107
  %372 = vmatprep.subr.mxu0 %v110
  %373 = vmatpush1.msra.mxu0 %v109
  %374 = vmatprep.subr.mxu0 %v112
  %375 = vmatpush1.msra.mxu0 %v111
  %376 = vmatprep.subr.mxu0 %v114
  %377 = vmatpush1.msra.mxu0 %v113
  %378 = vmatprep.subr.mxu0 %v116
  %379 = vmatpush1.msra.mxu0 %v115
  %380 = vmatprep.subr.mxu0 %v118
  %381 = vmatpush1.msra.mxu0 %v117
  %382 = vmatprep.subr.mxu0 %v120
  %383 = vmatpush1.msra.mxu0 %v119
  %384 = vmatprep.subr.mxu0 %v122
  %385 = vmatpush1.msra.mxu0 %v121
  %386 = vmatprep.subr.mxu0 %v124
  %387 = vmatpush1.msra.mxu0 %v123
  %388 = vmatprep.subr.mxu0 %v126
  %389 = vmatpush1.msra.mxu0 %v125
  %390 = vmatprep.subr.mxu0 %v128
  %391 = vmatpush1.msra.mxu0 %v127
  %392 = vmatprep.subr.mxu0 %v130
  %393 = vmatpush1.msra.mxu0 %v129
  %394 = vmatprep.subr.mxu0 %v132
  %395 = vmatpush1.msra.mxu0 %v131
  %396 = vmatprep.subr.mxu0 %v134
  %397 = vmatpush1.msra.mxu0 %v133
  %398 = vmatprep.subr.mxu0 %v136
  %399 = vmatpush1.msra.mxu0 %v135
  %400 = vmatprep.subr.mxu0 %v138
  %401 = vmatpush1.msra.mxu0 %v137
  %402 = vmatprep.subr.mxu0 %v140
  %403 = vmatpush1.msra.mxu0 %v139
  %404 = vmatprep.subr.mxu0 %v142
  %405 = vmatpush1.msra.mxu0 %v141
  %406 = vmatprep.subr.mxu0 %v144
  %407 = vmatpush1.msra.mxu0 %v143
  %408 = vmatprep.subr.mxu0 %v146
  %409 = vmatpush1.msra.mxu0 %v145
  %410 = vmatprep.subr.mxu0 %v148
  %411 = vmatpush1.msra.mxu0 %v147
  %412 = vmatprep.subr.mxu0 %v150
  %413 = vmatpush1.msra.mxu0 %v149
  %414 = vmatprep.subr.mxu0 %v152
  %415 = vmatpush1.msra.mxu0 %v151
  %416 = vmatprep.subr.mxu0 %v154
  %417 = vmatpush1.msra.mxu0 %v153
  %418 = vmatprep.subr.mxu0 %v156
  %419 = vmatpush1.msra.mxu0 %v155
  %420 = vmatprep.subr.mxu0 %v158
  %421 = vmatpush1.msra.mxu0 %v157
  %422 = vmatprep.mubr.f32.mxu0 %v26
  %423 = vmatmul.mubr.f32.gmra.mrb[0].mxu0 %v25
  %v424 = vpop.f32.mrb[0].mxu0
  %v425 = vadd.f32 %v354, %v424
  %v426 = vpop.f32.mrb[0].mxu0
  %v427 = vadd.f32 %v356, %v426
  %428 = vdwg.mxu0
  %429 = vmatprep.subr.mxu0 %v160
  %430 = vmatpush1.msra.mxu0 %v159
  %431 = vmatprep.subr.mxu0 %v162
  %432 = vmatpush1.msra.mxu0 %v161
  %433 = vmatprep.subr.mxu0 %v164
  %434 = vmatpush1.msra.mxu0 %v163
  %435 = vmatprep.subr.mxu0 %v166
  %436 = vmatpush1.msra.mxu0 %v165
  %437 = vmatprep.subr.mxu0 %v168
  %438 = vmatpush1.msra.mxu0 %v167
  %439 = vmatprep.subr.mxu0 %v170
  %440 = vmatpush1.msra.mxu0 %v169
  %441 = vmatprep.subr.mxu0 %v172
  %442 = vmatpush1.msra.mxu0 %v171
  %443 = vmatprep.subr.mxu0 %v174
  %444 = vmatpush1.msra.mxu0 %v173
  %445 = vmatprep.subr.mxu0 %v176
  %446 = vmatpush1.msra.mxu0 %v175
  %447 = vmatprep.subr.mxu0 %v178
  %448 = vmatpush1.msra.mxu0 %v177
  %449 = vmatprep.subr.mxu0 %v180
  %450 = vmatpush1.msra.mxu0 %v179
  %451 = vmatprep.subr.mxu0 %v182
  %452 = vmatpush1.msra.mxu0 %v181
  %453 = vmatprep.subr.mxu0 %v184
  %454 = vmatpush1.msra.mxu0 %v183
  %455 = vmatprep.subr.mxu0 %v186
  %456 = vmatpush1.msra.mxu0 %v185
  %457 = vmatprep.subr.mxu0 %v188
  %458 = vmatpush1.msra.mxu0 %v187
  %459 = vmatprep.subr.mxu0 %v190
  %460 = vmatpush1.msra.mxu0 %v189
  %461 = vmatprep.subr.mxu0 %v192
  %462 = vmatpush1.msra.mxu0 %v191
  %463 = vmatprep.subr.mxu0 %v194
  %464 = vmatpush1.msra.mxu0 %v193
  %465 = vmatprep.subr.mxu0 %v196
  %466 = vmatpush1.msra.mxu0 %v195
  %467 = vmatprep.subr.mxu0 %v198
  %468 = vmatpush1.msra.mxu0 %v197
  %469 = vmatprep.subr.mxu0 %v200
  %470 = vmatpush1.msra.mxu0 %v199
  %471 = vmatprep.subr.mxu0 %v202
  %472 = vmatpush1.msra.mxu0 %v201
  %473 = vmatprep.subr.mxu0 %v204
  %474 = vmatpush1.msra.mxu0 %v203
  %475 = vmatprep.subr.mxu0 %v206
  %476 = vmatpush1.msra.mxu0 %v205
  %477 = vmatprep.subr.mxu0 %v208
  %478 = vmatpush1.msra.mxu0 %v207
  %479 = vmatprep.subr.mxu0 %v210
  %480 = vmatpush1.msra.mxu0 %v209
  %481 = vmatprep.subr.mxu0 %v212
  %482 = vmatpush1.msra.mxu0 %v211
  %483 = vmatprep.subr.mxu0 %v214
  %484 = vmatpush1.msra.mxu0 %v213
  %485 = vmatprep.subr.mxu0 %v216
  %486 = vmatpush1.msra.mxu0 %v215
  %487 = vmatprep.subr.mxu0 %v218
  %488 = vmatpush1.msra.mxu0 %v217
  %489 = vmatprep.subr.mxu0 %v220
  %490 = vmatpush1.msra.mxu0 %v219
  %491 = vmatprep.subr.mxu0 %v222
  %492 = vmatpush1.msra.mxu0 %v221
  %493 = vmatprep.mubr.f32.mxu0 %v28
  %494 = vmatmul.mubr.f32.gmra.mrb[0].mxu0 %v27
  %v495 = vpop.f32.mrb[0].mxu0
  %v496 = vadd.f32 %v425, %v495
  %v497 = vpop.f32.mrb[0].mxu0
  %v498 = vadd.f32 %v427, %v497
  %499 = vdwg.mxu0
  %500 = vmatprep.subr.mxu0 %v224
  %501 = vmatpush1.msra.mxu0 %v223
  %502 = vmatprep.subr.mxu0 %v226
  %503 = vmatpush1.msra.mxu0 %v225
  %504 = vmatprep.subr.mxu0 %v228
  %505 = vmatpush1.msra.mxu0 %v227
  %506 = vmatprep.subr.mxu0 %v230
  %507 = vmatpush1.msra.mxu0 %v229
  %508 = vmatprep.subr.mxu0 %v232
  %509 = vmatpush1.msra.mxu0 %v231
  %510 = vmatprep.subr.mxu0 %v234
  %511 = vmatpush1.msra.mxu0 %v233
  %512 = vmatprep.subr.mxu0 %v236
  %513 = vmatpush1.msra.mxu0 %v235
  %514 = vmatprep.subr.mxu0 %v238
  %515 = vmatpush1.msra.mxu0 %v237
  %516 = vmatprep.subr.mxu0 %v240
  %517 = vmatpush1.msra.mxu0 %v239
  %518 = vmatprep.subr.mxu0 %v242
  %519 = vmatpush1.msra.mxu0 %v241
  %520 = vmatprep.subr.mxu0 %v244
  %521 = vmatpush1.msra.mxu0 %v243
  %522 = vmatprep.subr.mxu0 %v246
  %523 = vmatpush1.msra.mxu0 %v245
  %524 = vmatprep.subr.mxu0 %v248
  %525 = vmatpush1.msra.mxu0 %v247
  %526 = vmatprep.subr.mxu0 %v250
  %527 = vmatpush1.msra.mxu0 %v249
  %528 = vmatprep.subr.mxu0 %v252
  %529 = vmatpush1.msra.mxu0 %v251
  %530 = vmatprep.subr.mxu0 %v254
  %531 = vmatpush1.msra.mxu0 %v253
  %532 = vmatprep.subr.mxu0 %v256
  %533 = vmatpush1.msra.mxu0 %v255
  %534 = vmatprep.subr.mxu0 %v258
  %535 = vmatpush1.msra.mxu0 %v257
  %536 = vmatprep.subr.mxu0 %v260
  %537 = vmatpush1.msra.mxu0 %v259
  %538 = vmatprep.subr.mxu0 %v262
  %539 = vmatpush1.msra.mxu0 %v261
  %540 = vmatprep.subr.mxu0 %v264
  %541 = vmatpush1.msra.mxu0 %v263
  %542 = vmatprep.subr.mxu0 %v266
  %543 = vmatpush1.msra.mxu0 %v265
  %544 = vmatprep.subr.mxu0 %v268
  %545 = vmatpush1.msra.mxu0 %v267
  %546 = vmatprep.subr.mxu0 %v270
  %547 = vmatpush1.msra.mxu0 %v269
  %548 = vmatprep.subr.mxu0 %v272
  %549 = vmatpush1.msra.mxu0 %v271
  %550 = vmatprep.subr.mxu0 %v274
  %551 = vmatpush1.msra.mxu0 %v273
  %552 = vmatprep.subr.mxu0 %v276
  %553 = vmatpush1.msra.mxu0 %v275
  %554 = vmatprep.subr.mxu0 %v278
  %555 = vmatpush1.msra.mxu0 %v277
  %556 = vmatprep.subr.mxu0 %v280
  %557 = vmatpush1.msra.mxu0 %v279
  %558 = vmatprep.subr.mxu0 %v282
  %559 = vmatpush1.msra.mxu0 %v281
  %560 = vmatprep.subr.mxu0 %v284
  %561 = vmatpush1.msra.mxu0 %v283
  %562 = vmatprep.subr.mxu0 %v286
  %563 = vmatpush1.msra.mxu0 %v285
  %564 = vmatprep.mubr.f32.mxu0 %v30
  %565 = vmatmul.mubr.f32.gmra.mrb[0].mxu0 %v29
  %v566 = vpop.f32.mrb[0].mxu0
  %v567 = vadd.f32 %v496, %v566
  %v568 = vpop.f32.mrb[0].mxu0
  %v569 = vadd.f32 %v498, %v568
  %570 = vdwg.mxu0
  %v571 = vrot.slane %v567, 4
  %v572 = vadd.f32 %v567, %v571
  %v573 = vrot.slane %v572, 2
  %v574 = vadd.f32 %v572, %v573
  %v575 = vrot.slane %v574, 1
  %v576 = vadd.f32 %v574, %v575
  %v577 = vrot.slane %v569, 4
  %v578 = vadd.f32 %v569, %v577
  %v579 = vrot.slane %v578, 2
  %v580 = vadd.f32 %v578, %v579
  %v581 = vrot.slane %v580, 1
  %v582 = vadd.f32 %v580, %v581
  %v583 = vrcp.pop 8.0
  %v584 = vmul.f32 %v576, %v583
  %v585 = vmul.f32 %v582, %v583
  %v586 = vsub.f32 %v567, %v584
  %v587 = vsub.f32 %v569, %v585
  %v588 = vmul.f32 %v586, %v586
  %v589 = vmul.f32 %v587, %v587
  %v590 = vrot.slane %v588, 4
  %v591 = vadd.f32 %v588, %v590
  %v592 = vrot.slane %v591, 2
  %v593 = vadd.f32 %v591, %v592
  %v594 = vrot.slane %v593, 1
  %v595 = vadd.f32 %v593, %v594
  %v596 = vrot.slane %v589, 4
  %v597 = vadd.f32 %v589, %v596
  %v598 = vrot.slane %v597, 2
  %v599 = vadd.f32 %v597, %v598
  %v600 = vrot.slane %v599, 1
  %v601 = vadd.f32 %v599, %v600
  %v602 = vmul.f32 %v595, %v583
  %v603 = vmul.f32 %v601, %v583
  %v604 = vadd.f32 %v602, 1e-05
  %v605 = vadd.f32 %v603, 1e-05
  %v606 = vrsqrt.pop %v604
  %v607 = vrsqrt.pop %v605
  %v608 = vmul.f32 %v586, %v606
  %v609 = vmul.f32 %v587, %v607
  %v610 = vld [vmem:[%s2] sm:$0x3]
  %v612 = vlaneseq
  %v613 = vshrl.u32 %v612, 7
  %v614 = vsub.s32 0, %v613
  %v615 = vrot.slane %v610, %v614
  %v616 = vlaneseq
  %v617 = vshrl.u32 %v616, 7
  %v618 = vsub.s32 1, %v617
  %v619 = vrot.slane %v610, %v618
  %v622 = vmul.f32 %v608, %v615
  %v623 = vmul.f32 %v609, %v619
  %v624 = vld [vmem:[%s3] sm:$0x3]
  %v626 = vlaneseq
  %v627 = vshrl.u32 %v626, 7
  %v628 = vsub.s32 0, %v627
  %v629 = vrot.slane %v624, %v628
  %v630 = vlaneseq
  %v631 = vshrl.u32 %v630, 7
  %v632 = vsub.s32 1, %v631
  %v633 = vrot.slane %v624, %v632
  %v636 = vadd.f32 %v622, %v629
  %v637 = vadd.f32 %v623, %v633
  %v638 = vmax.f32 %v636, 0.0
  %v639 = vmax.f32 %v637, 0.0
  %v640 = vld [vmem:[%s4] sm:$0xff]
  %v641 = vld [vmem:[%s4 + $0x8] sm:$0xff]
  %v642 = vld [vmem:[%s4 + $0x10] sm:$0xff]
  %v643 = vld [vmem:[%s4 + $0x18] sm:$0xff]
  %v644 = vld [vmem:[%s4 + $0x20] sm:$0xff]
  %v645 = vld [vmem:[%s4 + $0x28] sm:$0xff]
  %v646 = vld [vmem:[%s4 + $0x30] sm:$0xff]
  %v647 = vld [vmem:[%s4 + $0x38] sm:$0xff]
  %v648 = vld [vmem:[%s4 + $0x40] sm:$0xff]
  %v649 = vld [vmem:[%s4 + $0x48] sm:$0xff]
  %v650 = vld [vmem:[%s4 + $0x50] sm:$0xff]
  %v651 = vld [vmem:[%s4 + $0x58] sm:$0xff]
  %v652 = vld [vmem:[%s4 + $0x60] sm:$0xff]
  %v653 = vld [vmem:[%s4 + $0x68] sm:$0xff]
  %v654 = vld [vmem:[%s4 + $0x70] sm:$0xff]
  %v655 = vld [vmem:[%s4 + $0x78] sm:$0xff]
  %v656 = vld [vmem:[%s4 + $0x80] sm:$0xff]
  %v657 = vld [vmem:[%s4 + $0x88] sm:$0xff]
  %v658 = vld [vmem:[%s4 + $0x90] sm:$0xff]
  %v659 = vld [vmem:[%s4 + $0x98] sm:$0xff]
  %v660 = vld [vmem:[%s4 + $0xa0] sm:$0xff]
  %v661 = vld [vmem:[%s4 + $0xa8] sm:$0xff]
  %v662 = vld [vmem:[%s4 + $0xb0] sm:$0xff]
  %v663 = vld [vmem:[%s4 + $0xb8] sm:$0xff]
  %v664 = vld [vmem:[%s4 + $0xc0] sm:$0xff]
  %v665 = vld [vmem:[%s4 + $0xc8] sm:$0xff]
  %v666 = vld [vmem:[%s4 + $0xd0] sm:$0xff]
  %v667 = vld [vmem:[%s4 + $0xd8] sm:$0xff]
  %v668 = vld [vmem:[%s4 + $0xe0] sm:$0xff]
  %v669 = vld [vmem:[%s4 + $0xe8] sm:$0xff]
  %v670 = vld [vmem:[%s4 + $0xf0] sm:$0xff]
  %v671 = vld [vmem:[%s4 + $0xf8] sm:$0xff]
  %v672 = vld [vmem:[%s5] sm:$0x1]
  %v674 = vlaneseq
  %v675 = vshrl.u32 %v674, 7
  %v676 = vsub.s32 0, %v675
  %v677 = vrot.slane %v672, %v676
  %679 = vmatprep.subr.mxu0 0.0
  %680 = vmatpush1.msra.mxu0 %v640
  %681 = vmatprep.subr.mxu0 0.0
  %682 = vmatpush1.msra.mxu0 %v641
  %683 = vmatprep.subr.mxu0 0.0
  %684 = vmatpush1.msra.mxu0 %v642
  %685 = vmatprep.subr.mxu0 0.0
  %686 = vmatpush1.msra.mxu0 %v643
  %687 = vmatprep.subr.mxu0 0.0
  %688 = vmatpush1.msra.mxu0 %v644
  %689 = vmatprep.subr.mxu0 0.0
  %690 = vmatpush1.msra.mxu0 %v645
  %691 = vmatprep.subr.mxu0 0.0
  %692 = vmatpush1.msra.mxu0 %v646
  %693 = vmatprep.subr.mxu0 0.0
  %694 = vmatpush1.msra.mxu0 %v647
  %695 = vmatprep.subr.mxu0 0.0
  %696 = vmatpush1.msra.mxu0 %v648
  %697 = vmatprep.subr.mxu0 0.0
  %698 = vmatpush1.msra.mxu0 %v649
  %699 = vmatprep.subr.mxu0 0.0
  %700 = vmatpush1.msra.mxu0 %v650
  %701 = vmatprep.subr.mxu0 0.0
  %702 = vmatpush1.msra.mxu0 %v651
  %703 = vmatprep.subr.mxu0 0.0
  %704 = vmatpush1.msra.mxu0 %v652
  %705 = vmatprep.subr.mxu0 0.0
  %706 = vmatpush1.msra.mxu0 %v653
  %707 = vmatprep.subr.mxu0 0.0
  %708 = vmatpush1.msra.mxu0 %v654
  %709 = vmatprep.subr.mxu0 0.0
  %710 = vmatpush1.msra.mxu0 %v655
  %711 = vmatprep.subr.mxu0 0.0
  %712 = vmatpush1.msra.mxu0 %v656
  %713 = vmatprep.subr.mxu0 0.0
  %714 = vmatpush1.msra.mxu0 %v657
  %715 = vmatprep.subr.mxu0 0.0
  %716 = vmatpush1.msra.mxu0 %v658
  %717 = vmatprep.subr.mxu0 0.0
  %718 = vmatpush1.msra.mxu0 %v659
  %719 = vmatprep.subr.mxu0 0.0
  %720 = vmatpush1.msra.mxu0 %v660
  %721 = vmatprep.subr.mxu0 0.0
  %722 = vmatpush1.msra.mxu0 %v661
  %723 = vmatprep.subr.mxu0 0.0
  %724 = vmatpush1.msra.mxu0 %v662
  %725 = vmatprep.subr.mxu0 0.0
  %726 = vmatpush1.msra.mxu0 %v663
  %727 = vmatprep.subr.mxu0 0.0
  %728 = vmatpush1.msra.mxu0 %v664
  %729 = vmatprep.subr.mxu0 0.0
  %730 = vmatpush1.msra.mxu0 %v665
  %731 = vmatprep.subr.mxu0 0.0
  %732 = vmatpush1.msra.mxu0 %v666
  %733 = vmatprep.subr.mxu0 0.0
  %734 = vmatpush1.msra.mxu0 %v667
  %735 = vmatprep.subr.mxu0 0.0
  %736 = vmatpush1.msra.mxu0 %v668
  %737 = vmatprep.subr.mxu0 0.0
  %738 = vmatpush1.msra.mxu0 %v669
  %739 = vmatprep.subr.mxu0 0.0
  %740 = vmatpush1.msra.mxu0 %v670
  %741 = vmatprep.subr.mxu0 0.0
  %742 = vmatpush1.msra.mxu0 %v671
  %743 = vmatprep.mubr.f32.mxu0 %v639
  %744 = vmatmul.mubr.f32.gmra.mrb[0].mxu0 %v638
  %v745 = vpop.f32.mrb[0].mxu0
  %v746 = vadd.f32 %v677, %v745
  %v747 = vpop.f32.mrb[0].mxu0
  %748 = vdwg.mxu0
  %749 = vst [vmem:[%s6] sm:$0xff] %v746
  // Predicated region
  $region26: #{byol_forward.29} parent=0 // pred_check
    _
  $region27: #{byol_forward.29} parent=0 // pred_check_branch
    %751 = sbr.rel (0) target = $region29
  $region28: #{byol_forward.29} parent=0 // pred_region
    _
  $region29: #{byol_forward.29} parent=0 // pred_fallthru
    _
  // Predicated region
  $region30: #{byol_forward.29} parent=0 // pred_check
    _
  $region31: #{byol_forward.29} parent=0 // pred_check_branch
    %753 = sbr.rel (0) target = $region33
  $region32: #{byol_forward.29} parent=0 // pred_region
    _
  $region33: #{byol_forward.29} parent=0 // pred_fallthru
    _

// kernel: byol_forward.23
$region0: #{byol_forward.23}
  #allocation0 [shape = 'u32[]', space=smem, size = 0x4, offset = 0x4, fixed_abs, tag = 'smem constant byte address 0x4 - core index']
  #allocation1 [shape = 'u32[144,128]{1,0:T(1,128)}', space=vmem, size = 0x12000, scoped, tag = 'internal scratch']
  %s0 = inlined_call_operand.vmem [shape: f32[8,1024], index: 0, kind: input, shape index: {}]
  %s1 = inlined_call_operand.vmem [shape: f32[1024,256], index: 1, kind: input, shape index: {}]
  %s2 = inlined_call_operand.vmem [shape: f32[1,256], index: 2, kind: input, shape index: {}]
  %s3 = inlined_call_operand.vmem [shape: f32[1,256], index: 3, kind: input, shape index: {}]
  %s4 = inlined_call_operand.vmem [shape: f32[256,128], index: 4, kind: input, shape index: {}]
  %s5 = inlined_call_operand.vmem [shape: f32[1,128], index: 5, kind: input, shape index: {}]
  %s6 = inlined_call_operand.hbm [shape: f32[8,128], index: 6, kind: output, shape index: {}]
  %s7 = sld [smem:[#allocation0]]
  $region34: #{byol_forward.23} parent=0
    _
  %s9 = ssub.s32 1, %s7
  %s10 = scalar_select 0, %s9, %s7
  $region1: #{byol_forward.23} parent=0
    #allocation2 [shape = 'u8[4096]{0}', space=vmem, size = 0x1000, scoped, tag = 'output window, operand 0, single buffered']
    #allocation3 [shape = 's32[1]{0}', space=sflag, size = 0x4, scoped, tag = 'scoped memory for byol_forward.23']
    %11 = vsyncpa [#allocation3], 0
    // Predicated region
    $region2: #{byol_forward.23} parent=1 // pred_check
      _
    $region3: #{byol_forward.23} parent=1 // pred_check_branch
      %13 = sbr.rel (0) target = $region5
    $region4: #{byol_forward.23} parent=1 // pred_region
      _
    $region5: #{byol_forward.23} parent=1 // pred_fallthru
      _
    // Predicated region
    $region6: #{byol_forward.23} parent=1 // pred_check
      _
    $region7: #{byol_forward.23} parent=1 // pred_check_branch
      %15 = sbr.rel (0) target = $region9
    $region8: #{byol_forward.23} parent=1 // pred_region
      _
    $region9: #{byol_forward.23} parent=1 // pred_fallthru
      _
    // Predicated region
    $region10: #{byol_forward.23} parent=1 // pred_check
      _
    $region11: #{byol_forward.23} parent=1 // pred_check_branch
      %17 = sbr.rel (0) target = $region13
    $region12: #{byol_forward.23} parent=1 // pred_region
      _
    $region13: #{byol_forward.23} parent=1 // pred_fallthru
      _
    // Predicated region
    $region14: #{byol_forward.23} parent=1 // pred_check
      _
    $region15: #{byol_forward.23} parent=1 // pred_check_branch
      %19 = sbr.rel (0) target = $region17
    $region16: #{byol_forward.23} parent=1 // pred_region
      _
    $region17: #{byol_forward.23} parent=1 // pred_fallthru
      _
    // Predicated region
    $region18: #{byol_forward.23} parent=1 // pred_check
      _
    $region19: #{byol_forward.23} parent=1 // pred_check_branch
      %21 = sbr.rel (0) target = $region21
    $region20: #{byol_forward.23} parent=1 // pred_region
      _
    $region21: #{byol_forward.23} parent=1 // pred_fallthru
      _
    // Predicated region
    $region22: #{byol_forward.23} parent=1 // pred_check
      _
    $region23: #{byol_forward.23} parent=1 // pred_check_branch
      %23 = sbr.rel (0) target = $region25
    $region24: #{byol_forward.23} parent=1 // pred_region
      _
    $region25: #{byol_forward.23} parent=1 // pred_fallthru
      _
    %v24 = vld [vmem:[%s0] sm:$0xff]
    %v25 = vld [vmem:[%s0 + $0x8] sm:$0xff]
    %v26 = vld [vmem:[%s0 + $0x10] sm:$0xff]
    %v27 = vld [vmem:[%s0 + $0x18] sm:$0xff]
    %v28 = vld [vmem:[%s0 + $0x20] sm:$0xff]
    %v29 = vld [vmem:[%s0 + $0x28] sm:$0xff]
    %v30 = vld [vmem:[%s0 + $0x30] sm:$0xff]
    %v31 = vld [vmem:[%s0 + $0x38] sm:$0xff]
    %v32 = vld [vmem:[%s1] sm:$0xff]
    %v33 = vld [vmem:[%s1 + $0x8] sm:$0xff]
    %v34 = vld [vmem:[%s1 + $0x10] sm:$0xff]
    %v35 = vld [vmem:[%s1 + $0x18] sm:$0xff]
    %v36 = vld [vmem:[%s1 + $0x20] sm:$0xff]
    %v37 = vld [vmem:[%s1 + $0x28] sm:$0xff]
    %v38 = vld [vmem:[%s1 + $0x30] sm:$0xff]
    %v39 = vld [vmem:[%s1 + $0x38] sm:$0xff]
    %v40 = vld [vmem:[%s1 + $0x40] sm:$0xff]
    %v41 = vld [vmem:[%s1 + $0x48] sm:$0xff]
    %v42 = vld [vmem:[%s1 + $0x50] sm:$0xff]
    %v43 = vld [vmem:[%s1 + $0x58] sm:$0xff]
    %v44 = vld [vmem:[%s1 + $0x60] sm:$0xff]
    %v45 = vld [vmem:[%s1 + $0x68] sm:$0xff]
    %v46 = vld [vmem:[%s1 + $0x70] sm:$0xff]
    %v47 = vld [vmem:[%s1 + $0x78] sm:$0xff]
    %v48 = vld [vmem:[%s1 + $0x80] sm:$0xff]
    %v49 = vld [vmem:[%s1 + $0x88] sm:$0xff]
    %v50 = vld [vmem:[%s1 + $0x90] sm:$0xff]
    %v51 = vld [vmem:[%s1 + $0x98] sm:$0xff]
    %v52 = vld [vmem:[%s1 + $0xa0] sm:$0xff]
    %v53 = vld [vmem:[%s1 + $0xa8] sm:$0xff]
    %v54 = vld [vmem:[%s1 + $0xb0] sm:$0xff]
    %v55 = vld [vmem:[%s1 + $0xb8] sm:$0xff]
    %v56 = vld [vmem:[%s1 + $0xc0] sm:$0xff]
    %v57 = vld [vmem:[%s1 + $0xc8] sm:$0xff]
    %v58 = vld [vmem:[%s1 + $0xd0] sm:$0xff]
    %v59 = vld [vmem:[%s1 + $0xd8] sm:$0xff]
    %v60 = vld [vmem:[%s1 + $0xe0] sm:$0xff]
    %v61 = vld [vmem:[%s1 + $0xe8] sm:$0xff]
    %v62 = vld [vmem:[%s1 + $0xf0] sm:$0xff]
    %v63 = vld [vmem:[%s1 + $0xf8] sm:$0xff]
    %v64 = vld [vmem:[%s1 + $0x100] sm:$0xff]
    %v65 = vld [vmem:[%s1 + $0x108] sm:$0xff]
    %v66 = vld [vmem:[%s1 + $0x110] sm:$0xff]
    %v67 = vld [vmem:[%s1 + $0x118] sm:$0xff]
    %v68 = vld [vmem:[%s1 + $0x120] sm:$0xff]
    %v69 = vld [vmem:[%s1 + $0x128] sm:$0xff]
    %v70 = vld [vmem:[%s1 + $0x130] sm:$0xff]
    %v71 = vld [vmem:[%s1 + $0x138] sm:$0xff]
    %v72 = vld [vmem:[%s1 + $0x140] sm:$0xff]
    %v73 = vld [vmem:[%s1 + $0x148] sm:$0xff]
    %v74 = vld [vmem:[%s1 + $0x150] sm:$0xff]
    %v75 = vld [vmem:[%s1 + $0x158] sm:$0xff]
    %v76 = vld [vmem:[%s1 + $0x160] sm:$0xff]
    %v77 = vld [vmem:[%s1 + $0x168] sm:$0xff]
    %v78 = vld [vmem:[%s1 + $0x170] sm:$0xff]
    %v79 = vld [vmem:[%s1 + $0x178] sm:$0xff]
    %v80 = vld [vmem:[%s1 + $0x180] sm:$0xff]
    %v81 = vld [vmem:[%s1 + $0x188] sm:$0xff]
    %v82 = vld [vmem:[%s1 + $0x190] sm:$0xff]
    %v83 = vld [vmem:[%s1 + $0x198] sm:$0xff]
    %v84 = vld [vmem:[%s1 + $0x1a0] sm:$0xff]
    %v85 = vld [vmem:[%s1 + $0x1a8] sm:$0xff]
    %v86 = vld [vmem:[%s1 + $0x1b0] sm:$0xff]
    %v87 = vld [vmem:[%s1 + $0x1b8] sm:$0xff]
    %v88 = vld [vmem:[%s1 + $0x1c0] sm:$0xff]
    %v89 = vld [vmem:[%s1 + $0x1c8] sm:$0xff]
    %v90 = vld [vmem:[%s1 + $0x1d0] sm:$0xff]
    %v91 = vld [vmem:[%s1 + $0x1d8] sm:$0xff]
    %v92 = vld [vmem:[%s1 + $0x1e0] sm:$0xff]
    %v93 = vld [vmem:[%s1 + $0x1e8] sm:$0xff]
    %v94 = vld [vmem:[%s1 + $0x1f0] sm:$0xff]
    %v95 = vld [vmem:[%s1 + $0x1f8] sm:$0xff]
    %v96 = vld [vmem:[%s1 + $0x200] sm:$0xff]
    %v97 = vld [vmem:[%s1 + $0x208] sm:$0xff]
    %v98 = vld [vmem:[%s1 + $0x210] sm:$0xff]
    %v99 = vld [vmem:[%s1 + $0x218] sm:$0xff]
    %v100 = vld [vmem:[%s1 + $0x220] sm:$0xff]
    %v101 = vld [vmem:[%s1 + $0x228] sm:$0xff]
    %v102 = vld [vmem:[%s1 + $0x230] sm:$0xff]
    %v103 = vld [vmem:[%s1 + $0x238] sm:$0xff]
    %v104 = vld [vmem:[%s1 + $0x240] sm:$0xff]
    %v105 = vld [vmem:[%s1 + $0x248] sm:$0xff]
    %v106 = vld [vmem:[%s1 + $0x250] sm:$0xff]
    %v107 = vld [vmem:[%s1 + $0x258] sm:$0xff]
    %v108 = vld [vmem:[%s1 + $0x260] sm:$0xff]
    %v109 = vld [vmem:[%s1 + $0x268] sm:$0xff]
    %v110 = vld [vmem:[%s1 + $0x270] sm:$0xff]
    %v111 = vld [vmem:[%s1 + $0x278] sm:$0xff]
    %v112 = vld [vmem:[%s1 + $0x280] sm:$0xff]
    %v113 = vld [vmem:[%s1 + $0x288] sm:$0xff]
    %v114 = vld [vmem:[%s1 + $0x290] sm:$0xff]
    %v115 = vld [vmem:[%s1 + $0x298] sm:$0xff]
    %v116 = vld [vmem:[%s1 + $0x2a0] sm:$0xff]
    %v117 = vld [vmem:[%s1 + $0x2a8] sm:$0xff]
    %v118 = vld [vmem:[%s1 + $0x2b0] sm:$0xff]
    %v119 = vld [vmem:[%s1 + $0x2b8] sm:$0xff]
    %v120 = vld [vmem:[%s1 + $0x2c0] sm:$0xff]
    %v121 = vld [vmem:[%s1 + $0x2c8] sm:$0xff]
    %v122 = vld [vmem:[%s1 + $0x2d0] sm:$0xff]
    %v123 = vld [vmem:[%s1 + $0x2d8] sm:$0xff]
    %v124 = vld [vmem:[%s1 + $0x2e0] sm:$0xff]
    %v125 = vld [vmem:[%s1 + $0x2e8] sm:$0xff]
    %v126 = vld [vmem:[%s1 + $0x2f0] sm:$0xff]
    %v127 = vld [vmem:[%s1 + $0x2f8] sm:$0xff]
    %v128 = vld [vmem:[%s1 + $0x300] sm:$0xff]
    %v129 = vld [vmem:[%s1 + $0x308] sm:$0xff]
    %v130 = vld [vmem:[%s1 + $0x310] sm:$0xff]
    %v131 = vld [vmem:[%s1 + $0x318] sm:$0xff]
    %v132 = vld [vmem:[%s1 + $0x320] sm:$0xff]
    %v133 = vld [vmem:[%s1 + $0x328] sm:$0xff]
    %v134 = vld [vmem:[%s1 + $0x330] sm:$0xff]
    %v135 = vld [vmem:[%s1 + $0x338] sm:$0xff]
    %v136 = vld [vmem:[%s1 + $0x340] sm:$0xff]
    %v137 = vld [vmem:[%s1 + $0x348] sm:$0xff]
    %v138 = vld [vmem:[%s1 + $0x350] sm:$0xff]
    %v139 = vld [vmem:[%s1 + $0x358] sm:$0xff]
    %v140 = vld [vmem:[%s1 + $0x360] sm:$0xff]
    %v141 = vld [vmem:[%s1 + $0x368] sm:$0xff]
    %v142 = vld [vmem:[%s1 + $0x370] sm:$0xff]
    %v143 = vld [vmem:[%s1 + $0x378] sm:$0xff]
    %v144 = vld [vmem:[%s1 + $0x380] sm:$0xff]
    %v145 = vld [vmem:[%s1 + $0x388] sm:$0xff]
    %v146 = vld [vmem:[%s1 + $0x390] sm:$0xff]
    %v147 = vld [vmem:[%s1 + $0x398] sm:$0xff]
    %v148 = vld [vmem:[%s1 + $0x3a0] sm:$0xff]
    %v149 = vld [vmem:[%s1 + $0x3a8] sm:$0xff]
    %v150 = vld [vmem:[%s1 + $0x3b0] sm:$0xff]
    %v151 = vld [vmem:[%s1 + $0x3b8] sm:$0xff]
    %v152 = vld [vmem:[%s1 + $0x3c0] sm:$0xff]
    %v153 = vld [vmem:[%s1 + $0x3c8] sm:$0xff]
    %v154 = vld [vmem:[%s1 + $0x3d0] sm:$0xff]
    %v155 = vld [vmem:[%s1 + $0x3d8] sm:$0xff]
    %v156 = vld [vmem:[%s1 + $0x3e0] sm:$0xff]
    %v157 = vld [vmem:[%s1 + $0x3e8] sm:$0xff]
    %v158 = vld [vmem:[%s1 + $0x3f0] sm:$0xff]
    %v159 = vld [vmem:[%s1 + $0x3f8] sm:$0xff]
    %v160 = vld [vmem:[%s1 + $0x400] sm:$0xff]
    %v161 = vld [vmem:[%s1 + $0x408] sm:$0xff]
    %v162 = vld [vmem:[%s1 + $0x410] sm:$0xff]
    %v163 = vld [vmem:[%s1 + $0x418] sm:$0xff]
    %v164 = vld [vmem:[%s1 + $0x420] sm:$0xff]
    %v165 = vld [vmem:[%s1 + $0x428] sm:$0xff]
    %v166 = vld [vmem:[%s1 + $0x430] sm:$0xff]
    %v167 = vld [vmem:[%s1 + $0x438] sm:$0xff]
    %v168 = vld [vmem:[%s1 + $0x440] sm:$0xff]
    %v169 = vld [vmem:[%s1 + $0x448] sm:$0xff]
    %v170 = vld [vmem:[%s1 + $0x450] sm:$0xff]
    %v171 = vld [vmem:[%s1 + $0x458] sm:$0xff]
    %v172 = vld [vmem:[%s1 + $0x460] sm:$0xff]
    %v173 = vld [vmem:[%s1 + $0x468] sm:$0xff]
    %v174 = vld [vmem:[%s1 + $0x470] sm:$0xff]
    %v175 = vld [vmem:[%s1 + $0x478] sm:$0xff]
    %v176 = vld [vmem:[%s1 + $0x480] sm:$0xff]
    %v177 = vld [vmem:[%s1 + $0x488] sm:$0xff]
    %v178 = vld [vmem:[%s1 + $0x490] sm:$0xff]
    %v179 = vld [vmem:[%s1 + $0x498] sm:$0xff]
    %v180 = vld [vmem:[%s1 + $0x4a0] sm:$0xff]
    %v181 = vld [vmem:[%s1 + $0x4a8] sm:$0xff]
    %v182 = vld [vmem:[%s1 + $0x4b0] sm:$0xff]
    %v183 = vld [vmem:[%s1 + $0x4b8] sm:$0xff]
    %v184 = vld [vmem:[%s1 + $0x4c0] sm:$0xff]
    %v185 = vld [vmem:[%s1 + $0x4c8] sm:$0xff]
    %v186 = vld [vmem:[%s1 + $0x4d0] sm:$0xff]
    %v187 = vld [vmem:[%s1 + $0x4d8] sm:$0xff]
    %v188 = vld [vmem:[%s1 + $0x4e0] sm:$0xff]
    %v189 = vld [vmem:[%s1 + $0x4e8] sm:$0xff]
    %v190 = vld [vmem:[%s1 + $0x4f0] sm:$0xff]
    %v191 = vld [vmem:[%s1 + $0x4f8] sm:$0xff]
    %v192 = vld [vmem:[%s1 + $0x500] sm:$0xff]
    %v193 = vld [vmem:[%s1 + $0x508] sm:$0xff]
    %v194 = vld [vmem:[%s1 + $0x510] sm:$0xff]
    %v195 = vld [vmem:[%s1 + $0x518] sm:$0xff]
    %v196 = vld [vmem:[%s1 + $0x520] sm:$0xff]
    %v197 = vld [vmem:[%s1 + $0x528] sm:$0xff]
    %v198 = vld [vmem:[%s1 + $0x530] sm:$0xff]
    %v199 = vld [vmem:[%s1 + $0x538] sm:$0xff]
    %v200 = vld [vmem:[%s1 + $0x540] sm:$0xff]
    %v201 = vld [vmem:[%s1 + $0x548] sm:$0xff]
    %v202 = vld [vmem:[%s1 + $0x550] sm:$0xff]
    %v203 = vld [vmem:[%s1 + $0x558] sm:$0xff]
    %v204 = vld [vmem:[%s1 + $0x560] sm:$0xff]
    %v205 = vld [vmem:[%s1 + $0x568] sm:$0xff]
    %v206 = vld [vmem:[%s1 + $0x570] sm:$0xff]
    %v207 = vld [vmem:[%s1 + $0x578] sm:$0xff]
    %v208 = vld [vmem:[%s1 + $0x580] sm:$0xff]
    %v209 = vld [vmem:[%s1 + $0x588] sm:$0xff]
    %v210 = vld [vmem:[%s1 + $0x590] sm:$0xff]
    %v211 = vld [vmem:[%s1 + $0x598] sm:$0xff]
    %v212 = vld [vmem:[%s1 + $0x5a0] sm:$0xff]
    %v213 = vld [vmem:[%s1 + $0x5a8] sm:$0xff]
    %v214 = vld [vmem:[%s1 + $0x5b0] sm:$0xff]
    %v215 = vld [vmem:[%s1 + $0x5b8] sm:$0xff]
    %v216 = vld [vmem:[%s1 + $0x5c0] sm:$0xff]
    %v217 = vld [vmem:[%s1 + $0x5c8] sm:$0xff]
    %v218 = vld [vmem:[%s1 + $0x5d0] sm:$0xff]
    %v219 = vld [vmem:[%s1 + $0x5d8] sm:$0xff]
    %v220 = vld [vmem:[%s1 + $0x5e0] sm:$0xff]
    %v221 = vld [vmem:[%s1 + $0x5e8] sm:$0xff]
    %v222 = vld [vmem:[%s1 + $0x5f0] sm:$0xff]
    %v223 = vld [vmem:[%s1 + $0x5f8] sm:$0xff]
    %v224 = vld [vmem:[%s1 + $0x600] sm:$0xff]
    %v225 = vld [vmem:[%s1 + $0x608] sm:$0xff]
    %v226 = vld [vmem:[%s1 + $0x610] sm:$0xff]
    %v227 = vld [vmem:[%s1 + $0x618] sm:$0xff]
    %v228 = vld [vmem:[%s1 + $0x620] sm:$0xff]
    %v229 = vld [vmem:[%s1 + $0x628] sm:$0xff]
    %v230 = vld [vmem:[%s1 + $0x630] sm:$0xff]
    %v231 = vld [vmem:[%s1 + $0x638] sm:$0xff]
    %v232 = vld [vmem:[%s1 + $0x640] sm:$0xff]
    %v233 = vld [vmem:[%s1 + $0x648] sm:$0xff]
    %v234 = vld [vmem:[%s1 + $0x650] sm:$0xff]
    %v235 = vld [vmem:[%s1 + $0x658] sm:$0xff]
    %v236 = vld [vmem:[%s1 + $0x660] sm:$0xff]
    %v237 = vld [vmem:[%s1 + $0x668] sm:$0xff]
    %v238 = vld [vmem:[%s1 + $0x670] sm:$0xff]
    %v239 = vld [vmem:[%s1 + $0x678] sm:$0xff]
    %v240 = vld [vmem:[%s1 + $0x680] sm:$0xff]
    %v241 = vld [vmem:[%s1 + $0x688] sm:$0xff]
    %v242 = vld [vmem:[%s1 + $0x690] sm:$0xff]
    %v243 = vld [vmem:[%s1 + $0x698] sm:$0xff]
    %v244 = vld [vmem:[%s1 + $0x6a0] sm:$0xff]
    %v245 = vld [vmem:[%s1 + $0x6a8] sm:$0xff]
    %v246 = vld [vmem:[%s1 + $0x6b0] sm:$0xff]
    %v247 = vld [vmem:[%s1 + $0x6b8] sm:$0xff]
    %v248 = vld [vmem:[%s1 + $0x6c0] sm:$0xff]
    %v249 = vld [vmem:[%s1 + $0x6c8] sm:$0xff]
    %v250 = vld [vmem:[%s1 + $0x6d0] sm:$0xff]
    %v251 = vld [vmem:[%s1 + $0x6d8] sm:$0xff]
    %v252 = vld [vmem:[%s1 + $0x6e0] sm:$0xff]
    %v253 = vld [vmem:[%s1 + $0x6e8] sm:$0xff]
    %v254 = vld [vmem:[%s1 + $0x6f0] sm:$0xff]
    %v255 = vld [vmem:[%s1 + $0x6f8] sm:$0xff]
    %v256 = vld [vmem:[%s1 + $0x700] sm:$0xff]
    %v257 = vld [vmem:[%s1 + $0x708] sm:$0xff]
    %v258 = vld [vmem:[%s1 + $0x710] sm:$0xff]
    %v259 = vld [vmem:[%s1 + $0x718] sm:$0xff]
    %v260 = vld [vmem:[%s1 + $0x720] sm:$0xff]
    %v261 = vld [vmem:[%s1 + $0x728] sm:$0xff]
    %v262 = vld [vmem:[%s1 + $0x730] sm:$0xff]
    %v263 = vld [vmem:[%s1 + $0x738] sm:$0xff]
    %v264 = vld [vmem:[%s1 + $0x740] sm:$0xff]
    %v265 = vld [vmem:[%s1 + $0x748] sm:$0xff]
    %v266 = vld [vmem:[%s1 + $0x750] sm:$0xff]
    %v267 = vld [vmem:[%s1 + $0x758] sm:$0xff]
    %v268 = vld [vmem:[%s1 + $0x760] sm:$0xff]
    %v269 = vld [vmem:[%s1 + $0x768] sm:$0xff]
    %v270 = vld [vmem:[%s1 + $0x770] sm:$0xff]
    %v271 = vld [vmem:[%s1 + $0x778] sm:$0xff]
    %v272 = vld [vmem:[%s1 + $0x780] sm:$0xff]
    %v273 = vld [vmem:[%s1 + $0x788] sm:$0xff]
    %v274 = vld [vmem:[%s1 + $0x790] sm:$0xff]
    %v275 = vld [vmem:[%s1 + $0x798] sm:$0xff]
    %v276 = vld [vmem:[%s1 + $0x7a0] sm:$0xff]
    %v277 = vld [vmem:[%s1 + $0x7a8] sm:$0xff]
    %v278 = vld [vmem:[%s1 + $0x7b0] sm:$0xff]
    %v279 = vld [vmem:[%s1 + $0x7b8] sm:$0xff]
    %v280 = vld [vmem:[%s1 + $0x7c0] sm:$0xff]
    %v281 = vld [vmem:[%s1 + $0x7c8] sm:$0xff]
    %v282 = vld [vmem:[%s1 + $0x7d0] sm:$0xff]
    %v283 = vld [vmem:[%s1 + $0x7d8] sm:$0xff]
    %v284 = vld [vmem:[%s1 + $0x7e0] sm:$0xff]
    %v285 = vld [vmem:[%s1 + $0x7e8] sm:$0xff]
    %v286 = vld [vmem:[%s1 + $0x7f0] sm:$0xff]
    %v287 = vld [vmem:[%s1 + $0x7f8] sm:$0xff]
    %288 = vmatprep.subr.mxu0 %v33
    %289 = vmatpush1.msra.mxu0 %v32
    %290 = vmatprep.subr.mxu0 %v35
    %291 = vmatpush1.msra.mxu0 %v34
    %292 = vmatprep.subr.mxu0 %v37
    %293 = vmatpush1.msra.mxu0 %v36
    %294 = vmatprep.subr.mxu0 %v39
    %295 = vmatpush1.msra.mxu0 %v38
    %296 = vmatprep.subr.mxu0 %v41
    %297 = vmatpush1.msra.mxu0 %v40
    %298 = vmatprep.subr.mxu0 %v43
    %299 = vmatpush1.msra.mxu0 %v42
    %300 = vmatprep.subr.mxu0 %v45
    %301 = vmatpush1.msra.mxu0 %v44
    %302 = vmatprep.subr.mxu0 %v47
    %303 = vmatpush1.msra.mxu0 %v46
    %304 = vmatprep.subr.mxu0 %v49
    %305 = vmatpush1.msra.mxu0 %v48
    %306 = vmatprep.subr.mxu0 %v51
    %307 = vmatpush1.msra.mxu0 %v50
    %308 = vmatprep.subr.mxu0 %v53
    %309 = vmatpush1.msra.mxu0 %v52
    %310 = vmatprep.subr.mxu0 %v55
    %311 = vmatpush1.msra.mxu0 %v54
    %312 = vmatprep.subr.mxu0 %v57
    %313 = vmatpush1.msra.mxu0 %v56
    %314 = vmatprep.subr.mxu0 %v59
    %315 = vmatpush1.msra.mxu0 %v58
    %316 = vmatprep.subr.mxu0 %v61
    %317 = vmatpush1.msra.mxu0 %v60
    %318 = vmatprep.subr.mxu0 %v63
    %319 = vmatpush1.msra.mxu0 %v62
    %320 = vmatprep.subr.mxu0 %v65
    %321 = vmatpush1.msra.mxu0 %v64
    %322 = vmatprep.subr.mxu0 %v67
    %323 = vmatpush1.msra.mxu0 %v66
    %324 = vmatprep.subr.mxu0 %v69
    %325 = vmatpush1.msra.mxu0 %v68
    %326 = vmatprep.subr.mxu0 %v71
    %327 = vmatpush1.msra.mxu0 %v70
    %328 = vmatprep.subr.mxu0 %v73
    %329 = vmatpush1.msra.mxu0 %v72
    %330 = vmatprep.subr.mxu0 %v75
    %331 = vmatpush1.msra.mxu0 %v74
    %332 = vmatprep.subr.mxu0 %v77
    %333 = vmatpush1.msra.mxu0 %v76
    %334 = vmatprep.subr.mxu0 %v79
    %335 = vmatpush1.msra.mxu0 %v78
    %336 = vmatprep.subr.mxu0 %v81
    %337 = vmatpush1.msra.mxu0 %v80
    %338 = vmatprep.subr.mxu0 %v83
    %339 = vmatpush1.msra.mxu0 %v82
    %340 = vmatprep.subr.mxu0 %v85
    %341 = vmatpush1.msra.mxu0 %v84
    %342 = vmatprep.subr.mxu0 %v87
    %343 = vmatpush1.msra.mxu0 %v86
    %344 = vmatprep.subr.mxu0 %v89
    %345 = vmatpush1.msra.mxu0 %v88
    %346 = vmatprep.subr.mxu0 %v91
    %347 = vmatpush1.msra.mxu0 %v90
    %348 = vmatprep.subr.mxu0 %v93
    %349 = vmatpush1.msra.mxu0 %v92
    %350 = vmatprep.subr.mxu0 %v95
    %351 = vmatpush1.msra.mxu0 %v94
    %352 = vmatprep.mubr.f32.mxu0 %v25
    %353 = vmatmul.mubr.f32.gmra.mrb[0].mxu0 %v24
    %v354 = vpop.f32.mrb[0].mxu0
    %v355 = vadd.f32 0.0, %v354
    %v356 = vpop.f32.mrb[0].mxu0
    %v357 = vadd.f32 0.0, %v356
    %358 = vdwg.mxu0
    %359 = vmatprep.subr.mxu0 %v97
    %360 = vmatpush1.msra.mxu0 %v96
    %361 = vmatprep.subr.mxu0 %v99
    %362 = vmatpush1.msra.mxu0 %v98
    %363 = vmatprep.subr.mxu0 %v101
    %364 = vmatpush1.msra.mxu0 %v100
    %365 = vmatprep.subr.mxu0 %v103
    %366 = vmatpush1.msra.mxu0 %v102
    %367 = vmatprep.subr.mxu0 %v105
    %368 = vmatpush1.msra.mxu0 %v104
    %369 = vmatprep.subr.mxu0 %v107
    %370 = vmatpush1.msra.mxu0 %v106
    %371 = vmatprep.subr.mxu0 %v109
    %372 = vmatpush1.msra.mxu0 %v108
    %373 = vmatprep.subr.mxu0 %v111
    %374 = vmatpush1.msra.mxu0 %v110
    %375 = vmatprep.subr.mxu0 %v113
    %376 = vmatpush1.msra.mxu0 %v112
    %377 = vmatprep.subr.mxu0 %v115
    %378 = vmatpush1.msra.mxu0 %v114
    %379 = vmatprep.subr.mxu0 %v117
    %380 = vmatpush1.msra.mxu0 %v116
    %381 = vmatprep.subr.mxu0 %v119
    %382 = vmatpush1.msra.mxu0 %v118
    %383 = vmatprep.subr.mxu0 %v121
    %384 = vmatpush1.msra.mxu0 %v120
    %385 = vmatprep.subr.mxu0 %v123
    %386 = vmatpush1.msra.mxu0 %v122
    %387 = vmatprep.subr.mxu0 %v125
    %388 = vmatpush1.msra.mxu0 %v124
    %389 = vmatprep.subr.mxu0 %v127
    %390 = vmatpush1.msra.mxu0 %v126
    %391 = vmatprep.subr.mxu0 %v129
    %392 = vmatpush1.msra.mxu0 %v128
    %393 = vmatprep.subr.mxu0 %v131
    %394 = vmatpush1.msra.mxu0 %v130
    %395 = vmatprep.subr.mxu0 %v133
    %396 = vmatpush1.msra.mxu0 %v132
    %397 = vmatprep.subr.mxu0 %v135
    %398 = vmatpush1.msra.mxu0 %v134
    %399 = vmatprep.subr.mxu0 %v137
    %400 = vmatpush1.msra.mxu0 %v136
    %401 = vmatprep.subr.mxu0 %v139
    %402 = vmatpush1.msra.mxu0 %v138
    %403 = vmatprep.subr.mxu0 %v141
    %404 = vmatpush1.msra.mxu0 %v140
    %405 = vmatprep.subr.mxu0 %v143
    %406 = vmatpush1.msra.mxu0 %v142
    %407 = vmatprep.subr.mxu0 %v145
    %408 = vmatpush1.msra.mxu0 %v144
    %409 = vmatprep.subr.mxu0 %v147
    %410 = vmatpush1.msra.mxu0 %v146
    %411 = vmatprep.subr.mxu0 %v149
    %412 = vmatpush1.msra.mxu0 %v148
    %413 = vmatprep.subr.mxu0 %v151
    %414 = vmatpush1.msra.mxu0 %v150
    %415 = vmatprep.subr.mxu0 %v153
    %416 = vmatpush1.msra.mxu0 %v152
    %417 = vmatprep.subr.mxu0 %v155
    %418 = vmatpush1.msra.mxu0 %v154
    %419 = vmatprep.subr.mxu0 %v157
    %420 = vmatpush1.msra.mxu0 %v156
    %421 = vmatprep.subr.mxu0 %v159
    %422 = vmatpush1.msra.mxu0 %v158
    %423 = vmatprep.mubr.f32.mxu0 %v27
    %424 = vmatmul.mubr.f32.gmra.mrb[0].mxu0 %v26
    %v425 = vpop.f32.mrb[0].mxu0
    %v426 = vadd.f32 %v355, %v425
    %v427 = vpop.f32.mrb[0].mxu0
    %v428 = vadd.f32 %v357, %v427
    %429 = vdwg.mxu0
    %430 = vmatprep.subr.mxu0 %v161
    %431 = vmatpush1.msra.mxu0 %v160
    %432 = vmatprep.subr.mxu0 %v163
    %433 = vmatpush1.msra.mxu0 %v162
    %434 = vmatprep.subr.mxu0 %v165
    %435 = vmatpush1.msra.mxu0 %v164
    %436 = vmatprep.subr.mxu0 %v167
    %437 = vmatpush1.msra.mxu0 %v166
    %438 = vmatprep.subr.mxu0 %v169
    %439 = vmatpush1.msra.mxu0 %v168
    %440 = vmatprep.subr.mxu0 %v171
    %441 = vmatpush1.msra.mxu0 %v170
    %442 = vmatprep.subr.mxu0 %v173
    %443 = vmatpush1.msra.mxu0 %v172
    %444 = vmatprep.subr.mxu0 %v175
    %445 = vmatpush1.msra.mxu0 %v174
    %446 = vmatprep.subr.mxu0 %v177
    %447 = vmatpush1.msra.mxu0 %v176
    %448 = vmatprep.subr.mxu0 %v179
    %449 = vmatpush1.msra.mxu0 %v178
    %450 = vmatprep.subr.mxu0 %v181
    %451 = vmatpush1.msra.mxu0 %v180
    %452 = vmatprep.subr.mxu0 %v183
    %453 = vmatpush1.msra.mxu0 %v182
    %454 = vmatprep.subr.mxu0 %v185
    %455 = vmatpush1.msra.mxu0 %v184
    %456 = vmatprep.subr.mxu0 %v187
    %457 = vmatpush1.msra.mxu0 %v186
    %458 = vmatprep.subr.mxu0 %v189
    %459 = vmatpush1.msra.mxu0 %v188
    %460 = vmatprep.subr.mxu0 %v191
    %461 = vmatpush1.msra.mxu0 %v190
    %462 = vmatprep.subr.mxu0 %v193
    %463 = vmatpush1.msra.mxu0 %v192
    %464 = vmatprep.subr.mxu0 %v195
    %465 = vmatpush1.msra.mxu0 %v194
    %466 = vmatprep.subr.mxu0 %v197
    %467 = vmatpush1.msra.mxu0 %v196
    %468 = vmatprep.subr.mxu0 %v199
    %469 = vmatpush1.msra.mxu0 %v198
    %470 = vmatprep.subr.mxu0 %v201
    %471 = vmatpush1.msra.mxu0 %v200
    %472 = vmatprep.subr.mxu0 %v203
    %473 = vmatpush1.msra.mxu0 %v202
    %474 = vmatprep.subr.mxu0 %v205
    %475 = vmatpush1.msra.mxu0 %v204
    %476 = vmatprep.subr.mxu0 %v207
    %477 = vmatpush1.msra.mxu0 %v206
    %478 = vmatprep.subr.mxu0 %v209
    %479 = vmatpush1.msra.mxu0 %v208
    %480 = vmatprep.subr.mxu0 %v211
    %481 = vmatpush1.msra.mxu0 %v210
    %482 = vmatprep.subr.mxu0 %v213
    %483 = vmatpush1.msra.mxu0 %v212
    %484 = vmatprep.subr.mxu0 %v215
    %485 = vmatpush1.msra.mxu0 %v214
    %486 = vmatprep.subr.mxu0 %v217
    %487 = vmatpush1.msra.mxu0 %v216
    %488 = vmatprep.subr.mxu0 %v219
    %489 = vmatpush1.msra.mxu0 %v218
    %490 = vmatprep.subr.mxu0 %v221
    %491 = vmatpush1.msra.mxu0 %v220
    %492 = vmatprep.subr.mxu0 %v223
    %493 = vmatpush1.msra.mxu0 %v222
    %494 = vmatprep.mubr.f32.mxu0 %v29
    %495 = vmatmul.mubr.f32.gmra.mrb[0].mxu0 %v28
    %v496 = vpop.f32.mrb[0].mxu0
    %v497 = vadd.f32 %v426, %v496
    %v498 = vpop.f32.mrb[0].mxu0
    %v499 = vadd.f32 %v428, %v498
    %500 = vdwg.mxu0
    %501 = vmatprep.subr.mxu0 %v225
    %502 = vmatpush1.msra.mxu0 %v224
    %503 = vmatprep.subr.mxu0 %v227
    %504 = vmatpush1.msra.mxu0 %v226
    %505 = vmatprep.subr.mxu0 %v229
    %506 = vmatpush1.msra.mxu0 %v228
    %507 = vmatprep.subr.mxu0 %v231
    %508 = vmatpush1.msra.mxu0 %v230
    %509 = vmatprep.subr.mxu0 %v233
    %510 = vmatpush1.msra.mxu0 %v232
    %511 = vmatprep.subr.mxu0 %v235
    %512 = vmatpush1.msra.mxu0 %v234
    %513 = vmatprep.subr.mxu0 %v237
    %514 = vmatpush1.msra.mxu0 %v236
    %515 = vmatprep.subr.mxu0 %v239
    %516 = vmatpush1.msra.mxu0 %v238
    %517 = vmatprep.subr.mxu0 %v241
    %518 = vmatpush1.msra.mxu0 %v240
    %519 = vmatprep.subr.mxu0 %v243
    %520 = vmatpush1.msra.mxu0 %v242
    %521 = vmatprep.subr.mxu0 %v245
    %522 = vmatpush1.msra.mxu0 %v244
    %523 = vmatprep.subr.mxu0 %v247
    %524 = vmatpush1.msra.mxu0 %v246
    %525 = vmatprep.subr.mxu0 %v249
    %526 = vmatpush1.msra.mxu0 %v248
    %527 = vmatprep.subr.mxu0 %v251
    %528 = vmatpush1.msra.mxu0 %v250
    %529 = vmatprep.subr.mxu0 %v253
    %530 = vmatpush1.msra.mxu0 %v252
    %531 = vmatprep.subr.mxu0 %v255
    %532 = vmatpush1.msra.mxu0 %v254
    %533 = vmatprep.subr.mxu0 %v257
    %534 = vmatpush1.msra.mxu0 %v256
    %535 = vmatprep.subr.mxu0 %v259
    %536 = vmatpush1.msra.mxu0 %v258
    %537 = vmatprep.subr.mxu0 %v261
    %538 = vmatpush1.msra.mxu0 %v260
    %539 = vmatprep.subr.mxu0 %v263
    %540 = vmatpush1.msra.mxu0 %v262
    %541 = vmatprep.subr.mxu0 %v265
    %542 = vmatpush1.msra.mxu0 %v264
    %543 = vmatprep.subr.mxu0 %v267
    %544 = vmatpush1.msra.mxu0 %v266
    %545 = vmatprep.subr.mxu0 %v269
    %546 = vmatpush1.msra.mxu0 %v268
    %547 = vmatprep.subr.mxu0 %v271
    %548 = vmatpush1.msra.mxu0 %v270
    %549 = vmatprep.subr.mxu0 %v273
    %550 = vmatpush1.msra.mxu0 %v272
    %551 = vmatprep.subr.mxu0 %v275
    %552 = vmatpush1.msra.mxu0 %v274
    %553 = vmatprep.subr.mxu0 %v277
    %554 = vmatpush1.msra.mxu0 %v276
    %555 = vmatprep.subr.mxu0 %v279
    %556 = vmatpush1.msra.mxu0 %v278
    %557 = vmatprep.subr.mxu0 %v281
    %558 = vmatpush1.msra.mxu0 %v280
    %559 = vmatprep.subr.mxu0 %v283
    %560 = vmatpush1.msra.mxu0 %v282
    %561 = vmatprep.subr.mxu0 %v285
    %562 = vmatpush1.msra.mxu0 %v284
    %563 = vmatprep.subr.mxu0 %v287
    %564 = vmatpush1.msra.mxu0 %v286
    %565 = vmatprep.mubr.f32.mxu0 %v31
    %566 = vmatmul.mubr.f32.gmra.mrb[0].mxu0 %v30
    %v567 = vpop.f32.mrb[0].mxu0
    %v568 = vadd.f32 %v497, %v567
    %v569 = vpop.f32.mrb[0].mxu0
    %v570 = vadd.f32 %v499, %v569
    %571 = vdwg.mxu0
    %v572 = vrot.slane %v568, 4
    %v573 = vadd.f32 %v568, %v572
    %v574 = vrot.slane %v573, 2
    %v575 = vadd.f32 %v573, %v574
    %v576 = vrot.slane %v575, 1
    %v577 = vadd.f32 %v575, %v576
    %v578 = vrot.slane %v570, 4
    %v579 = vadd.f32 %v570, %v578
    %v580 = vrot.slane %v579, 2
    %v581 = vadd.f32 %v579, %v580
    %v582 = vrot.slane %v581, 1
    %v583 = vadd.f32 %v581, %v582
    %v584 = vrcp.pop 8.0
    %v585 = vmul.f32 %v577, %v584
    %v586 = vmul.f32 %v583, %v584
    %v587 = vsub.f32 %v568, %v585
    %v588 = vsub.f32 %v570, %v586
    %v589 = vmul.f32 %v587, %v587
    %v590 = vmul.f32 %v588, %v588
    %v591 = vrot.slane %v589, 4
    %v592 = vadd.f32 %v589, %v591
    %v593 = vrot.slane %v592, 2
    %v594 = vadd.f32 %v592, %v593
    %v595 = vrot.slane %v594, 1
    %v596 = vadd.f32 %v594, %v595
    %v597 = vrot.slane %v590, 4
    %v598 = vadd.f32 %v590, %v597
    %v599 = vrot.slane %v598, 2
    %v600 = vadd.f32 %v598, %v599
    %v601 = vrot.slane %v600, 1
    %v602 = vadd.f32 %v600, %v601
    %v603 = vmul.f32 %v596, %v584
    %v604 = vmul.f32 %v602, %v584
    %v605 = vadd.f32 %v603, 1e-05
    %v606 = vadd.f32 %v604, 1e-05
    %v607 = vrsqrt.pop %v605
    %v608 = vrsqrt.pop %v606
    %v609 = vmul.f32 %v587, %v607
    %v610 = vmul.f32 %v588, %v608
    %v611 = vld [vmem:[%s2] sm:$0x3]
    %v613 = vlaneseq
    %v614 = vshrl.u32 %v613, 7
    %v615 = vsub.s32 0, %v614
    %v616 = vrot.slane %v611, %v615
    %v617 = vlaneseq
    %v618 = vshrl.u32 %v617, 7
    %v619 = vsub.s32 1, %v618
    %v620 = vrot.slane %v611, %v619
    %v623 = vmul.f32 %v609, %v616
    %v624 = vmul.f32 %v610, %v620
    %v625 = vld [vmem:[%s3] sm:$0x3]
    %v627 = vlaneseq
    %v628 = vshrl.u32 %v627, 7
    %v629 = vsub.s32 0, %v628
    %v630 = vrot.slane %v625, %v629
    %v631 = vlaneseq
    %v632 = vshrl.u32 %v631, 7
    %v633 = vsub.s32 1, %v632
    %v634 = vrot.slane %v625, %v633
    %v637 = vadd.f32 %v623, %v630
    %v638 = vadd.f32 %v624, %v634
    %v639 = vmax.f32 %v637, 0.0
    %v640 = vmax.f32 %v638, 0.0
    %v641 = vld [vmem:[%s4] sm:$0xff]
    %v642 = vld [vmem:[%s4 + $0x8] sm:$0xff]
    %v643 = vld [vmem:[%s4 + $0x10] sm:$0xff]
    %v644 = vld [vmem:[%s4 + $0x18] sm:$0xff]
    %v645 = vld [vmem:[%s4 + $0x20] sm:$0xff]
    %v646 = vld [vmem:[%s4 + $0x28] sm:$0xff]
    %v647 = vld [vmem:[%s4 + $0x30] sm:$0xff]
    %v648 = vld [vmem:[%s4 + $0x38] sm:$0xff]
    %v649 = vld [vmem:[%s4 + $0x40] sm:$0xff]
    %v650 = vld [vmem:[%s4 + $0x48] sm:$0xff]
    %v651 = vld [vmem:[%s4 + $0x50] sm:$0xff]
    %v652 = vld [vmem:[%s4 + $0x58] sm:$0xff]
    %v653 = vld [vmem:[%s4 + $0x60] sm:$0xff]
    %v654 = vld [vmem:[%s4 + $0x68] sm:$0xff]
    %v655 = vld [vmem:[%s4 + $0x70] sm:$0xff]
    %v656 = vld [vmem:[%s4 + $0x78] sm:$0xff]
    %v657 = vld [vmem:[%s4 + $0x80] sm:$0xff]
    %v658 = vld [vmem:[%s4 + $0x88] sm:$0xff]
    %v659 = vld [vmem:[%s4 + $0x90] sm:$0xff]
    %v660 = vld [vmem:[%s4 + $0x98] sm:$0xff]
    %v661 = vld [vmem:[%s4 + $0xa0] sm:$0xff]
    %v662 = vld [vmem:[%s4 + $0xa8] sm:$0xff]
    %v663 = vld [vmem:[%s4 + $0xb0] sm:$0xff]
    %v664 = vld [vmem:[%s4 + $0xb8] sm:$0xff]
    %v665 = vld [vmem:[%s4 + $0xc0] sm:$0xff]
    %v666 = vld [vmem:[%s4 + $0xc8] sm:$0xff]
    %v667 = vld [vmem:[%s4 + $0xd0] sm:$0xff]
    %v668 = vld [vmem:[%s4 + $0xd8] sm:$0xff]
    %v669 = vld [vmem:[%s4 + $0xe0] sm:$0xff]
    %v670 = vld [vmem:[%s4 + $0xe8] sm:$0xff]
    %v671 = vld [vmem:[%s4 + $0xf0] sm:$0xff]
    %v672 = vld [vmem:[%s4 + $0xf8] sm:$0xff]
    %v673 = vld [vmem:[%s5] sm:$0x1]
    %v675 = vlaneseq
    %v676 = vshrl.u32 %v675, 7
    %v677 = vsub.s32 0, %v676
    %v678 = vrot.slane %v673, %v677
    %680 = vmatprep.subr.mxu0 0.0
    %681 = vmatpush1.msra.mxu0 %v641
    %682 = vmatprep.subr.mxu0 0.0
    %683 = vmatpush1.msra.mxu0 %v642
    %684 = vmatprep.subr.mxu0 0.0
    %685 = vmatpush1.msra.mxu0 %v643
    %686 = vmatprep.subr.mxu0 0.0
    %687 = vmatpush1.msra.mxu0 %v644
    %688 = vmatprep.subr.mxu0 0.0
    %689 = vmatpush1.msra.mxu0 %v645
    %690 = vmatprep.subr.mxu0 0.0
    %691 = vmatpush1.msra.mxu0 %v646
    %692 = vmatprep.subr.mxu0 0.0
    %693 = vmatpush1.msra.mxu0 %v647
    %694 = vmatprep.subr.mxu0 0.0
    %695 = vmatpush1.msra.mxu0 %v648
    %696 = vmatprep.subr.mxu0 0.0
    %697 = vmatpush1.msra.mxu0 %v649
    %698 = vmatprep.subr.mxu0 0.0
    %699 = vmatpush1.msra.mxu0 %v650
    %700 = vmatprep.subr.mxu0 0.0
    %701 = vmatpush1.msra.mxu0 %v651
    %702 = vmatprep.subr.mxu0 0.0
    %703 = vmatpush1.msra.mxu0 %v652
    %704 = vmatprep.subr.mxu0 0.0
    %705 = vmatpush1.msra.mxu0 %v653
    %706 = vmatprep.subr.mxu0 0.0
    %707 = vmatpush1.msra.mxu0 %v654
    %708 = vmatprep.subr.mxu0 0.0
    %709 = vmatpush1.msra.mxu0 %v655
    %710 = vmatprep.subr.mxu0 0.0
    %711 = vmatpush1.msra.mxu0 %v656
    %712 = vmatprep.subr.mxu0 0.0
    %713 = vmatpush1.msra.mxu0 %v657
    %714 = vmatprep.subr.mxu0 0.0
    %715 = vmatpush1.msra.mxu0 %v658
    %716 = vmatprep.subr.mxu0 0.0
    %717 = vmatpush1.msra.mxu0 %v659
    %718 = vmatprep.subr.mxu0 0.0
    %719 = vmatpush1.msra.mxu0 %v660
    %720 = vmatprep.subr.mxu0 0.0
    %721 = vmatpush1.msra.mxu0 %v661
    %722 = vmatprep.subr.mxu0 0.0
    %723 = vmatpush1.msra.mxu0 %v662
    %724 = vmatprep.subr.mxu0 0.0
    %725 = vmatpush1.msra.mxu0 %v663
    %726 = vmatprep.subr.mxu0 0.0
    %727 = vmatpush1.msra.mxu0 %v664
    %728 = vmatprep.subr.mxu0 0.0
    %729 = vmatpush1.msra.mxu0 %v665
    %730 = vmatprep.subr.mxu0 0.0
    %731 = vmatpush1.msra.mxu0 %v666
    %732 = vmatprep.subr.mxu0 0.0
    %733 = vmatpush1.msra.mxu0 %v667
    %734 = vmatprep.subr.mxu0 0.0
    %735 = vmatpush1.msra.mxu0 %v668
    %736 = vmatprep.subr.mxu0 0.0
    %737 = vmatpush1.msra.mxu0 %v669
    %738 = vmatprep.subr.mxu0 0.0
    %739 = vmatpush1.msra.mxu0 %v670
    %740 = vmatprep.subr.mxu0 0.0
    %741 = vmatpush1.msra.mxu0 %v671
    %742 = vmatprep.subr.mxu0 0.0
    %743 = vmatpush1.msra.mxu0 %v672
    %744 = vmatprep.mubr.f32.mxu0 %v640
    %745 = vmatmul.mubr.f32.gmra.mrb[0].mxu0 %v639
    %v746 = vpop.f32.mrb[0].mxu0
    %v747 = vadd.f32 %v678, %v746
    %v748 = vpop.f32.mrb[0].mxu0
    %749 = vdwg.mxu0
    %750 = vst [vmem:[#allocation2] sm:$0xff] %v747
    // Predicated region
    $region26: #{byol_forward.23} parent=1 // pred_check
      _
    $region27: #{byol_forward.23} parent=1 // pred_check_branch
      %752 = sbr.rel (0) target = $region29
    $region28: #{byol_forward.23} parent=1 // pred_region
      %s754 = ssub.s32 128, 128
      %755 = vsyncadd [#allocation3], %s754
      %s757 = sshll.u32 [#allocation2], 4
      %s758 = int_to_ptr.vmem [resolvable:$true] %s757
      %760 = dma.vmem_to_hbm [thread:$0]  %s758, 128, %s6, [#allocation3]
    $region29: #{byol_forward.23} parent=1 // pred_fallthru
      _
    // Predicated region
    $region30: #{byol_forward.23} parent=1 // pred_check
      _
    $region31: #{byol_forward.23} parent=1 // pred_check_branch
      %762 = sbr.rel (0) target = $region33
    $region32: #{byol_forward.23} parent=1 // pred_region
      %763 = dma.done [#allocation3], 128
    $region33: #{byol_forward.23} parent=1 // pred_fallthru
      _
    %764 = vsyncpa [#allocation3], 1

// kernel: byol_forward.19
$region0: #{byol_forward.19}
  #allocation0 [shape = 'u32[]', space=smem, size = 0x4, offset = 0x4, fixed_abs, tag = 'smem constant byte address 0x4 - core index']
  #allocation1 [shape = 'u32[144,128]{1,0:T(1,128)}', space=vmem, size = 0x12000, scoped, tag = 'internal scratch']
  %s0 = inlined_call_operand.vmem [shape: f32[1024,256], index: 0, kind: input, shape index: {}]
  %s1 = inlined_call_operand.vmem [shape: f32[1024,256], index: 1, kind: input, shape index: {}]
  %s2 = inlined_call_operand.vmem [shape: f32[1024,256], index: 2, kind: output, shape index: {}]
  %s3 = sld [smem:[#allocation0]]
  $region18: #{byol_forward.19} parent=0
    _
  %s5 = ssub.s32 1, %s3
  %s6 = scalar_select 0, %s5, %s3
  // Predicated region
  $region2: #{byol_forward.19} parent=0 // pred_check
    _
  $region3: #{byol_forward.19} parent=0 // pred_check_branch
    %8 = sbr.rel (0) target = $region5
  $region4: #{byol_forward.19} parent=0 // pred_region
    _
  $region5: #{byol_forward.19} parent=0 // pred_fallthru
    _
  // Predicated region
  $region6: #{byol_forward.19} parent=0 // pred_check
    _
  $region7: #{byol_forward.19} parent=0 // pred_check_branch
    %10 = sbr.rel (0) target = $region9
  $region8: #{byol_forward.19} parent=0 // pred_region
    _
  $region9: #{byol_forward.19} parent=0 // pred_fallthru
    _
  %v11 = vld [vmem:[%s0] sm:$0xff]
  %v12 = vld [vmem:[%s0 + $0x8] sm:$0xff]
  %v13 = vld [vmem:[%s0 + $0x10] sm:$0xff]
  %v14 = vld [vmem:[%s0 + $0x18] sm:$0xff]
  %v15 = vld [vmem:[%s0 + $0x20] sm:$0xff]
  %v16 = vld [vmem:[%s0 + $0x28] sm:$0xff]
  %v17 = vld [vmem:[%s0 + $0x30] sm:$0xff]
  %v18 = vld [vmem:[%s0 + $0x38] sm:$0xff]
  %v19 = vld [vmem:[%s0 + $0x40] sm:$0xff]
  %v20 = vld [vmem:[%s0 + $0x48] sm:$0xff]
  %v21 = vld [vmem:[%s0 + $0x50] sm:$0xff]
  %v22 = vld [vmem:[%s0 + $0x58] sm:$0xff]
  %v23 = vld [vmem:[%s0 + $0x60] sm:$0xff]
  %v24 = vld [vmem:[%s0 + $0x68] sm:$0xff]
  %v25 = vld [vmem:[%s0 + $0x70] sm:$0xff]
  %v26 = vld [vmem:[%s0 + $0x78] sm:$0xff]
  %v27 = vld [vmem:[%s0 + $0x80] sm:$0xff]
  %v28 = vld [vmem:[%s0 + $0x88] sm:$0xff]
  %v29 = vld [vmem:[%s0 + $0x90] sm:$0xff]
  %v30 = vld [vmem:[%s0 + $0x98] sm:$0xff]
  %v31 = vld [vmem:[%s0 + $0xa0] sm:$0xff]
  %v32 = vld [vmem:[%s0 + $0xa8] sm:$0xff]
  %v33 = vld [vmem:[%s0 + $0xb0] sm:$0xff]
  %v34 = vld [vmem:[%s0 + $0xb8] sm:$0xff]
  %v35 = vld [vmem:[%s0 + $0xc0] sm:$0xff]
  %v36 = vld [vmem:[%s0 + $0xc8] sm:$0xff]
  %v37 = vld [vmem:[%s0 + $0xd0] sm:$0xff]
  %v38 = vld [vmem:[%s0 + $0xd8] sm:$0xff]
  %v39 = vld [vmem:[%s0 + $0xe0] sm:$0xff]
  %v40 = vld [vmem:[%s0 + $0xe8] sm:$0xff]
  %v41 = vld [vmem:[%s0 + $0xf0] sm:$0xff]
  %v42 = vld [vmem:[%s0 + $0xf8] sm:$0xff]
  %v43 = vld [vmem:[%s0 + $0x100] sm:$0xff]
  %v44 = vld [vmem:[%s0 + $0x108] sm:$0xff]
  %v45 = vld [vmem:[%s0 + $0x110] sm:$0xff]
  %v46 = vld [vmem:[%s0 + $0x118] sm:$0xff]
  %v47 = vld [vmem:[%s0 + $0x120] sm:$0xff]
  %v48 = vld [vmem:[%s0 + $0x128] sm:$0xff]
  %v49 = vld [vmem:[%s0 + $0x130] sm:$0xff]
  %v50 = vld [vmem:[%s0 + $0x138] sm:$0xff]
  %v51 = vld [vmem:[%s0 + $0x140] sm:$0xff]
  %v52 = vld [vmem:[%s0 + $0x148] sm:$0xff]
  %v53 = vld [vmem:[%s0 + $0x150] sm:$0xff]
  %v54 = vld [vmem:[%s0 + $0x158] sm:$0xff]
  %v55 = vld [vmem:[%s0 + $0x160] sm:$0xff]
  %v56 = vld [vmem:[%s0 + $0x168] sm:$0xff]
  %v57 = vld [vmem:[%s0 + $0x170] sm:$0xff]
  %v58 = vld [vmem:[%s0 + $0x178] sm:$0xff]
  %v59 = vld [vmem:[%s0 + $0x180] sm:$0xff]
  %v60 = vld [vmem:[%s0 + $0x188] sm:$0xff]
  %v61 = vld [vmem:[%s0 + $0x190] sm:$0xff]
  %v62 = vld [vmem:[%s0 + $0x198] sm:$0xff]
  %v63 = vld [vmem:[%s0 + $0x1a0] sm:$0xff]
  %v64 = vld [vmem:[%s0 + $0x1a8] sm:$0xff]
  %v65 = vld [vmem:[%s0 + $0x1b0] sm:$0xff]
  %v66 = vld [vmem:[%s0 + $0x1b8] sm:$0xff]
  %v67 = vld [vmem:[%s0 + $0x1c0] sm:$0xff]
  %v68 = vld [vmem:[%s0 + $0x1c8] sm:$0xff]
  %v69 = vld [vmem:[%s0 + $0x1d0] sm:$0xff]
  %v70 = vld [vmem:[%s0 + $0x1d8] sm:$0xff]
  %v71 = vld [vmem:[%s0 + $0x1e0] sm:$0xff]
  %v72 = vld [vmem:[%s0 + $0x1e8] sm:$0xff]
  %v73 = vld [vmem:[%s0 + $0x1f0] sm:$0xff]
  %v74 = vld [vmem:[%s0 + $0x1f8] sm:$0xff]
  %v75 = vld [vmem:[%s0 + $0x200] sm:$0xff]
  %v76 = vld [vmem:[%s0 + $0x208] sm:$0xff]
  %v77 = vld [vmem:[%s0 + $0x210] sm:$0xff]
  %v78 = vld [vmem:[%s0 + $0x218] sm:$0xff]
  %v79 = vld [vmem:[%s0 + $0x220] sm:$0xff]
  %v80 = vld [vmem:[%s0 + $0x228] sm:$0xff]
  %v81 = vld [vmem:[%s0 + $0x230] sm:$0xff]
  %v82 = vld [vmem:[%s0 + $0x238] sm:$0xff]
  %v83 = vld [vmem:[%s0 + $0x240] sm:$0xff]
  %v84 = vld [vmem:[%s0 + $0x248] sm:$0xff]
  %v85 = vld [vmem:[%s0 + $0x250] sm:$0xff]
  %v86 = vld [vmem:[%s0 + $0x258] sm:$0xff]
  %v87 = vld [vmem:[%s0 + $0x260] sm:$0xff]
  %v88 = vld [vmem:[%s0 + $0x268] sm:$0xff]
  %v89 = vld [vmem:[%s0 + $0x270] sm:$0xff]
  %v90 = vld [vmem:[%s0 + $0x278] sm:$0xff]
  %v91 = vld [vmem:[%s0 + $0x280] sm:$0xff]
  %v92 = vld [vmem:[%s0 + $0x288] sm:$0xff]
  %v93 = vld [vmem:[%s0 + $0x290] sm:$0xff]
  %v94 = vld [vmem:[%s0 + $0x298] sm:$0xff]
  %v95 = vld [vmem:[%s0 + $0x2a0] sm:$0xff]
  %v96 = vld [vmem:[%s0 + $0x2a8] sm:$0xff]
  %v97 = vld [vmem:[%s0 + $0x2b0] sm:$0xff]
  %v98 = vld [vmem:[%s0 + $0x2b8] sm:$0xff]
  %v99 = vld [vmem:[%s0 + $0x2c0] sm:$0xff]
  %v100 = vld [vmem:[%s0 + $0x2c8] sm:$0xff]
  %v101 = vld [vmem:[%s0 + $0x2d0] sm:$0xff]
  %v102 = vld [vmem:[%s0 + $0x2d8] sm:$0xff]
  %v103 = vld [vmem:[%s0 + $0x2e0] sm:$0xff]
  %v104 = vld [vmem:[%s0 + $0x2e8] sm:$0xff]
  %v105 = vld [vmem:[%s0 + $0x2f0] sm:$0xff]
  %v106 = vld [vmem:[%s0 + $0x2f8] sm:$0xff]
  %v107 = vld [vmem:[%s0 + $0x300] sm:$0xff]
  %v108 = vld [vmem:[%s0 + $0x308] sm:$0xff]
  %v109 = vld [vmem:[%s0 + $0x310] sm:$0xff]
  %v110 = vld [vmem:[%s0 + $0x318] sm:$0xff]
  %v111 = vld [vmem:[%s0 + $0x320] sm:$0xff]
  %v112 = vld [vmem:[%s0 + $0x328] sm:$0xff]
  %v113 = vld [vmem:[%s0 + $0x330] sm:$0xff]
  %v114 = vld [vmem:[%s0 + $0x338] sm:$0xff]
  %v115 = vld [vmem:[%s0 + $0x340] sm:$0xff]
  %v116 = vld [vmem:[%s0 + $0x348] sm:$0xff]
  %v117 = vld [vmem:[%s0 + $0x350] sm:$0xff]
  %v118 = vld [vmem:[%s0 + $0x358] sm:$0xff]
  %v119 = vld [vmem:[%s0 + $0x360] sm:$0xff]
  %v120 = vld [vmem:[%s0 + $0x368] sm:$0xff]
  %v121 = vld [vmem:[%s0 + $0x370] sm:$0xff]
  %v122 = vld [vmem:[%s0 + $0x378] sm:$0xff]
  %v123 = vld [vmem:[%s0 + $0x380] sm:$0xff]
  %v124 = vld [vmem:[%s0 + $0x388] sm:$0xff]
  %v125 = vld [vmem:[%s0 + $0x390] sm:$0xff]
  %v126 = vld [vmem:[%s0 + $0x398] sm:$0xff]
  %v127 = vld [vmem:[%s0 + $0x3a0] sm:$0xff]
  %v128 = vld [vmem:[%s0 + $0x3a8] sm:$0xff]
  %v129 = vld [vmem:[%s0 + $0x3b0] sm:$0xff]
  %v130 = vld [vmem:[%s0 + $0x3b8] sm:$0xff]
  %v131 = vld [vmem:[%s0 + $0x3c0] sm:$0xff]
  %v132 = vld [vmem:[%s0 + $0x3c8] sm:$0xff]
  %v133 = vld [vmem:[%s0 + $0x3d0] sm:$0xff]
  %v134 = vld [vmem:[%s0 + $0x3d8] sm:$0xff]
  %v135 = vld [vmem:[%s0 + $0x3e0] sm:$0xff]
  %v136 = vld [vmem:[%s0 + $0x3e8] sm:$0xff]
  %v137 = vld [vmem:[%s0 + $0x3f0] sm:$0xff]
  %v138 = vld [vmem:[%s0 + $0x3f8] sm:$0xff]
  %v139 = vld [vmem:[%s0 + $0x400] sm:$0xff]
  %v140 = vld [vmem:[%s0 + $0x408] sm:$0xff]
  %v141 = vld [vmem:[%s0 + $0x410] sm:$0xff]
  %v142 = vld [vmem:[%s0 + $0x418] sm:$0xff]
  %v143 = vld [vmem:[%s0 + $0x420] sm:$0xff]
  %v144 = vld [vmem:[%s0 + $0x428] sm:$0xff]
  %v145 = vld [vmem:[%s0 + $0x430] sm:$0xff]
  %v146 = vld [vmem:[%s0 + $0x438] sm:$0xff]
  %v147 = vld [vmem:[%s0 + $0x440] sm:$0xff]
  %v148 = vld [vmem:[%s0 + $0x448] sm:$0xff]
  %v149 = vld [vmem:[%s0 + $0x450] sm:$0xff]
  %v150 = vld [vmem:[%s0 + $0x458] sm:$0xff]
  %v151 = vld [vmem:[%s0 + $0x460] sm:$0xff]
  %v152 = vld [vmem:[%s0 + $0x468] sm:$0xff]
  %v153 = vld [vmem:[%s0 + $0x470] sm:$0xff]
  %v154 = vld [vmem:[%s0 + $0x478] sm:$0xff]
  %v155 = vld [vmem:[%s0 + $0x480] sm:$0xff]
  %v156 = vld [vmem:[%s0 + $0x488] sm:$0xff]
  %v157 = vld [vmem:[%s0 + $0x490] sm:$0xff]
  %v158 = vld [vmem:[%s0 + $0x498] sm:$0xff]
  %v159 = vld [vmem:[%s0 + $0x4a0] sm:$0xff]
  %v160 = vld [vmem:[%s0 + $0x4a8] sm:$0xff]
  %v161 = vld [vmem:[%s0 + $0x4b0] sm:$0xff]
  %v162 = vld [vmem:[%s0 + $0x4b8] sm:$0xff]
  %v163 = vld [vmem:[%s0 + $0x4c0] sm:$0xff]
  %v164 = vld [vmem:[%s0 + $0x4c8] sm:$0xff]
  %v165 = vld [vmem:[%s0 + $0x4d0] sm:$0xff]
  %v166 = vld [vmem:[%s0 + $0x4d8] sm:$0xff]
  %v167 = vld [vmem:[%s0 + $0x4e0] sm:$0xff]
  %v168 = vld [vmem:[%s0 + $0x4e8] sm:$0xff]
  %v169 = vld [vmem:[%s0 + $0x4f0] sm:$0xff]
  %v170 = vld [vmem:[%s0 + $0x4f8] sm:$0xff]
  %v171 = vld [vmem:[%s0 + $0x500] sm:$0xff]
  %v172 = vld [vmem:[%s0 + $0x508] sm:$0xff]
  %v173 = vld [vmem:[%s0 + $0x510] sm:$0xff]
  %v174 = vld [vmem:[%s0 + $0x518] sm:$0xff]
  %v175 = vld [vmem:[%s0 + $0x520] sm:$0xff]
  %v176 = vld [vmem:[%s0 + $0x528] sm:$0xff]
  %v177 = vld [vmem:[%s0 + $0x530] sm:$0xff]
  %v178 = vld [vmem:[%s0 + $0x538] sm:$0xff]
  %v179 = vld [vmem:[%s0 + $0x540] sm:$0xff]
  %v180 = vld [vmem:[%s0 + $0x548] sm:$0xff]
  %v181 = vld [vmem:[%s0 + $0x550] sm:$0xff]
  %v182 = vld [vmem:[%s0 + $0x558] sm:$0xff]
  %v183 = vld [vmem:[%s0 + $0x560] sm:$0xff]
  %v184 = vld [vmem:[%s0 + $0x568] sm:$0xff]
  %v185 = vld [vmem:[%s0 + $0x570] sm:$0xff]
  %v186 = vld [vmem:[%s0 + $0x578] sm:$0xff]
  %v187 = vld [vmem:[%s0 + $0x580] sm:$0xff]
  %v188 = vld [vmem:[%s0 + $0x588] sm:$0xff]
  %v189 = vld [vmem:[%s0 + $0x590] sm:$0xff]
  %v190 = vld [vmem:[%s0 + $0x598] sm:$0xff]
  %v191 = vld [vmem:[%s0 + $0x5a0] sm:$0xff]
  %v192 = vld [vmem:[%s0 + $0x5a8] sm:$0xff]
  %v193 = vld [vmem:[%s0 + $0x5b0] sm:$0xff]
  %v194 = vld [vmem:[%s0 + $0x5b8] sm:$0xff]
  %v195 = vld [vmem:[%s0 + $0x5c0] sm:$0xff]
  %v196 = vld [vmem:[%s0 + $0x5c8] sm:$0xff]
  %v197 = vld [vmem:[%s0 + $0x5d0] sm:$0xff]
  %v198 = vld [vmem:[%s0 + $0x5d8] sm:$0xff]
  %v199 = vld [vmem:[%s0 + $0x5e0] sm:$0xff]
  %v200 = vld [vmem:[%s0 + $0x5e8] sm:$0xff]
  %v201 = vld [vmem:[%s0 + $0x5f0] sm:$0xff]
  %v202 = vld [vmem:[%s0 + $0x5f8] sm:$0xff]
  %v203 = vld [vmem:[%s0 + $0x600] sm:$0xff]
  %v204 = vld [vmem:[%s0 + $0x608] sm:$0xff]
  %v205 = vld [vmem:[%s0 + $0x610] sm:$0xff]
  %v206 = vld [vmem:[%s0 + $0x618] sm:$0xff]
  %v207 = vld [vmem:[%s0 + $0x620] sm:$0xff]
  %v208 = vld [vmem:[%s0 + $0x628] sm:$0xff]
  %v209 = vld [vmem:[%s0 + $0x630] sm:$0xff]
  %v210 = vld [vmem:[%s0 + $0x638] sm:$0xff]
  %v211 = vld [vmem:[%s0 + $0x640] sm:$0xff]
  %v212 = vld [vmem:[%s0 + $0x648] sm:$0xff]
  %v213 = vld [vmem:[%s0 + $0x650] sm:$0xff]
  %v214 = vld [vmem:[%s0 + $0x658] sm:$0xff]
  %v215 = vld [vmem:[%s0 + $0x660] sm:$0xff]
  %v216 = vld [vmem:[%s0 + $0x668] sm:$0xff]
  %v217 = vld [vmem:[%s0 + $0x670] sm:$0xff]
  %v218 = vld [vmem:[%s0 + $0x678] sm:$0xff]
  %v219 = vld [vmem:[%s0 + $0x680] sm:$0xff]
  %v220 = vld [vmem:[%s0 + $0x688] sm:$0xff]
  %v221 = vld [vmem:[%s0 + $0x690] sm:$0xff]
  %v222 = vld [vmem:[%s0 + $0x698] sm:$0xff]
  %v223 = vld [vmem:[%s0 + $0x6a0] sm:$0xff]
  %v224 = vld [vmem:[%s0 + $0x6a8] sm:$0xff]
  %v225 = vld [vmem:[%s0 + $0x6b0] sm:$0xff]
  %v226 = vld [vmem:[%s0 + $0x6b8] sm:$0xff]
  %v227 = vld [vmem:[%s0 + $0x6c0] sm:$0xff]
  %v228 = vld [vmem:[%s0 + $0x6c8] sm:$0xff]
  %v229 = vld [vmem:[%s0 + $0x6d0] sm:$0xff]
  %v230 = vld [vmem:[%s0 + $0x6d8] sm:$0xff]
  %v231 = vld [vmem:[%s0 + $0x6e0] sm:$0xff]
  %v232 = vld [vmem:[%s0 + $0x6e8] sm:$0xff]
  %v233 = vld [vmem:[%s0 + $0x6f0] sm:$0xff]
  %v234 = vld [vmem:[%s0 + $0x6f8] sm:$0xff]
  %v235 = vld [vmem:[%s0 + $0x700] sm:$0xff]
  %v236 = vld [vmem:[%s0 + $0x708] sm:$0xff]
  %v237 = vld [vmem:[%s0 + $0x710] sm:$0xff]
  %v238 = vld [vmem:[%s0 + $0x718] sm:$0xff]
  %v239 = vld [vmem:[%s0 + $0x720] sm:$0xff]
  %v240 = vld [vmem:[%s0 + $0x728] sm:$0xff]
  %v241 = vld [vmem:[%s0 + $0x730] sm:$0xff]
  %v242 = vld [vmem:[%s0 + $0x738] sm:$0xff]
  %v243 = vld [vmem:[%s0 + $0x740] sm:$0xff]
  %v244 = vld [vmem:[%s0 + $0x748] sm:$0xff]
  %v245 = vld [vmem:[%s0 + $0x750] sm:$0xff]
  %v246 = vld [vmem:[%s0 + $0x758] sm:$0xff]
  %v247 = vld [vmem:[%s0 + $0x760] sm:$0xff]
  %v248 = vld [vmem:[%s0 + $0x768] sm:$0xff]
  %v249 = vld [vmem:[%s0 + $0x770] sm:$0xff]
  %v250 = vld [vmem:[%s0 + $0x778] sm:$0xff]
  %v251 = vld [vmem:[%s0 + $0x780] sm:$0xff]
  %v252 = vld [vmem:[%s0 + $0x788] sm:$0xff]
  %v253 = vld [vmem:[%s0 + $0x790] sm:$0xff]
  %v254 = vld [vmem:[%s0 + $0x798] sm:$0xff]
  %v255 = vld [vmem:[%s0 + $0x7a0] sm:$0xff]
  %v256 = vld [vmem:[%s0 + $0x7a8] sm:$0xff]
  %v257 = vld [vmem:[%s0 + $0x7b0] sm:$0xff]
  %v258 = vld [vmem:[%s0 + $0x7b8] sm:$0xff]
  %v259 = vld [vmem:[%s0 + $0x7c0] sm:$0xff]
  %v260 = vld [vmem:[%s0 + $0x7c8] sm:$0xff]
  %v261 = vld [vmem:[%s0 + $0x7d0] sm:$0xff]
  %v262 = vld [vmem:[%s0 + $0x7d8] sm:$0xff]
  %v263 = vld [vmem:[%s0 + $0x7e0] sm:$0xff]
  %v264 = vld [vmem:[%s0 + $0x7e8] sm:$0xff]
  %v265 = vld [vmem:[%s0 + $0x7f0] sm:$0xff]
  %v266 = vld [vmem:[%s0 + $0x7f8] sm:$0xff]
  %v267 = vmul.f32 %v11, 0.9
  %v268 = vmul.f32 %v12, 0.9
  %v269 = vmul.f32 %v13, 0.9
  %v270 = vmul.f32 %v14, 0.9
  %v271 = vmul.f32 %v15, 0.9
  %v272 = vmul.f32 %v16, 0.9
  %v273 = vmul.f32 %v17, 0.9
  %v274 = vmul.f32 %v18, 0.9
  %v275 = vmul.f32 %v19, 0.9
  %v276 = vmul.f32 %v20, 0.9
  %v277 = vmul.f32 %v21, 0.9
  %v278 = vmul.f32 %v22, 0.9
  %v279 = vmul.f32 %v23, 0.9
  %v280 = vmul.f32 %v24, 0.9
  %v281 = vmul.f32 %v25, 0.9
  %v282 = vmul.f32 %v26, 0.9
  %v283 = vmul.f32 %v27, 0.9
  %v284 = vmul.f32 %v28, 0.9
  %v285 = vmul.f32 %v29, 0.9
  %v286 = vmul.f32 %v30, 0.9
  %v287 = vmul.f32 %v31, 0.9
  %v288 = vmul.f32 %v32, 0.9
  %v289 = vmul.f32 %v33, 0.9
  %v290 = vmul.f32 %v34, 0.9
  %v291 = vmul.f32 %v35, 0.9
  %v292 = vmul.f32 %v36, 0.9
  %v293 = vmul.f32 %v37, 0.9
  %v294 = vmul.f32 %v38, 0.9
  %v295 = vmul.f32 %v39, 0.9
  %v296 = vmul.f32 %v40, 0.9
  %v297 = vmul.f32 %v41, 0.9
  %v298 = vmul.f32 %v42, 0.9
  %v299 = vmul.f32 %v43, 0.9
  %v300 = vmul.f32 %v44, 0.9
  %v301 = vmul.f32 %v45, 0.9
  %v302 = vmul.f32 %v46, 0.9
  %v303 = vmul.f32 %v47, 0.9
  %v304 = vmul.f32 %v48, 0.9
  %v305 = vmul.f32 %v49, 0.9
  %v306 = vmul.f32 %v50, 0.9
  %v307 = vmul.f32 %v51, 0.9
  %v308 = vmul.f32 %v52, 0.9
  %v309 = vmul.f32 %v53, 0.9
  %v310 = vmul.f32 %v54, 0.9
  %v311 = vmul.f32 %v55, 0.9
  %v312 = vmul.f32 %v56, 0.9
  %v313 = vmul.f32 %v57, 0.9
  %v314 = vmul.f32 %v58, 0.9
  %v315 = vmul.f32 %v59, 0.9
  %v316 = vmul.f32 %v60, 0.9
  %v317 = vmul.f32 %v61, 0.9
  %v318 = vmul.f32 %v62, 0.9
  %v319 = vmul.f32 %v63, 0.9
  %v320 = vmul.f32 %v64, 0.9
  %v321 = vmul.f32 %v65, 0.9
  %v322 = vmul.f32 %v66, 0.9
  %v323 = vmul.f32 %v67, 0.9
  %v324 = vmul.f32 %v68, 0.9
  %v325 = vmul.f32 %v69, 0.9
  %v326 = vmul.f32 %v70, 0.9
  %v327 = vmul.f32 %v71, 0.9
  %v328 = vmul.f32 %v72, 0.9
  %v329 = vmul.f32 %v73, 0.9
  %v330 = vmul.f32 %v74, 0.9
  %v331 = vmul.f32 %v75, 0.9
  %v332 = vmul.f32 %v76, 0.9
  %v333 = vmul.f32 %v77, 0.9
  %v334 = vmul.f32 %v78, 0.9
  %v335 = vmul.f32 %v79, 0.9
  %v336 = vmul.f32 %v80, 0.9
  %v337 = vmul.f32 %v81, 0.9
  %v338 = vmul.f32 %v82, 0.9
  %v339 = vmul.f32 %v83, 0.9
  %v340 = vmul.f32 %v84, 0.9
  %v341 = vmul.f32 %v85, 0.9
  %v342 = vmul.f32 %v86, 0.9
  %v343 = vmul.f32 %v87, 0.9
  %v344 = vmul.f32 %v88, 0.9
  %v345 = vmul.f32 %v89, 0.9
  %v346 = vmul.f32 %v90, 0.9
  %v347 = vmul.f32 %v91, 0.9
  %v348 = vmul.f32 %v92, 0.9
  %v349 = vmul.f32 %v93, 0.9
  %v350 = vmul.f32 %v94, 0.9
  %v351 = vmul.f32 %v95, 0.9
  %v352 = vmul.f32 %v96, 0.9
  %v353 = vmul.f32 %v97, 0.9
  %v354 = vmul.f32 %v98, 0.9
  %v355 = vmul.f32 %v99, 0.9
  %v356 = vmul.f32 %v100, 0.9
  %v357 = vmul.f32 %v101, 0.9
  %v358 = vmul.f32 %v102, 0.9
  %v359 = vmul.f32 %v103, 0.9
  %v360 = vmul.f32 %v104, 0.9
  %v361 = vmul.f32 %v105, 0.9
  %v362 = vmul.f32 %v106, 0.9
  %v363 = vmul.f32 %v107, 0.9
  %v364 = vmul.f32 %v108, 0.9
  %v365 = vmul.f32 %v109, 0.9
  %v366 = vmul.f32 %v110, 0.9
  %v367 = vmul.f32 %v111, 0.9
  %v368 = vmul.f32 %v112, 0.9
  %v369 = vmul.f32 %v113, 0.9
  %v370 = vmul.f32 %v114, 0.9
  %v371 = vmul.f32 %v115, 0.9
  %v372 = vmul.f32 %v116, 0.9
  %v373 = vmul.f32 %v117, 0.9
  %v374 = vmul.f32 %v118, 0.9
  %v375 = vmul.f32 %v119, 0.9
  %v376 = vmul.f32 %v120, 0.9
  %v377 = vmul.f32 %v121, 0.9
  %v378 = vmul.f32 %v122, 0.9
  %v379 = vmul.f32 %v123, 0.9
  %v380 = vmul.f32 %v124, 0.9
  %v381 = vmul.f32 %v125, 0.9
  %v382 = vmul.f32 %v126, 0.9
  %v383 = vmul.f32 %v127, 0.9
  %v384 = vmul.f32 %v128, 0.9
  %v385 = vmul.f32 %v129, 0.9
  %v386 = vmul.f32 %v130, 0.9
  %v387 = vmul.f32 %v131, 0.9
  %v388 = vmul.f32 %v132, 0.9
  %v389 = vmul.f32 %v133, 0.9
  %v390 = vmul.f32 %v134, 0.9
  %v391 = vmul.f32 %v135, 0.9
  %v392 = vmul.f32 %v136, 0.9
  %v393 = vmul.f32 %v137, 0.9
  %v394 = vmul.f32 %v138, 0.9
  %v395 = vmul.f32 %v139, 0.9
  %v396 = vmul.f32 %v140, 0.9
  %v397 = vmul.f32 %v141, 0.9
  %v398 = vmul.f32 %v142, 0.9
  %v399 = vmul.f32 %v143, 0.9
  %v400 = vmul.f32 %v144, 0.9
  %v401 = vmul.f32 %v145, 0.9
  %v402 = vmul.f32 %v146, 0.9
  %v403 = vmul.f32 %v147, 0.9
  %v404 = vmul.f32 %v148, 0.9
  %v405 = vmul.f32 %v149, 0.9
  %v406 = vmul.f32 %v150, 0.9
  %v407 = vmul.f32 %v151, 0.9
  %v408 = vmul.f32 %v152, 0.9
  %v409 = vmul.f32 %v153, 0.9
  %v410 = vmul.f32 %v154, 0.9
  %v411 = vmul.f32 %v155, 0.9
  %v412 = vmul.f32 %v156, 0.9
  %v413 = vmul.f32 %v157, 0.9
  %v414 = vmul.f32 %v158, 0.9
  %v415 = vmul.f32 %v159, 0.9
  %v416 = vmul.f32 %v160, 0.9
  %v417 = vmul.f32 %v161, 0.9
  %v418 = vmul.f32 %v162, 0.9
  %v419 = vmul.f32 %v163, 0.9
  %v420 = vmul.f32 %v164, 0.9
  %v421 = vmul.f32 %v165, 0.9
  %v422 = vmul.f32 %v166, 0.9
  %v423 = vmul.f32 %v167, 0.9
  %v424 = vmul.f32 %v168, 0.9
  %v425 = vmul.f32 %v169, 0.9
  %v426 = vmul.f32 %v170, 0.9
  %v427 = vmul.f32 %v171, 0.9
  %v428 = vmul.f32 %v172, 0.9
  %v429 = vmul.f32 %v173, 0.9
  %v430 = vmul.f32 %v174, 0.9
  %v431 = vmul.f32 %v175, 0.9
  %v432 = vmul.f32 %v176, 0.9
  %v433 = vmul.f32 %v177, 0.9
  %v434 = vmul.f32 %v178, 0.9
  %v435 = vmul.f32 %v179, 0.9
  %v436 = vmul.f32 %v180, 0.9
  %v437 = vmul.f32 %v181, 0.9
  %v438 = vmul.f32 %v182, 0.9
  %v439 = vmul.f32 %v183, 0.9
  %v440 = vmul.f32 %v184, 0.9
  %v441 = vmul.f32 %v185, 0.9
  %v442 = vmul.f32 %v186, 0.9
  %v443 = vmul.f32 %v187, 0.9
  %v444 = vmul.f32 %v188, 0.9
  %v445 = vmul.f32 %v189, 0.9
  %v446 = vmul.f32 %v190, 0.9
  %v447 = vmul.f32 %v191, 0.9
  %v448 = vmul.f32 %v192, 0.9
  %v449 = vmul.f32 %v193, 0.9
  %v450 = vmul.f32 %v194, 0.9
  %v451 = vmul.f32 %v195, 0.9
  %v452 = vmul.f32 %v196, 0.9
  %v453 = vmul.f32 %v197, 0.9
  %v454 = vmul.f32 %v198, 0.9
  %v455 = vmul.f32 %v199, 0.9
  %v456 = vmul.f32 %v200, 0.9
  %v457 = vmul.f32 %v201, 0.9
  %v458 = vmul.f32 %v202, 0.9
  %v459 = vmul.f32 %v203, 0.9
  %v460 = vmul.f32 %v204, 0.9
  %v461 = vmul.f32 %v205, 0.9
  %v462 = vmul.f32 %v206, 0.9
  %v463 = vmul.f32 %v207, 0.9
  %v464 = vmul.f32 %v208, 0.9
  %v465 = vmul.f32 %v209, 0.9
  %v466 = vmul.f32 %v210, 0.9
  %v467 = vmul.f32 %v211, 0.9
  %v468 = vmul.f32 %v212, 0.9
  %v469 = vmul.f32 %v213, 0.9
  %v470 = vmul.f32 %v214, 0.9
  %v471 = vmul.f32 %v215, 0.9
  %v472 = vmul.f32 %v216, 0.9
  %v473 = vmul.f32 %v217, 0.9
  %v474 = vmul.f32 %v218, 0.9
  %v475 = vmul.f32 %v219, 0.9
  %v476 = vmul.f32 %v220, 0.9
  %v477 = vmul.f32 %v221, 0.9
  %v478 = vmul.f32 %v222, 0.9
  %v479 = vmul.f32 %v223, 0.9
  %v480 = vmul.f32 %v224, 0.9
  %v481 = vmul.f32 %v225, 0.9
  %v482 = vmul.f32 %v226, 0.9
  %v483 = vmul.f32 %v227, 0.9
  %v484 = vmul.f32 %v228, 0.9
  %v485 = vmul.f32 %v229, 0.9
  %v486 = vmul.f32 %v230, 0.9
  %v487 = vmul.f32 %v231, 0.9
  %v488 = vmul.f32 %v232, 0.9
  %v489 = vmul.f32 %v233, 0.9
  %v490 = vmul.f32 %v234, 0.9
  %v491 = vmul.f32 %v235, 0.9
  %v492 = vmul.f32 %v236, 0.9
  %v493 = vmul.f32 %v237, 0.9
  %v494 = vmul.f32 %v238, 0.9
  %v495 = vmul.f32 %v239, 0.9
  %v496 = vmul.f32 %v240, 0.9
  %v497 = vmul.f32 %v241, 0.9
  %v498 = vmul.f32 %v242, 0.9
  %v499 = vmul.f32 %v243, 0.9
  %v500 = vmul.f32 %v244, 0.9
  %v501 = vmul.f32 %v245, 0.9
  %v502 = vmul.f32 %v246, 0.9
  %v503 = vmul.f32 %v247, 0.9
  %v504 = vmul.f32 %v248, 0.9
  %v505 = vmul.f32 %v249, 0.9
  %v506 = vmul.f32 %v250, 0.9
  %v507 = vmul.f32 %v251, 0.9
  %v508 = vmul.f32 %v252, 0.9
  %v509 = vmul.f32 %v253, 0.9
  %v510 = vmul.f32 %v254, 0.9
  %v511 = vmul.f32 %v255, 0.9
  %v512 = vmul.f32 %v256, 0.9
  %v513 = vmul.f32 %v257, 0.9
  %v514 = vmul.f32 %v258, 0.9
  %v515 = vmul.f32 %v259, 0.9
  %v516 = vmul.f32 %v260, 0.9
  %v517 = vmul.f32 %v261, 0.9
  %v518 = vmul.f32 %v262, 0.9
  %v519 = vmul.f32 %v263, 0.9
  %v520 = vmul.f32 %v264, 0.9
  %v521 = vmul.f32 %v265, 0.9
  %v522 = vmul.f32 %v266, 0.9
  %v523 = vld [vmem:[%s1] sm:$0xff]
  %v524 = vld [vmem:[%s1 + $0x8] sm:$0xff]
  %v525 = vld [vmem:[%s1 + $0x10] sm:$0xff]
  %v526 = vld [vmem:[%s1 + $0x18] sm:$0xff]
  %v527 = vld [vmem:[%s1 + $0x20] sm:$0xff]
  %v528 = vld [vmem:[%s1 + $0x28] sm:$0xff]
  %v529 = vld [vmem:[%s1 + $0x30] sm:$0xff]
  %v530 = vld [vmem:[%s1 + $0x38] sm:$0xff]
  %v531 = vld [vmem:[%s1 + $0x40] sm:$0xff]
  %v532 = vld [vmem:[%s1 + $0x48] sm:$0xff]
  %v533 = vld [vmem:[%s1 + $0x50] sm:$0xff]
  %v534 = vld [vmem:[%s1 + $0x58] sm:$0xff]
  %v535 = vld [vmem:[%s1 + $0x60] sm:$0xff]
  %v536 = vld [vmem:[%s1 + $0x68] sm:$0xff]
  %v537 = vld [vmem:[%s1 + $0x70] sm:$0xff]
  %v538 = vld [vmem:[%s1 + $0x78] sm:$0xff]
  %v539 = vld [vmem:[%s1 + $0x80] sm:$0xff]
  %v540 = vld [vmem:[%s1 + $0x88] sm:$0xff]
  %v541 = vld [vmem:[%s1 + $0x90] sm:$0xff]
  %v542 = vld [vmem:[%s1 + $0x98] sm:$0xff]
  %v543 = vld [vmem:[%s1 + $0xa0] sm:$0xff]
  %v544 = vld [vmem:[%s1 + $0xa8] sm:$0xff]
  %v545 = vld [vmem:[%s1 + $0xb0] sm:$0xff]
  %v546 = vld [vmem:[%s1 + $0xb8] sm:$0xff]
  %v547 = vld [vmem:[%s1 + $0xc0] sm:$0xff]
  %v548 = vld [vmem:[%s1 + $0xc8] sm:$0xff]
  %v549 = vld [vmem:[%s1 + $0xd0] sm:$0xff]
  %v550 = vld [vmem:[%s1 + $0xd8] sm:$0xff]
  %v551 = vld [vmem:[%s1 + $0xe0] sm:$0xff]
  %v552 = vld [vmem:[%s1 + $0xe8] sm:$0xff]
  %v553 = vld [vmem:[%s1 + $0xf0] sm:$0xff]
  %v554 = vld [vmem:[%s1 + $0xf8] sm:$0xff]
  %v555 = vld [vmem:[%s1 + $0x100] sm:$0xff]
  %v556 = vld [vmem:[%s1 + $0x108] sm:$0xff]
  %v557 = vld [vmem:[%s1 + $0x110] sm:$0xff]
  %v558 = vld [vmem:[%s1 + $0x118] sm:$0xff]
  %v559 = vld [vmem:[%s1 + $0x120] sm:$0xff]
  %v560 = vld [vmem:[%s1 + $0x128] sm:$0xff]
  %v561 = vld [vmem:[%s1 + $0x130] sm:$0xff]
  %v562 = vld [vmem:[%s1 + $0x138] sm:$0xff]
  %v563 = vld [vmem:[%s1 + $0x140] sm:$0xff]
  %v564 = vld [vmem:[%s1 + $0x148] sm:$0xff]
  %v565 = vld [vmem:[%s1 + $0x150] sm:$0xff]
  %v566 = vld [vmem:[%s1 + $0x158] sm:$0xff]
  %v567 = vld [vmem:[%s1 + $0x160] sm:$0xff]
  %v568 = vld [vmem:[%s1 + $0x168] sm:$0xff]
  %v569 = vld [vmem:[%s1 + $0x170] sm:$0xff]
  %v570 = vld [vmem:[%s1 + $0x178] sm:$0xff]
  %v571 = vld [vmem:[%s1 + $0x180] sm:$0xff]
  %v572 = vld [vmem:[%s1 + $0x188] sm:$0xff]
  %v573 = vld [vmem:[%s1 + $0x190] sm:$0xff]
  %v574 = vld [vmem:[%s1 + $0x198] sm:$0xff]
  %v575 = vld [vmem:[%s1 + $0x1a0] sm:$0xff]
  %v576 = vld [vmem:[%s1 + $0x1a8] sm:$0xff]
  %v577 = vld [vmem:[%s1 + $0x1b0] sm:$0xff]
  %v578 = vld [vmem:[%s1 + $0x1b8] sm:$0xff]
  %v579 = vld [vmem:[%s1 + $0x1c0] sm:$0xff]
  %v580 = vld [vmem:[%s1 + $0x1c8] sm:$0xff]
  %v581 = vld [vmem:[%s1 + $0x1d0] sm:$0xff]
  %v582 = vld [vmem:[%s1 + $0x1d8] sm:$0xff]
  %v583 = vld [vmem:[%s1 + $0x1e0] sm:$0xff]
  %v584 = vld [vmem:[%s1 + $0x1e8] sm:$0xff]
  %v585 = vld [vmem:[%s1 + $0x1f0] sm:$0xff]
  %v586 = vld [vmem:[%s1 + $0x1f8] sm:$0xff]
  %v587 = vld [vmem:[%s1 + $0x200] sm:$0xff]
  %v588 = vld [vmem:[%s1 + $0x208] sm:$0xff]
  %v589 = vld [vmem:[%s1 + $0x210] sm:$0xff]
  %v590 = vld [vmem:[%s1 + $0x218] sm:$0xff]
  %v591 = vld [vmem:[%s1 + $0x220] sm:$0xff]
  %v592 = vld [vmem:[%s1 + $0x228] sm:$0xff]
  %v593 = vld [vmem:[%s1 + $0x230] sm:$0xff]
  %v594 = vld [vmem:[%s1 + $0x238] sm:$0xff]
  %v595 = vld [vmem:[%s1 + $0x240] sm:$0xff]
  %v596 = vld [vmem:[%s1 + $0x248] sm:$0xff]
  %v597 = vld [vmem:[%s1 + $0x250] sm:$0xff]
  %v598 = vld [vmem:[%s1 + $0x258] sm:$0xff]
  %v599 = vld [vmem:[%s1 + $0x260] sm:$0xff]
  %v600 = vld [vmem:[%s1 + $0x268] sm:$0xff]
  %v601 = vld [vmem:[%s1 + $0x270] sm:$0xff]
  %v602 = vld [vmem:[%s1 + $0x278] sm:$0xff]
  %v603 = vld [vmem:[%s1 + $0x280] sm:$0xff]
  %v604 = vld [vmem:[%s1 + $0x288] sm:$0xff]
  %v605 = vld [vmem:[%s1 + $0x290] sm:$0xff]
  %v606 = vld [vmem:[%s1 + $0x298] sm:$0xff]
  %v607 = vld [vmem:[%s1 + $0x2a0] sm:$0xff]
  %v608 = vld [vmem:[%s1 + $0x2a8] sm:$0xff]
  %v609 = vld [vmem:[%s1 + $0x2b0] sm:$0xff]
  %v610 = vld [vmem:[%s1 + $0x2b8] sm:$0xff]
  %v611 = vld [vmem:[%s1 + $0x2c0] sm:$0xff]
  %v612 = vld [vmem:[%s1 + $0x2c8] sm:$0xff]
  %v613 = vld [vmem:[%s1 + $0x2d0] sm:$0xff]
  %v614 = vld [vmem:[%s1 + $0x2d8] sm:$0xff]
  %v615 = vld [vmem:[%s1 + $0x2e0] sm:$0xff]
  %v616 = vld [vmem:[%s1 + $0x2e8] sm:$0xff]
  %v617 = vld [vmem:[%s1 + $0x2f0] sm:$0xff]
  %v618 = vld [vmem:[%s1 + $0x2f8] sm:$0xff]
  %v619 = vld [vmem:[%s1 + $0x300] sm:$0xff]
  %v620 = vld [vmem:[%s1 + $0x308] sm:$0xff]
  %v621 = vld [vmem:[%s1 + $0x310] sm:$0xff]
  %v622 = vld [vmem:[%s1 + $0x318] sm:$0xff]
  %v623 = vld [vmem:[%s1 + $0x320] sm:$0xff]
  %v624 = vld [vmem:[%s1 + $0x328] sm:$0xff]
  %v625 = vld [vmem:[%s1 + $0x330] sm:$0xff]
  %v626 = vld [vmem:[%s1 + $0x338] sm:$0xff]
  %v627 = vld [vmem:[%s1 + $0x340] sm:$0xff]
  %v628 = vld [vmem:[%s1 + $0x348] sm:$0xff]
  %v629 = vld [vmem:[%s1 + $0x350] sm:$0xff]
  %v630 = vld [vmem:[%s1 + $0x358] sm:$0xff]
  %v631 = vld [vmem:[%s1 + $0x360] sm:$0xff]
  %v632 = vld [vmem:[%s1 + $0x368] sm:$0xff]
  %v633 = vld [vmem:[%s1 + $0x370] sm:$0xff]
  %v634 = vld [vmem:[%s1 + $0x378] sm:$0xff]
  %v635 = vld [vmem:[%s1 + $0x380] sm:$0xff]
  %v636 = vld [vmem:[%s1 + $0x388] sm:$0xff]
  %v637 = vld [vmem:[%s1 + $0x390] sm:$0xff]
  %v638 = vld [vmem:[%s1 + $0x398] sm:$0xff]
  %v639 = vld [vmem:[%s1 + $0x3a0] sm:$0xff]
  %v640 = vld [vmem:[%s1 + $0x3a8] sm:$0xff]
  %v641 = vld [vmem:[%s1 + $0x3b0] sm:$0xff]
  %v642 = vld [vmem:[%s1 + $0x3b8] sm:$0xff]
  %v643 = vld [vmem:[%s1 + $0x3c0] sm:$0xff]
  %v644 = vld [vmem:[%s1 + $0x3c8] sm:$0xff]
  %v645 = vld [vmem:[%s1 + $0x3d0] sm:$0xff]
  %v646 = vld [vmem:[%s1 + $0x3d8] sm:$0xff]
  %v647 = vld [vmem:[%s1 + $0x3e0] sm:$0xff]
  %v648 = vld [vmem:[%s1 + $0x3e8] sm:$0xff]
  %v649 = vld [vmem:[%s1 + $0x3f0] sm:$0xff]
  %v650 = vld [vmem:[%s1 + $0x3f8] sm:$0xff]
  %v651 = vld [vmem:[%s1 + $0x400] sm:$0xff]
  %v652 = vld [vmem:[%s1 + $0x408] sm:$0xff]
  %v653 = vld [vmem:[%s1 + $0x410] sm:$0xff]
  %v654 = vld [vmem:[%s1 + $0x418] sm:$0xff]
  %v655 = vld [vmem:[%s1 + $0x420] sm:$0xff]
  %v656 = vld [vmem:[%s1 + $0x428] sm:$0xff]
  %v657 = vld [vmem:[%s1 + $0x430] sm:$0xff]
  %v658 = vld [vmem:[%s1 + $0x438] sm:$0xff]
  %v659 = vld [vmem:[%s1 + $0x440] sm:$0xff]
  %v660 = vld [vmem:[%s1 + $0x448] sm:$0xff]
  %v661 = vld [vmem:[%s1 + $0x450] sm:$0xff]
  %v662 = vld [vmem:[%s1 + $0x458] sm:$0xff]
  %v663 = vld [vmem:[%s1 + $0x460] sm:$0xff]
  %v664 = vld [vmem:[%s1 + $0x468] sm:$0xff]
  %v665 = vld [vmem:[%s1 + $0x470] sm:$0xff]
  %v666 = vld [vmem:[%s1 + $0x478] sm:$0xff]
  %v667 = vld [vmem:[%s1 + $0x480] sm:$0xff]
  %v668 = vld [vmem:[%s1 + $0x488] sm:$0xff]
  %v669 = vld [vmem:[%s1 + $0x490] sm:$0xff]
  %v670 = vld [vmem:[%s1 + $0x498] sm:$0xff]
  %v671 = vld [vmem:[%s1 + $0x4a0] sm:$0xff]
  %v672 = vld [vmem:[%s1 + $0x4a8] sm:$0xff]
  %v673 = vld [vmem:[%s1 + $0x4b0] sm:$0xff]
  %v674 = vld [vmem:[%s1 + $0x4b8] sm:$0xff]
  %v675 = vld [vmem:[%s1 + $0x4c0] sm:$0xff]
  %v676 = vld [vmem:[%s1 + $0x4c8] sm:$0xff]
  %v677 = vld [vmem:[%s1 + $0x4d0] sm:$0xff]
  %v678 = vld [vmem:[%s1 + $0x4d8] sm:$0xff]
  %v679 = vld [vmem:[%s1 + $0x4e0] sm:$0xff]
  %v680 = vld [vmem:[%s1 + $0x4e8] sm:$0xff]
  %v681 = vld [vmem:[%s1 + $0x4f0] sm:$0xff]
  %v682 = vld [vmem:[%s1 + $0x4f8] sm:$0xff]
  %v683 = vld [vmem:[%s1 + $0x500] sm:$0xff]
  %v684 = vld [vmem:[%s1 + $0x508] sm:$0xff]
  %v685 = vld [vmem:[%s1 + $0x510] sm:$0xff]
  %v686 = vld [vmem:[%s1 + $0x518] sm:$0xff]
  %v687 = vld [vmem:[%s1 + $0x520] sm:$0xff]
  %v688 = vld [vmem:[%s1 + $0x528] sm:$0xff]
  %v689 = vld [vmem:[%s1 + $0x530] sm:$0xff]
  %v690 = vld [vmem:[%s1 + $0x538] sm:$0xff]
  %v691 = vld [vmem:[%s1 + $0x540] sm:$0xff]
  %v692 = vld [vmem:[%s1 + $0x548] sm:$0xff]
  %v693 = vld [vmem:[%s1 + $0x550] sm:$0xff]
  %v694 = vld [vmem:[%s1 + $0x558] sm:$0xff]
  %v695 = vld [vmem:[%s1 + $0x560] sm:$0xff]
  %v696 = vld [vmem:[%s1 + $0x568] sm:$0xff]
  %v697 = vld [vmem:[%s1 + $0x570] sm:$0xff]
  %v698 = vld [vmem:[%s1 + $0x578] sm:$0xff]
  %v699 = vld [vmem:[%s1 + $0x580] sm:$0xff]
  %v700 = vld [vmem:[%s1 + $0x588] sm:$0xff]
  %v701 = vld [vmem:[%s1 + $0x590] sm:$0xff]
  %v702 = vld [vmem:[%s1 + $0x598] sm:$0xff]
  %v703 = vld [vmem:[%s1 + $0x5a0] sm:$0xff]
  %v704 = vld [vmem:[%s1 + $0x5a8] sm:$0xff]
  %v705 = vld [vmem:[%s1 + $0x5b0] sm:$0xff]
  %v706 = vld [vmem:[%s1 + $0x5b8] sm:$0xff]
  %v707 = vld [vmem:[%s1 + $0x5c0] sm:$0xff]
  %v708 = vld [vmem:[%s1 + $0x5c8] sm:$0xff]
  %v709 = vld [vmem:[%s1 + $0x5d0] sm:$0xff]
  %v710 = vld [vmem:[%s1 + $0x5d8] sm:$0xff]
  %v711 = vld [vmem:[%s1 + $0x5e0] sm:$0xff]
  %v712 = vld [vmem:[%s1 + $0x5e8] sm:$0xff]
  %v713 = vld [vmem:[%s1 + $0x5f0] sm:$0xff]
  %v714 = vld [vmem:[%s1 + $0x5f8] sm:$0xff]
  %v715 = vld [vmem:[%s1 + $0x600] sm:$0xff]
  %v716 = vld [vmem:[%s1 + $0x608] sm:$0xff]
  %v717 = vld [vmem:[%s1 + $0x610] sm:$0xff]
  %v718 = vld [vmem:[%s1 + $0x618] sm:$0xff]
  %v719 = vld [vmem:[%s1 + $0x620] sm:$0xff]
  %v720 = vld [vmem:[%s1 + $0x628] sm:$0xff]
  %v721 = vld [vmem:[%s1 + $0x630] sm:$0xff]
  %v722 = vld [vmem:[%s1 + $0x638] sm:$0xff]
  %v723 = vld [vmem:[%s1 + $0x640] sm:$0xff]
  %v724 = vld [vmem:[%s1 + $0x648] sm:$0xff]
  %v725 = vld [vmem:[%s1 + $0x650] sm:$0xff]
  %v726 = vld [vmem:[%s1 + $0x658] sm:$0xff]
  %v727 = vld [vmem:[%s1 + $0x660] sm:$0xff]
  %v728 = vld [vmem:[%s1 + $0x668] sm:$0xff]
  %v729 = vld [vmem:[%s1 + $0x670] sm:$0xff]
  %v730 = vld [vmem:[%s1 + $0x678] sm:$0xff]
  %v731 = vld [vmem:[%s1 + $0x680] sm:$0xff]
  %v732 = vld [vmem:[%s1 + $0x688] sm:$0xff]
  %v733 = vld [vmem:[%s1 + $0x690] sm:$0xff]
  %v734 = vld [vmem:[%s1 + $0x698] sm:$0xff]
  %v735 = vld [vmem:[%s1 + $0x6a0] sm:$0xff]
  %v736 = vld [vmem:[%s1 + $0x6a8] sm:$0xff]
  %v737 = vld [vmem:[%s1 + $0x6b0] sm:$0xff]
  %v738 = vld [vmem:[%s1 + $0x6b8] sm:$0xff]
  %v739 = vld [vmem:[%s1 + $0x6c0] sm:$0xff]
  %v740 = vld [vmem:[%s1 + $0x6c8] sm:$0xff]
  %v741 = vld [vmem:[%s1 + $0x6d0] sm:$0xff]
  %v742 = vld [vmem:[%s1 + $0x6d8] sm:$0xff]
  %v743 = vld [vmem:[%s1 + $0x6e0] sm:$0xff]
  %v744 = vld [vmem:[%s1 + $0x6e8] sm:$0xff]
  %v745 = vld [vmem:[%s1 + $0x6f0] sm:$0xff]
  %v746 = vld [vmem:[%s1 + $0x6f8] sm:$0xff]
  %v747 = vld [vmem:[%s1 + $0x700] sm:$0xff]
  %v748 = vld [vmem:[%s1 + $0x708] sm:$0xff]
  %v749 = vld [vmem:[%s1 + $0x710] sm:$0xff]
  %v750 = vld [vmem:[%s1 + $0x718] sm:$0xff]
  %v751 = vld [vmem:[%s1 + $0x720] sm:$0xff]
  %v752 = vld [vmem:[%s1 + $0x728] sm:$0xff]
  %v753 = vld [vmem:[%s1 + $0x730] sm:$0xff]
  %v754 = vld [vmem:[%s1 + $0x738] sm:$0xff]
  %v755 = vld [vmem:[%s1 + $0x740] sm:$0xff]
  %v756 = vld [vmem:[%s1 + $0x748] sm:$0xff]
  %v757 = vld [vmem:[%s1 + $0x750] sm:$0xff]
  %v758 = vld [vmem:[%s1 + $0x758] sm:$0xff]
  %v759 = vld [vmem:[%s1 + $0x760] sm:$0xff]
  %v760 = vld [vmem:[%s1 + $0x768] sm:$0xff]
  %v761 = vld [vmem:[%s1 + $0x770] sm:$0xff]
  %v762 = vld [vmem:[%s1 + $0x778] sm:$0xff]
  %v763 = vld [vmem:[%s1 + $0x780] sm:$0xff]
  %v764 = vld [vmem:[%s1 + $0x788] sm:$0xff]
  %v765 = vld [vmem:[%s1 + $0x790] sm:$0xff]
  %v766 = vld [vmem:[%s1 + $0x798] sm:$0xff]
  %v767 = vld [vmem:[%s1 + $0x7a0] sm:$0xff]
  %v768 = vld [vmem:[%s1 + $0x7a8] sm:$0xff]
  %v769 = vld [vmem:[%s1 + $0x7b0] sm:$0xff]
  %v770 = vld [vmem:[%s1 + $0x7b8] sm:$0xff]
  %v771 = vld [vmem:[%s1 + $0x7c0] sm:$0xff]
  %v772 = vld [vmem:[%s1 + $0x7c8] sm:$0xff]
  %v773 = vld [vmem:[%s1 + $0x7d0] sm:$0xff]
  %v774 = vld [vmem:[%s1 + $0x7d8] sm:$0xff]
  %v775 = vld [vmem:[%s1 + $0x7e0] sm:$0xff]
  %v776 = vld [vmem:[%s1 + $0x7e8] sm:$0xff]
  %v777 = vld [vmem:[%s1 + $0x7f0] sm:$0xff]
  %v778 = vld [vmem:[%s1 + $0x7f8] sm:$0xff]
  %v779 = vmul.f32 %v523, 0.1
  %v780 = vmul.f32 %v524, 0.1
  %v781 = vmul.f32 %v525, 0.1
  %v782 = vmul.f32 %v526, 0.1
  %v783 = vmul.f32 %v527, 0.1
  %v784 = vmul.f32 %v528, 0.1
  %v785 = vmul.f32 %v529, 0.1
  %v786 = vmul.f32 %v530, 0.1
  %v787 = vmul.f32 %v531, 0.1
  %v788 = vmul.f32 %v532, 0.1
  %v789 = vmul.f32 %v533, 0.1
  %v790 = vmul.f32 %v534, 0.1
  %v791 = vmul.f32 %v535, 0.1
  %v792 = vmul.f32 %v536, 0.1
  %v793 = vmul.f32 %v537, 0.1
  %v794 = vmul.f32 %v538, 0.1
  %v795 = vmul.f32 %v539, 0.1
  %v796 = vmul.f32 %v540, 0.1
  %v797 = vmul.f32 %v541, 0.1
  %v798 = vmul.f32 %v542, 0.1
  %v799 = vmul.f32 %v543, 0.1
  %v800 = vmul.f32 %v544, 0.1
  %v801 = vmul.f32 %v545, 0.1
  %v802 = vmul.f32 %v546, 0.1
  %v803 = vmul.f32 %v547, 0.1
  %v804 = vmul.f32 %v548, 0.1
  %v805 = vmul.f32 %v549, 0.1
  %v806 = vmul.f32 %v550, 0.1
  %v807 = vmul.f32 %v551, 0.1
  %v808 = vmul.f32 %v552, 0.1
  %v809 = vmul.f32 %v553, 0.1
  %v810 = vmul.f32 %v554, 0.1
  %v811 = vmul.f32 %v555, 0.1
  %v812 = vmul.f32 %v556, 0.1
  %v813 = vmul.f32 %v557, 0.1
  %v814 = vmul.f32 %v558, 0.1
  %v815 = vmul.f32 %v559, 0.1
  %v816 = vmul.f32 %v560, 0.1
  %v817 = vmul.f32 %v561, 0.1
  %v818 = vmul.f32 %v562, 0.1
  %v819 = vmul.f32 %v563, 0.1
  %v820 = vmul.f32 %v564, 0.1
  %v821 = vmul.f32 %v565, 0.1
  %v822 = vmul.f32 %v566, 0.1
  %v823 = vmul.f32 %v567, 0.1
  %v824 = vmul.f32 %v568, 0.1
  %v825 = vmul.f32 %v569, 0.1
  %v826 = vmul.f32 %v570, 0.1
  %v827 = vmul.f32 %v571, 0.1
  %v828 = vmul.f32 %v572, 0.1
  %v829 = vmul.f32 %v573, 0.1
  %v830 = vmul.f32 %v574, 0.1
  %v831 = vmul.f32 %v575, 0.1
  %v832 = vmul.f32 %v576, 0.1
  %v833 = vmul.f32 %v577, 0.1
  %v834 = vmul.f32 %v578, 0.1
  %v835 = vmul.f32 %v579, 0.1
  %v836 = vmul.f32 %v580, 0.1
  %v837 = vmul.f32 %v581, 0.1
  %v838 = vmul.f32 %v582, 0.1
  %v839 = vmul.f32 %v583, 0.1
  %v840 = vmul.f32 %v584, 0.1
  %v841 = vmul.f32 %v585, 0.1
  %v842 = vmul.f32 %v586, 0.1
  %v843 = vmul.f32 %v587, 0.1
  %v844 = vmul.f32 %v588, 0.1
  %v845 = vmul.f32 %v589, 0.1
  %v846 = vmul.f32 %v590, 0.1
  %v847 = vmul.f32 %v591, 0.1
  %v848 = vmul.f32 %v592, 0.1
  %v849 = vmul.f32 %v593, 0.1
  %v850 = vmul.f32 %v594, 0.1
  %v851 = vmul.f32 %v595, 0.1
  %v852 = vmul.f32 %v596, 0.1
  %v853 = vmul.f32 %v597, 0.1
  %v854 = vmul.f32 %v598, 0.1
  %v855 = vmul.f32 %v599, 0.1
  %v856 = vmul.f32 %v600, 0.1
  %v857 = vmul.f32 %v601, 0.1
  %v858 = vmul.f32 %v602, 0.1
  %v859 = vmul.f32 %v603, 0.1
  %v860 = vmul.f32 %v604, 0.1
  %v861 = vmul.f32 %v605, 0.1
  %v862 = vmul.f32 %v606, 0.1
  %v863 = vmul.f32 %v607, 0.1
  %v864 = vmul.f32 %v608, 0.1
  %v865 = vmul.f32 %v609, 0.1
  %v866 = vmul.f32 %v610, 0.1
  %v867 = vmul.f32 %v611, 0.1
  %v868 = vmul.f32 %v612, 0.1
  %v869 = vmul.f32 %v613, 0.1
  %v870 = vmul.f32 %v614, 0.1
  %v871 = vmul.f32 %v615, 0.1
  %v872 = vmul.f32 %v616, 0.1
  %v873 = vmul.f32 %v617, 0.1
  %v874 = vmul.f32 %v618, 0.1
  %v875 = vmul.f32 %v619, 0.1
  %v876 = vmul.f32 %v620, 0.1
  %v877 = vmul.f32 %v621, 0.1
  %v878 = vmul.f32 %v622, 0.1
  %v879 = vmul.f32 %v623, 0.1
  %v880 = vmul.f32 %v624, 0.1
  %v881 = vmul.f32 %v625, 0.1
  %v882 = vmul.f32 %v626, 0.1
  %v883 = vmul.f32 %v627, 0.1
  %v884 = vmul.f32 %v628, 0.1
  %v885 = vmul.f32 %v629, 0.1
  %v886 = vmul.f32 %v630, 0.1
  %v887 = vmul.f32 %v631, 0.1
  %v888 = vmul.f32 %v632, 0.1
  %v889 = vmul.f32 %v633, 0.1
  %v890 = vmul.f32 %v634, 0.1
  %v891 = vmul.f32 %v635, 0.1
  %v892 = vmul.f32 %v636, 0.1
  %v893 = vmul.f32 %v637, 0.1
  %v894 = vmul.f32 %v638, 0.1
  %v895 = vmul.f32 %v639, 0.1
  %v896 = vmul.f32 %v640, 0.1
  %v897 = vmul.f32 %v641, 0.1
  %v898 = vmul.f32 %v642, 0.1
  %v899 = vmul.f32 %v643, 0.1
  %v900 = vmul.f32 %v644, 0.1
  %v901 = vmul.f32 %v645, 0.1
  %v902 = vmul.f32 %v646, 0.1
  %v903 = vmul.f32 %v647, 0.1
  %v904 = vmul.f32 %v648, 0.1
  %v905 = vmul.f32 %v649, 0.1
  %v906 = vmul.f32 %v650, 0.1
  %v907 = vmul.f32 %v651, 0.1
  %v908 = vmul.f32 %v652, 0.1
  %v909 = vmul.f32 %v653, 0.1
  %v910 = vmul.f32 %v654, 0.1
  %v911 = vmul.f32 %v655, 0.1
  %v912 = vmul.f32 %v656, 0.1
  %v913 = vmul.f32 %v657, 0.1
  %v914 = vmul.f32 %v658, 0.1
  %v915 = vmul.f32 %v659, 0.1
  %v916 = vmul.f32 %v660, 0.1
  %v917 = vmul.f32 %v661, 0.1
  %v918 = vmul.f32 %v662, 0.1
  %v919 = vmul.f32 %v663, 0.1
  %v920 = vmul.f32 %v664, 0.1
  %v921 = vmul.f32 %v665, 0.1
  %v922 = vmul.f32 %v666, 0.1
  %v923 = vmul.f32 %v667, 0.1
  %v924 = vmul.f32 %v668, 0.1
  %v925 = vmul.f32 %v669, 0.1
  %v926 = vmul.f32 %v670, 0.1
  %v927 = vmul.f32 %v671, 0.1
  %v928 = vmul.f32 %v672, 0.1
  %v929 = vmul.f32 %v673, 0.1
  %v930 = vmul.f32 %v674, 0.1
  %v931 = vmul.f32 %v675, 0.1
  %v932 = vmul.f32 %v676, 0.1
  %v933 = vmul.f32 %v677, 0.1
  %v934 = vmul.f32 %v678, 0.1
  %v935 = vmul.f32 %v679, 0.1
  %v936 = vmul.f32 %v680, 0.1
  %v937 = vmul.f32 %v681, 0.1
  %v938 = vmul.f32 %v682, 0.1
  %v939 = vmul.f32 %v683, 0.1
  %v940 = vmul.f32 %v684, 0.1
  %v941 = vmul.f32 %v685, 0.1
  %v942 = vmul.f32 %v686, 0.1
  %v943 = vmul.f32 %v687, 0.1
  %v944 = vmul.f32 %v688, 0.1
  %v945 = vmul.f32 %v689, 0.1
  %v946 = vmul.f32 %v690, 0.1
  %v947 = vmul.f32 %v691, 0.1
  %v948 = vmul.f32 %v692, 0.1
  %v949 = vmul.f32 %v693, 0.1
  %v950 = vmul.f32 %v694, 0.1
  %v951 = vmul.f32 %v695, 0.1
  %v952 = vmul.f32 %v696, 0.1
  %v953 = vmul.f32 %v697, 0.1
  %v954 = vmul.f32 %v698, 0.1
  %v955 = vmul.f32 %v699, 0.1
  %v956 = vmul.f32 %v700, 0.1
  %v957 = vmul.f32 %v701, 0.1
  %v958 = vmul.f32 %v702, 0.1
  %v959 = vmul.f32 %v703, 0.1
  %v960 = vmul.f32 %v704, 0.1
  %v961 = vmul.f32 %v705, 0.1
  %v962 = vmul.f32 %v706, 0.1
  %v963 = vmul.f32 %v707, 0.1
  %v964 = vmul.f32 %v708, 0.1
  %v965 = vmul.f32 %v709, 0.1
  %v966 = vmul.f32 %v710, 0.1
  %v967 = vmul.f32 %v711, 0.1
  %v968 = vmul.f32 %v712, 0.1
  %v969 = vmul.f32 %v713, 0.1
  %v970 = vmul.f32 %v714, 0.1
  %v971 = vmul.f32 %v715, 0.1
  %v972 = vmul.f32 %v716, 0.1
  %v973 = vmul.f32 %v717, 0.1
  %v974 = vmul.f32 %v718, 0.1
  %v975 = vmul.f32 %v719, 0.1
  %v976 = vmul.f32 %v720, 0.1
  %v977 = vmul.f32 %v721, 0.1
  %v978 = vmul.f32 %v722, 0.1
  %v979 = vmul.f32 %v723, 0.1
  %v980 = vmul.f32 %v724, 0.1
  %v981 = vmul.f32 %v725, 0.1
  %v982 = vmul.f32 %v726, 0.1
  %v983 = vmul.f32 %v727, 0.1
  %v984 = vmul.f32 %v728, 0.1
  %v985 = vmul.f32 %v729, 0.1
  %v986 = vmul.f32 %v730, 0.1
  %v987 = vmul.f32 %v731, 0.1
  %v988 = vmul.f32 %v732, 0.1
  %v989 = vmul.f32 %v733, 0.1
  %v990 = vmul.f32 %v734, 0.1
  %v991 = vmul.f32 %v735, 0.1
  %v992 = vmul.f32 %v736, 0.1
  %v993 = vmul.f32 %v737, 0.1
  %v994 = vmul.f32 %v738, 0.1
  %v995 = vmul.f32 %v739, 0.1
  %v996 = vmul.f32 %v740, 0.1
  %v997 = vmul.f32 %v741, 0.1
  %v998 = vmul.f32 %v742, 0.1
  %v999 = vmul.f32 %v743, 0.1
  %v1000 = vmul.f32 %v744, 0.1
  %v1001 = vmul.f32 %v745, 0.1
  %v1002 = vmul.f32 %v746, 0.1
  %v1003 = vmul.f32 %v747, 0.1
  %v1004 = vmul.f32 %v748, 0.1
  %v1005 = vmul.f32 %v749, 0.1
  %v1006 = vmul.f32 %v750, 0.1
  %v1007 = vmul.f32 %v751, 0.1
  %v1008 = vmul.f32 %v752, 0.1
  %v1009 = vmul.f32 %v753, 0.1
  %v1010 = vmul.f32 %v754, 0.1
  %v1011 = vmul.f32 %v755, 0.1
  %v1012 = vmul.f32 %v756, 0.1
  %v1013 = vmul.f32 %v757, 0.1
  %v1014 = vmul.f32 %v758, 0.1
  %v1015 = vmul.f32 %v759, 0.1
  %v1016 = vmul.f32 %v760, 0.1
  %v1017 = vmul.f32 %v761, 0.1
  %v1018 = vmul.f32 %v762, 0.1
  %v1019 = vmul.f32 %v763, 0.1
  %v1020 = vmul.f32 %v764, 0.1
  %v1021 = vmul.f32 %v765, 0.1
  %v1022 = vmul.f32 %v766, 0.1
  %v1023 = vmul.f32 %v767, 0.1
  %v1024 = vmul.f32 %v768, 0.1
  %v1025 = vmul.f32 %v769, 0.1
  %v1026 = vmul.f32 %v770, 0.1
  %v1027 = vmul.f32 %v771, 0.1
  %v1028 = vmul.f32 %v772, 0.1
  %v1029 = vmul.f32 %v773, 0.1
  %v1030 = vmul.f32 %v774, 0.1
  %v1031 = vmul.f32 %v775, 0.1
  %v1032 = vmul.f32 %v776, 0.1
  %v1033 = vmul.f32 %v777, 0.1
  %v1034 = vmul.f32 %v778, 0.1
  %v1035 = vadd.f32 %v267, %v779
  %v1036 = vadd.f32 %v268, %v780
  %v1037 = vadd.f32 %v269, %v781
  %v1038 = vadd.f32 %v270, %v782
  %v1039 = vadd.f32 %v271, %v783
  %v1040 = vadd.f32 %v272, %v784
  %v1041 = vadd.f32 %v273, %v785
  %v1042 = vadd.f32 %v274, %v786
  %v1043 = vadd.f32 %v275, %v787
  %v1044 = vadd.f32 %v276, %v788
  %v1045 = vadd.f32 %v277, %v789
  %v1046 = vadd.f32 %v278, %v790
  %v1047 = vadd.f32 %v279, %v791
  %v1048 = vadd.f32 %v280, %v792
  %v1049 = vadd.f32 %v281, %v793
  %v1050 = vadd.f32 %v282, %v794
  %v1051 = vadd.f32 %v283, %v795
  %v1052 = vadd.f32 %v284, %v796
  %v1053 = vadd.f32 %v285, %v797
  %v1054 = vadd.f32 %v286, %v798
  %v1055 = vadd.f32 %v287, %v799
  %v1056 = vadd.f32 %v288, %v800
  %v1057 = vadd.f32 %v289, %v801
  %v1058 = vadd.f32 %v290, %v802
  %v1059 = vadd.f32 %v291, %v803
  %v1060 = vadd.f32 %v292, %v804
  %v1061 = vadd.f32 %v293, %v805
  %v1062 = vadd.f32 %v294, %v806
  %v1063 = vadd.f32 %v295, %v807
  %v1064 = vadd.f32 %v296, %v808
  %v1065 = vadd.f32 %v297, %v809
  %v1066 = vadd.f32 %v298, %v810
  %v1067 = vadd.f32 %v299, %v811
  %v1068 = vadd.f32 %v300, %v812
  %v1069 = vadd.f32 %v301, %v813
  %v1070 = vadd.f32 %v302, %v814
  %v1071 = vadd.f32 %v303, %v815
  %v1072 = vadd.f32 %v304, %v816
  %v1073 = vadd.f32 %v305, %v817
  %v1074 = vadd.f32 %v306, %v818
  %v1075 = vadd.f32 %v307, %v819
  %v1076 = vadd.f32 %v308, %v820
  %v1077 = vadd.f32 %v309, %v821
  %v1078 = vadd.f32 %v310, %v822
  %v1079 = vadd.f32 %v311, %v823
  %v1080 = vadd.f32 %v312, %v824
  %v1081 = vadd.f32 %v313, %v825
  %v1082 = vadd.f32 %v314, %v826
  %v1083 = vadd.f32 %v315, %v827
  %v1084 = vadd.f32 %v316, %v828
  %v1085 = vadd.f32 %v317, %v829
  %v1086 = vadd.f32 %v318, %v830
  %v1087 = vadd.f32 %v319, %v831
  %v1088 = vadd.f32 %v320, %v832
  %v1089 = vadd.f32 %v321, %v833
  %v1090 = vadd.f32 %v322, %v834
  %v1091 = vadd.f32 %v323, %v835
  %v1092 = vadd.f32 %v324, %v836
  %v1093 = vadd.f32 %v325, %v837
  %v1094 = vadd.f32 %v326, %v838
  %v1095 = vadd.f32 %v327, %v839
  %v1096 = vadd.f32 %v328, %v840
  %v1097 = vadd.f32 %v329, %v841
  %v1098 = vadd.f32 %v330, %v842
  %v1099 = vadd.f32 %v331, %v843
  %v1100 = vadd.f32 %v332, %v844
  %v1101 = vadd.f32 %v333, %v845
  %v1102 = vadd.f32 %v334, %v846
  %v1103 = vadd.f32 %v335, %v847
  %v1104 = vadd.f32 %v336, %v848
  %v1105 = vadd.f32 %v337, %v849
  %v1106 = vadd.f32 %v338, %v850
  %v1107 = vadd.f32 %v339, %v851
  %v1108 = vadd.f32 %v340, %v852
  %v1109 = vadd.f32 %v341, %v853
  %v1110 = vadd.f32 %v342, %v854
  %v1111 = vadd.f32 %v343, %v855
  %v1112 = vadd.f32 %v344, %v856
  %v1113 = vadd.f32 %v345, %v857
  %v1114 = vadd.f32 %v346, %v858
  %v1115 = vadd.f32 %v347, %v859
  %v1116 = vadd.f32 %v348, %v860
  %v1117 = vadd.f32 %v349, %v861
  %v1118 = vadd.f32 %v350, %v862
  %v1119 = vadd.f32 %v351, %v863
  %v1120 = vadd.f32 %v352, %v864
  %v1121 = vadd.f32 %v353, %v865
  %v1122 = vadd.f32 %v354, %v866
  %v1123 = vadd.f32 %v355, %v867
  %v1124 = vadd.f32 %v356, %v868
  %v1125 = vadd.f32 %v357, %v869
  %v1126 = vadd.f32 %v358, %v870
  %v1127 = vadd.f32 %v359, %v871
  %v1128 = vadd.f32 %v360, %v872
  %v1129 = vadd.f32 %v361, %v873
  %v1130 = vadd.f32 %v362, %v874
  %v1131 = vadd.f32 %v363, %v875
  %v1132 = vadd.f32 %v364, %v876
  %v1133 = vadd.f32 %v365, %v877
  %v1134 = vadd.f32 %v366, %v878
  %v1135 = vadd.f32 %v367, %v879
  %v1136 = vadd.f32 %v368, %v880
  %v1137 = vadd.f32 %v369, %v881
  %v1138 = vadd.f32 %v370, %v882
  %v1139 = vadd.f32 %v371, %v883
  %v1140 = vadd.f32 %v372, %v884
  %v1141 = vadd.f32 %v373, %v885
  %v1142 = vadd.f32 %v374, %v886
  %v1143 = vadd.f32 %v375, %v887
  %v1144 = vadd.f32 %v376, %v888
  %v1145 = vadd.f32 %v377, %v889
  %v1146 = vadd.f32 %v378, %v890
  %v1147 = vadd.f32 %v379, %v891
  %v1148 = vadd.f32 %v380, %v892
  %v1149 = vadd.f32 %v381, %v893
  %v1150 = vadd.f32 %v382, %v894
  %v1151 = vadd.f32 %v383, %v895
  %v1152 = vadd.f32 %v384, %v896
  %v1153 = vadd.f32 %v385, %v897
  %v1154 = vadd.f32 %v386, %v898
  %v1155 = vadd.f32 %v387, %v899
  %v1156 = vadd.f32 %v388, %v900
  %v1157 = vadd.f32 %v389, %v901
  %v1158 = vadd.f32 %v390, %v902
  %v1159 = vadd.f32 %v391, %v903
  %v1160 = vadd.f32 %v392, %v904
  %v1161 = vadd.f32 %v393, %v905
  %v1162 = vadd.f32 %v394, %v906
  %v1163 = vadd.f32 %v395, %v907
  %v1164 = vadd.f32 %v396, %v908
  %v1165 = vadd.f32 %v397, %v909
  %v1166 = vadd.f32 %v398, %v910
  %v1167 = vadd.f32 %v399, %v911
  %v1168 = vadd.f32 %v400, %v912
  %v1169 = vadd.f32 %v401, %v913
  %v1170 = vadd.f32 %v402, %v914
  %v1171 = vadd.f32 %v403, %v915
  %v1172 = vadd.f32 %v404, %v916
  %v1173 = vadd.f32 %v405, %v917
  %v1174 = vadd.f32 %v406, %v918
  %v1175 = vadd.f32 %v407, %v919
  %v1176 = vadd.f32 %v408, %v920
  %v1177 = vadd.f32 %v409, %v921
  %v1178 = vadd.f32 %v410, %v922
  %v1179 = vadd.f32 %v411, %v923
  %v1180 = vadd.f32 %v412, %v924
  %v1181 = vadd.f32 %v413, %v925
  %v1182 = vadd.f32 %v414, %v926
  %v1183 = vadd.f32 %v415, %v927
  %v1184 = vadd.f32 %v416, %v928
  %v1185 = vadd.f32 %v417, %v929
  %v1186 = vadd.f32 %v418, %v930
  %v1187 = vadd.f32 %v419, %v931
  %v1188 = vadd.f32 %v420, %v932
  %v1189 = vadd.f32 %v421, %v933
  %v1190 = vadd.f32 %v422, %v934
  %v1191 = vadd.f32 %v423, %v935
  %v1192 = vadd.f32 %v424, %v936
  %v1193 = vadd.f32 %v425, %v937
  %v1194 = vadd.f32 %v426, %v938
  %v1195 = vadd.f32 %v427, %v939
  %v1196 = vadd.f32 %v428, %v940
  %v1197 = vadd.f32 %v429, %v941
  %v1198 = vadd.f32 %v430, %v942
  %v1199 = vadd.f32 %v431, %v943
  %v1200 = vadd.f32 %v432, %v944
  %v1201 = vadd.f32 %v433, %v945
  %v1202 = vadd.f32 %v434, %v946
  %v1203 = vadd.f32 %v435, %v947
  %v1204 = vadd.f32 %v436, %v948
  %v1205 = vadd.f32 %v437, %v949
  %v1206 = vadd.f32 %v438, %v950
  %v1207 = vadd.f32 %v439, %v951
  %v1208 = vadd.f32 %v440, %v952
  %v1209 = vadd.f32 %v441, %v953
  %v1210 = vadd.f32 %v442, %v954
  %v1211 = vadd.f32 %v443, %v955
  %v1212 = vadd.f32 %v444, %v956
  %v1213 = vadd.f32 %v445, %v957
  %v1214 = vadd.f32 %v446, %v958
  %v1215 = vadd.f32 %v447, %v959
  %v1216 = vadd.f32 %v448, %v960
  %v1217 = vadd.f32 %v449, %v961
  %v1218 = vadd.f32 %v450, %v962
  %v1219 = vadd.f32 %v451, %v963
  %v1220 = vadd.f32 %v452, %v964
  %v1221 = vadd.f32 %v453, %v965
  %v1222 = vadd.f32 %v454, %v966
  %v1223 = vadd.f32 %v455, %v967
  %v1224 = vadd.f32 %v456, %v968
  %v1225 = vadd.f32 %v457, %v969
  %v1226 = vadd.f32 %v458, %v970
  %v1227 = vadd.f32 %v459, %v971
  %v1228 = vadd.f32 %v460, %v972
  %v1229 = vadd.f32 %v461, %v973
  %v1230 = vadd.f32 %v462, %v974
  %v1231 = vadd.f32 %v463, %v975
  %v1232 = vadd.f32 %v464, %v976
  %v1233 = vadd.f32 %v465, %v977
  %v1234 = vadd.f32 %v466, %v978
  %v1235 = vadd.f32 %v467, %v979
  %v1236 = vadd.f32 %v468, %v980
  %v1237 = vadd.f32 %v469, %v981
  %v1238 = vadd.f32 %v470, %v982
  %v1239 = vadd.f32 %v471, %v983
  %v1240 = vadd.f32 %v472, %v984
  %v1241 = vadd.f32 %v473, %v985
  %v1242 = vadd.f32 %v474, %v986
  %v1243 = vadd.f32 %v475, %v987
  %v1244 = vadd.f32 %v476, %v988
  %v1245 = vadd.f32 %v477, %v989
  %v1246 = vadd.f32 %v478, %v990
  %v1247 = vadd.f32 %v479, %v991
  %v1248 = vadd.f32 %v480, %v992
  %v1249 = vadd.f32 %v481, %v993
  %v1250 = vadd.f32 %v482, %v994
  %v1251 = vadd.f32 %v483, %v995
  %v1252 = vadd.f32 %v484, %v996
  %v1253 = vadd.f32 %v485, %v997
  %v1254 = vadd.f32 %v486, %v998
  %v1255 = vadd.f32 %v487, %v999
  %v1256 = vadd.f32 %v488, %v1000
  %v1257 = vadd.f32 %v489, %v1001
  %v1258 = vadd.f32 %v490, %v1002
  %v1259 = vadd.f32 %v491, %v1003
  %v1260 = vadd.f32 %v492, %v1004
  %v1261 = vadd.f32 %v493, %v1005
  %v1262 = vadd.f32 %v494, %v1006
  %v1263 = vadd.f32 %v495, %v1007
  %v1264 = vadd.f32 %v496, %v1008
  %v1265 = vadd.f32 %v497, %v1009
  %v1266 = vadd.f32 %v498, %v1010
  %v1267 = vadd.f32 %v499, %v1011
  %v1268 = vadd.f32 %v500, %v1012
  %v1269 = vadd.f32 %v501, %v1013
  %v1270 = vadd.f32 %v502, %v1014
  %v1271 = vadd.f32 %v503, %v1015
  %v1272 = vadd.f32 %v504, %v1016
  %v1273 = vadd.f32 %v505, %v1017
  %v1274 = vadd.f32 %v506, %v1018
  %v1275 = vadd.f32 %v507, %v1019
  %v1276 = vadd.f32 %v508, %v1020
  %v1277 = vadd.f32 %v509, %v1021
  %v1278 = vadd.f32 %v510, %v1022
  %v1279 = vadd.f32 %v511, %v1023
  %v1280 = vadd.f32 %v512, %v1024
  %v1281 = vadd.f32 %v513, %v1025
  %v1282 = vadd.f32 %v514, %v1026
  %v1283 = vadd.f32 %v515, %v1027
  %v1284 = vadd.f32 %v516, %v1028
  %v1285 = vadd.f32 %v517, %v1029
  %v1286 = vadd.f32 %v518, %v1030
  %v1287 = vadd.f32 %v519, %v1031
  %v1288 = vadd.f32 %v520, %v1032
  %v1289 = vadd.f32 %v521, %v1033
  %v1290 = vadd.f32 %v522, %v1034
  %1291 = vst [vmem:[%s2] sm:$0xff] %v1035
  %1292 = vst [vmem:[%s2 + $0x8] sm:$0xff] %v1036
  %1293 = vst [vmem:[%s2 + $0x10] sm:$0xff] %v1037
  %1294 = vst [vmem:[%s2 + $0x18] sm:$0xff] %v1038
  %1295 = vst [vmem:[%s2 + $0x20] sm:$0xff] %v1039
  %1296 = vst [vmem:[%s2 + $0x28] sm:$0xff] %v1040
  %1297 = vst [vmem:[%s2 + $0x30] sm:$0xff] %v1041
  %1298 = vst [vmem:[%s2 + $0x38] sm:$0xff] %v1042
  %1299 = vst [vmem:[%s2 + $0x40] sm:$0xff] %v1043
  %1300 = vst [vmem:[%s2 + $0x48] sm:$0xff] %v1044
  %1301 = vst [vmem:[%s2 + $0x50] sm:$0xff] %v1045
  %1302 = vst [vmem:[%s2 + $0x58] sm:$0xff] %v1046
  %1303 = vst [vmem:[%s2 + $0x60] sm:$0xff] %v1047
  %1304 = vst [vmem:[%s2 + $0x68] sm:$0xff] %v1048
  %1305 = vst [vmem:[%s2 + $0x70] sm:$0xff] %v1049
  %1306 = vst [vmem:[%s2 + $0x78] sm:$0xff] %v1050
  %1307 = vst [vmem:[%s2 + $0x80] sm:$0xff] %v1051
  %1308 = vst [vmem:[%s2 + $0x88] sm:$0xff] %v1052
  %1309 = vst [vmem:[%s2 + $0x90] sm:$0xff] %v1053
  %1310 = vst [vmem:[%s2 + $0x98] sm:$0xff] %v1054
  %1311 = vst [vmem:[%s2 + $0xa0] sm:$0xff] %v1055
  %1312 = vst [vmem:[%s2 + $0xa8] sm:$0xff] %v1056
  %1313 = vst [vmem:[%s2 + $0xb0] sm:$0xff] %v1057
  %1314 = vst [vmem:[%s2 + $0xb8] sm:$0xff] %v1058
  %1315 = vst [vmem:[%s2 + $0xc0] sm:$0xff] %v1059
  %1316 = vst [vmem:[%s2 + $0xc8] sm:$0xff] %v1060
  %1317 = vst [vmem:[%s2 + $0xd0] sm:$0xff] %v1061
  %1318 = vst [vmem:[%s2 + $0xd8] sm:$0xff] %v1062
  %1319 = vst [vmem:[%s2 + $0xe0] sm:$0xff] %v1063
  %1320 = vst [vmem:[%s2 + $0xe8] sm:$0xff] %v1064
  %1321 = vst [vmem:[%s2 + $0xf0] sm:$0xff] %v1065
  %1322 = vst [vmem:[%s2 + $0xf8] sm:$0xff] %v1066
  %1323 = vst [vmem:[%s2 + $0x100] sm:$0xff] %v1067
  %1324 = vst [vmem:[%s2 + $0x108] sm:$0xff] %v1068
  %1325 = vst [vmem:[%s2 + $0x110] sm:$0xff] %v1069
  %1326 = vst [vmem:[%s2 + $0x118] sm:$0xff] %v1070
  %1327 = vst [vmem:[%s2 + $0x120] sm:$0xff] %v1071
  %1328 = vst [vmem:[%s2 + $0x128] sm:$0xff] %v1072
  %1329 = vst [vmem:[%s2 + $0x130] sm:$0xff] %v1073
  %1330 = vst [vmem:[%s2 + $0x138] sm:$0xff] %v1074
  %1331 = vst [vmem:[%s2 + $0x140] sm:$0xff] %v1075
  %1332 = vst [vmem:[%s2 + $0x148] sm:$0xff] %v1076
  %1333 = vst [vmem:[%s2 + $0x150] sm:$0xff] %v1077
  %1334 = vst [vmem:[%s2 + $0x158] sm:$0xff] %v1078
  %1335 = vst [vmem:[%s2 + $0x160] sm:$0xff] %v1079
  %1336 = vst [vmem:[%s2 + $0x168] sm:$0xff] %v1080
  %1337 = vst [vmem:[%s2 + $0x170] sm:$0xff] %v1081
  %1338 = vst [vmem:[%s2 + $0x178] sm:$0xff] %v1082
  %1339 = vst [vmem:[%s2 + $0x180] sm:$0xff] %v1083
  %1340 = vst [vmem:[%s2 + $0x188] sm:$0xff] %v1084
  %1341 = vst [vmem:[%s2 + $0x190] sm:$0xff] %v1085
  %1342 = vst [vmem:[%s2 + $0x198] sm:$0xff] %v1086
  %1343 = vst [vmem:[%s2 + $0x1a0] sm:$0xff] %v1087
  %1344 = vst [vmem:[%s2 + $0x1a8] sm:$0xff] %v1088
  %1345 = vst [vmem:[%s2 + $0x1b0] sm:$0xff] %v1089
  %1346 = vst [vmem:[%s2 + $0x1b8] sm:$0xff] %v1090
  %1347 = vst [vmem:[%s2 + $0x1c0] sm:$0xff] %v1091
  %1348 = vst [vmem:[%s2 + $0x1c8] sm:$0xff] %v1092
  %1349 = vst [vmem:[%s2 + $0x1d0] sm:$0xff] %v1093
  %1350 = vst [vmem:[%s2 + $0x1d8] sm:$0xff] %v1094
  %1351 = vst [vmem:[%s2 + $0x1e0] sm:$0xff] %v1095
  %1352 = vst [vmem:[%s2 + $0x1e8] sm:$0xff] %v1096
  %1353 = vst [vmem:[%s2 + $0x1f0] sm:$0xff] %v1097
  %1354 = vst [vmem:[%s2 + $0x1f8] sm:$0xff] %v1098
  %1355 = vst [vmem:[%s2 + $0x200] sm:$0xff] %v1099
  %1356 = vst [vmem:[%s2 + $0x208] sm:$0xff] %v1100
  %1357 = vst [vmem:[%s2 + $0x210] sm:$0xff] %v1101
  %1358 = vst [vmem:[%s2 + $0x218] sm:$0xff] %v1102
  %1359 = vst [vmem:[%s2 + $0x220] sm:$0xff] %v1103
  %1360 = vst [vmem:[%s2 + $0x228] sm:$0xff] %v1104
  %1361 = vst [vmem:[%s2 + $0x230] sm:$0xff] %v1105
  %1362 = vst [vmem:[%s2 + $0x238] sm:$0xff] %v1106
  %1363 = vst [vmem:[%s2 + $0x240] sm:$0xff] %v1107
  %1364 = vst [vmem:[%s2 + $0x248] sm:$0xff] %v1108
  %1365 = vst [vmem:[%s2 + $0x250] sm:$0xff] %v1109
  %1366 = vst [vmem:[%s2 + $0x258] sm:$0xff] %v1110
  %1367 = vst [vmem:[%s2 + $0x260] sm:$0xff] %v1111
  %1368 = vst [vmem:[%s2 + $0x268] sm:$0xff] %v1112
  %1369 = vst [vmem:[%s2 + $0x270] sm:$0xff] %v1113
  %1370 = vst [vmem:[%s2 + $0x278] sm:$0xff] %v1114
  %1371 = vst [vmem:[%s2 + $0x280] sm:$0xff] %v1115
  %1372 = vst [vmem:[%s2 + $0x288] sm:$0xff] %v1116
  %1373 = vst [vmem:[%s2 + $0x290] sm:$0xff] %v1117
  %1374 = vst [vmem:[%s2 + $0x298] sm:$0xff] %v1118
  %1375 = vst [vmem:[%s2 + $0x2a0] sm:$0xff] %v1119
  %1376 = vst [vmem:[%s2 + $0x2a8] sm:$0xff] %v1120
  %1377 = vst [vmem:[%s2 + $0x2b0] sm:$0xff] %v1121
  %1378 = vst [vmem:[%s2 + $0x2b8] sm:$0xff] %v1122
  %1379 = vst [vmem:[%s2 + $0x2c0] sm:$0xff] %v1123
  %1380 = vst [vmem:[%s2 + $0x2c8] sm:$0xff] %v1124
  %1381 = vst [vmem:[%s2 + $0x2d0] sm:$0xff] %v1125
  %1382 = vst [vmem:[%s2 + $0x2d8] sm:$0xff] %v1126
  %1383 = vst [vmem:[%s2 + $0x2e0] sm:$0xff] %v1127
  %1384 = vst [vmem:[%s2 + $0x2e8] sm:$0xff] %v1128
  %1385 = vst [vmem:[%s2 + $0x2f0] sm:$0xff] %v1129
  %1386 = vst [vmem:[%s2 + $0x2f8] sm:$0xff] %v1130
  %1387 = vst [vmem:[%s2 + $0x300] sm:$0xff] %v1131
  %1388 = vst [vmem:[%s2 + $0x308] sm:$0xff] %v1132
  %1389 = vst [vmem:[%s2 + $0x310] sm:$0xff] %v1133
  %1390 = vst [vmem:[%s2 + $0x318] sm:$0xff] %v1134
  %1391 = vst [vmem:[%s2 + $0x320] sm:$0xff] %v1135
  %1392 = vst [vmem:[%s2 + $0x328] sm:$0xff] %v1136
  %1393 = vst [vmem:[%s2 + $0x330] sm:$0xff] %v1137
  %1394 = vst [vmem:[%s2 + $0x338] sm:$0xff] %v1138
  %1395 = vst [vmem:[%s2 + $0x340] sm:$0xff] %v1139
  %1396 = vst [vmem:[%s2 + $0x348] sm:$0xff] %v1140
  %1397 = vst [vmem:[%s2 + $0x350] sm:$0xff] %v1141
  %1398 = vst [vmem:[%s2 + $0x358] sm:$0xff] %v1142
  %1399 = vst [vmem:[%s2 + $0x360] sm:$0xff] %v1143
  %1400 = vst [vmem:[%s2 + $0x368] sm:$0xff] %v1144
  %1401 = vst [vmem:[%s2 + $0x370] sm:$0xff] %v1145
  %1402 = vst [vmem:[%s2 + $0x378] sm:$0xff] %v1146
  %1403 = vst [vmem:[%s2 + $0x380] sm:$0xff] %v1147
  %1404 = vst [vmem:[%s2 + $0x388] sm:$0xff] %v1148
  %1405 = vst [vmem:[%s2 + $0x390] sm:$0xff] %v1149
  %1406 = vst [vmem:[%s2 + $0x398] sm:$0xff] %v1150
  %1407 = vst [vmem:[%s2 + $0x3a0] sm:$0xff] %v1151
  %1408 = vst [vmem:[%s2 + $0x3a8] sm:$0xff] %v1152
  %1409 = vst [vmem:[%s2 + $0x3b0] sm:$0xff] %v1153
  %1410 = vst [vmem:[%s2 + $0x3b8] sm:$0xff] %v1154
  %1411 = vst [vmem:[%s2 + $0x3c0] sm:$0xff] %v1155
  %1412 = vst [vmem:[%s2 + $0x3c8] sm:$0xff] %v1156
  %1413 = vst [vmem:[%s2 + $0x3d0] sm:$0xff] %v1157
  %1414 = vst [vmem:[%s2 + $0x3d8] sm:$0xff] %v1158
  %1415 = vst [vmem:[%s2 + $0x3e0] sm:$0xff] %v1159
  %1416 = vst [vmem:[%s2 + $0x3e8] sm:$0xff] %v1160
  %1417 = vst [vmem:[%s2 + $0x3f0] sm:$0xff] %v1161
  %1418 = vst [vmem:[%s2 + $0x3f8] sm:$0xff] %v1162
  %1419 = vst [vmem:[%s2 + $0x400] sm:$0xff] %v1163
  %1420 = vst [vmem:[%s2 + $0x408] sm:$0xff] %v1164
  %1421 = vst [vmem:[%s2 + $0x410] sm:$0xff] %v1165
  %1422 = vst [vmem:[%s2 + $0x418] sm:$0xff] %v1166
  %1423 = vst [vmem:[%s2 + $0x420] sm:$0xff] %v1167
  %1424 = vst [vmem:[%s2 + $0x428] sm:$0xff] %v1168
  %1425 = vst [vmem:[%s2 + $0x430] sm:$0xff] %v1169
  %1426 = vst [vmem:[%s2 + $0x438] sm:$0xff] %v1170
  %1427 = vst [vmem:[%s2 + $0x440] sm:$0xff] %v1171
  %1428 = vst [vmem:[%s2 + $0x448] sm:$0xff] %v1172
  %1429 = vst [vmem:[%s2 + $0x450] sm:$0xff] %v1173
  %1430 = vst [vmem:[%s2 + $0x458] sm:$0xff] %v1174
  %1431 = vst [vmem:[%s2 + $0x460] sm:$0xff] %v1175
  %1432 = vst [vmem:[%s2 + $0x468] sm:$0xff] %v1176
  %1433 = vst [vmem:[%s2 + $0x470] sm:$0xff] %v1177
  %1434 = vst [vmem:[%s2 + $0x478] sm:$0xff] %v1178
  %1435 = vst [vmem:[%s2 + $0x480] sm:$0xff] %v1179
  %1436 = vst [vmem:[%s2 + $0x488] sm:$0xff] %v1180
  %1437 = vst [vmem:[%s2 + $0x490] sm:$0xff] %v1181
  %1438 = vst [vmem:[%s2 + $0x498] sm:$0xff] %v1182
  %1439 = vst [vmem:[%s2 + $0x4a0] sm:$0xff] %v1183
  %1440 = vst [vmem:[%s2 + $0x4a8] sm:$0xff] %v1184
  %1441 = vst [vmem:[%s2 + $0x4b0] sm:$0xff] %v1185
  %1442 = vst [vmem:[%s2 + $0x4b8] sm:$0xff] %v1186
  %1443 = vst [vmem:[%s2 + $0x4c0] sm:$0xff] %v1187
  %1444 = vst [vmem:[%s2 + $0x4c8] sm:$0xff] %v1188
  %1445 = vst [vmem:[%s2 + $0x4d0] sm:$0xff] %v1189
  %1446 = vst [vmem:[%s2 + $0x4d8] sm:$0xff] %v1190
  %1447 = vst [vmem:[%s2 + $0x4e0] sm:$0xff] %v1191
  %1448 = vst [vmem:[%s2 + $0x4e8] sm:$0xff] %v1192
  %1449 = vst [vmem:[%s2 + $0x4f0] sm:$0xff] %v1193
  %1450 = vst [vmem:[%s2 + $0x4f8] sm:$0xff] %v1194
  %1451 = vst [vmem:[%s2 + $0x500] sm:$0xff] %v1195
  %1452 = vst [vmem:[%s2 + $0x508] sm:$0xff] %v1196
  %1453 = vst [vmem:[%s2 + $0x510] sm:$0xff] %v1197
  %1454 = vst [vmem:[%s2 + $0x518] sm:$0xff] %v1198
  %1455 = vst [vmem:[%s2 + $0x520] sm:$0xff] %v1199
  %1456 = vst [vmem:[%s2 + $0x528] sm:$0xff] %v1200
  %1457 = vst [vmem:[%s2 + $0x530] sm:$0xff] %v1201
  %1458 = vst [vmem:[%s2 + $0x538] sm:$0xff] %v1202
  %1459 = vst [vmem:[%s2 + $0x540] sm:$0xff] %v1203
  %1460 = vst [vmem:[%s2 + $0x548] sm:$0xff] %v1204
  %1461 = vst [vmem:[%s2 + $0x550] sm:$0xff] %v1205
  %1462 = vst [vmem:[%s2 + $0x558] sm:$0xff] %v1206
  %1463 = vst [vmem:[%s2 + $0x560] sm:$0xff] %v1207
  %1464 = vst [vmem:[%s2 + $0x568] sm:$0xff] %v1208
  %1465 = vst [vmem:[%s2 + $0x570] sm:$0xff] %v1209
  %1466 = vst [vmem:[%s2 + $0x578] sm:$0xff] %v1210
  %1467 = vst [vmem:[%s2 + $0x580] sm:$0xff] %v1211
  %1468 = vst [vmem:[%s2 + $0x588] sm:$0xff] %v1212
  %1469 = vst [vmem:[%s2 + $0x590] sm:$0xff] %v1213
  %1470 = vst [vmem:[%s2 + $0x598] sm:$0xff] %v1214
  %1471 = vst [vmem:[%s2 + $0x5a0] sm:$0xff] %v1215
  %1472 = vst [vmem:[%s2 + $0x5a8] sm:$0xff] %v1216
  %1473 = vst [vmem:[%s2 + $0x5b0] sm:$0xff] %v1217
  %1474 = vst [vmem:[%s2 + $0x5b8] sm:$0xff] %v1218
  %1475 = vst [vmem:[%s2 + $0x5c0] sm:$0xff] %v1219
  %1476 = vst [vmem:[%s2 + $0x5c8] sm:$0xff] %v1220
  %1477 = vst [vmem:[%s2 + $0x5d0] sm:$0xff] %v1221
  %1478 = vst [vmem:[%s2 + $0x5d8] sm:$0xff] %v1222
  %1479 = vst [vmem:[%s2 + $0x5e0] sm:$0xff] %v1223
  %1480 = vst [vmem:[%s2 + $0x5e8] sm:$0xff] %v1224
  %1481 = vst [vmem:[%s2 + $0x5f0] sm:$0xff] %v1225
  %1482 = vst [vmem:[%s2 + $0x5f8] sm:$0xff] %v1226
  %1483 = vst [vmem:[%s2 + $0x600] sm:$0xff] %v1227
  %1484 = vst [vmem:[%s2 + $0x608] sm:$0xff] %v1228
  %1485 = vst [vmem:[%s2 + $0x610] sm:$0xff] %v1229
  %1486 = vst [vmem:[%s2 + $0x618] sm:$0xff] %v1230
  %1487 = vst [vmem:[%s2 + $0x620] sm:$0xff] %v1231
  %1488 = vst [vmem:[%s2 + $0x628] sm:$0xff] %v1232
  %1489 = vst [vmem:[%s2 + $0x630] sm:$0xff] %v1233
  %1490 = vst [vmem:[%s2 + $0x638] sm:$0xff] %v1234
  %1491 = vst [vmem:[%s2 + $0x640] sm:$0xff] %v1235
  %1492 = vst [vmem:[%s2 + $0x648] sm:$0xff] %v1236
  %1493 = vst [vmem:[%s2 + $0x650] sm:$0xff] %v1237
  %1494 = vst [vmem:[%s2 + $0x658] sm:$0xff] %v1238
  %1495 = vst [vmem:[%s2 + $0x660] sm:$0xff] %v1239
  %1496 = vst [vmem:[%s2 + $0x668] sm:$0xff] %v1240
  %1497 = vst [vmem:[%s2 + $0x670] sm:$0xff] %v1241
  %1498 = vst [vmem:[%s2 + $0x678] sm:$0xff] %v1242
  %1499 = vst [vmem:[%s2 + $0x680] sm:$0xff] %v1243
  %1500 = vst [vmem:[%s2 + $0x688] sm:$0xff] %v1244
  %1501 = vst [vmem:[%s2 + $0x690] sm:$0xff] %v1245
  %1502 = vst [vmem:[%s2 + $0x698] sm:$0xff] %v1246
  %1503 = vst [vmem:[%s2 + $0x6a0] sm:$0xff] %v1247
  %1504 = vst [vmem:[%s2 + $0x6a8] sm:$0xff] %v1248
  %1505 = vst [vmem:[%s2 + $0x6b0] sm:$0xff] %v1249
  %1506 = vst [vmem:[%s2 + $0x6b8] sm:$0xff] %v1250
  %1507 = vst [vmem:[%s2 + $0x6c0] sm:$0xff] %v1251
  %1508 = vst [vmem:[%s2 + $0x6c8] sm:$0xff] %v1252
  %1509 = vst [vmem:[%s2 + $0x6d0] sm:$0xff] %v1253
  %1510 = vst [vmem:[%s2 + $0x6d8] sm:$0xff] %v1254
  %1511 = vst [vmem:[%s2 + $0x6e0] sm:$0xff] %v1255
  %1512 = vst [vmem:[%s2 + $0x6e8] sm:$0xff] %v1256
  %1513 = vst [vmem:[%s2 + $0x6f0] sm:$0xff] %v1257
  %1514 = vst [vmem:[%s2 + $0x6f8] sm:$0xff] %v1258
  %1515 = vst [vmem:[%s2 + $0x700] sm:$0xff] %v1259
  %1516 = vst [vmem:[%s2 + $0x708] sm:$0xff] %v1260
  %1517 = vst [vmem:[%s2 + $0x710] sm:$0xff] %v1261
  %1518 = vst [vmem:[%s2 + $0x718] sm:$0xff] %v1262
  %1519 = vst [vmem:[%s2 + $0x720] sm:$0xff] %v1263
  %1520 = vst [vmem:[%s2 + $0x728] sm:$0xff] %v1264
  %1521 = vst [vmem:[%s2 + $0x730] sm:$0xff] %v1265
  %1522 = vst [vmem:[%s2 + $0x738] sm:$0xff] %v1266
  %1523 = vst [vmem:[%s2 + $0x740] sm:$0xff] %v1267
  %1524 = vst [vmem:[%s2 + $0x748] sm:$0xff] %v1268
  %1525 = vst [vmem:[%s2 + $0x750] sm:$0xff] %v1269
  %1526 = vst [vmem:[%s2 + $0x758] sm:$0xff] %v1270
  %1527 = vst [vmem:[%s2 + $0x760] sm:$0xff] %v1271
  %1528 = vst [vmem:[%s2 + $0x768] sm:$0xff] %v1272
  %1529 = vst [vmem:[%s2 + $0x770] sm:$0xff] %v1273
  %1530 = vst [vmem:[%s2 + $0x778] sm:$0xff] %v1274
  %1531 = vst [vmem:[%s2 + $0x780] sm:$0xff] %v1275
  %1532 = vst [vmem:[%s2 + $0x788] sm:$0xff] %v1276
  %1533 = vst [vmem:[%s2 + $0x790] sm:$0xff] %v1277
  %1534 = vst [vmem:[%s2 + $0x798] sm:$0xff] %v1278
  %1535 = vst [vmem:[%s2 + $0x7a0] sm:$0xff] %v1279
  %1536 = vst [vmem:[%s2 + $0x7a8] sm:$0xff] %v1280
  %1537 = vst [vmem:[%s2 + $0x7b0] sm:$0xff] %v1281
  %1538 = vst [vmem:[%s2 + $0x7b8] sm:$0xff] %v1282
  %1539 = vst [vmem:[%s2 + $0x7c0] sm:$0xff] %v1283
  %1540 = vst [vmem:[%s2 + $0x7c8] sm:$0xff] %v1284
  %1541 = vst [vmem:[%s2 + $0x7d0] sm:$0xff] %v1285
  %1542 = vst [vmem:[%s2 + $0x7d8] sm:$0xff] %v1286
  %1543 = vst [vmem:[%s2 + $0x7e0] sm:$0xff] %v1287
  %1544 = vst [vmem:[%s2 + $0x7e8] sm:$0xff] %v1288
  %1545 = vst [vmem:[%s2 + $0x7f0] sm:$0xff] %v1289
  %1546 = vst [vmem:[%s2 + $0x7f8] sm:$0xff] %v1290
  // Predicated region
  $region10: #{byol_forward.19} parent=0 // pred_check
    _
  $region11: #{byol_forward.19} parent=0 // pred_check_branch
    %1548 = sbr.rel (0) target = $region13
  $region12: #{byol_forward.19} parent=0 // pred_region
    _
  $region13: #{byol_forward.19} parent=0 // pred_fallthru
    _
  // Predicated region
  $region14: #{byol_forward.19} parent=0 // pred_check
    _
  $region15: #{byol_forward.19} parent=0 // pred_check_branch
    %1550 = sbr.rel (0) target = $region17
  $region16: #{byol_forward.19} parent=0 // pred_region
    _
  $region17: #{byol_forward.19} parent=0 // pred_fallthru
    _

</llo_original>
